<compile_context>
chip_gen: v5e
topology: v5e:2x2
jax: 0.10.0
libtpu: 0.0.40
codegen_flags: <defaults>
</compile_context>

<pallas_src>
import functools

import jax
import jax.numpy as jnp
from jax.experimental import pallas as pl
from jax.experimental.pallas import tpu as pltpu

# ----------------------------- model constants -----------------------------
INPUT_SIZE = 13                     # 5 global + 2 local + 6 graph features
STATE_SIZE = 32                     # hidden node-state size
MSG_SIZE = 32                       # message size
HIDDEN = 64                         # hidden width of each 2-layer MLP
OUT_SIZE = 2                        # latent / output size per node
OUT_PAD = 128                       # lane-padded output width (unmasked stores)
NUM_MP_ITERS = 4                    # numMessagePassingIterations
MSG_IN = STATE_SIZE + 1 + INPUT_SIZE   # 46 = [state | edge_feat | src_input]
UPD_IN = MSG_SIZE + STATE_SIZE         # 64 = [m_hat | state]
NEG_FILL = -1e30                    # finite masked-max fill (f32-safe)
NEG_THRESH = -1e29                  # zero-in-degree detection threshold


# ------------------------------ fused Pallas kernel ------------------------------
def _gnn_fused_kernel(n_nodes, n_edges, batch,
                      # VMEM graph structure / activations
                      g_src_ref, dst_ref, node_inp_ref, edge_aux_ref,
                      # input MLP
                      w1i_ref, b1i_ref, w2i_ref, b2i_ref,
                      # message MLP (full w1, K = 46)
                      w1m_ref, b1m_ref, w2m_ref, b2m_ref,
                      # update MLP (full w1, K = 64)
                      w1u_ref, b1u_ref, w2u_ref, b2u_ref,
                      # output MLP (w2/b2 lane-padded to OUT_PAD)
                      w1o_ref, b1o_ref, w2o_ref, b2o_ref,
                      # output
                      out_ref,
                      # VMEM scratch
                      state_ref, msg_in_ref, upd_in_ref):
    f32 = jnp.float32

    # ---------------- input MLP: state = relu(x @ w1 + b1) @ w2 + b2 ----------------
    h0 = jnp.maximum(
        jnp.dot(node_inp_ref[...], w1i_ref[...], preferred_element_type=f32)
        + b1i_ref[...], 0.0)
    state_ref[...] = jnp.dot(h0, w2i_ref[...], preferred_element_type=f32) + b2i_ref[...]

    # ---- pack loop-invariant [edge_feat | src_input] into lanes [32:46) once ----
    msg_in_ref[:, STATE_SIZE:MSG_IN] = edge_aux_ref[...]

    g_src = g_src_ref[...]        # [E*B, N*B] one-hot gather matrix (loop-invariant)
    dst = dst_ref[...]            # [E, 1] int32 destination node per edge

    # ----------------------- message-passing loop (unrolled x4) -----------------------
    for _ in range(NUM_MP_ITERS):
        # --- gather source node states: single one-hot MXU matmul ---
        srcst = jnp.dot(g_src, state_ref[...], preferred_element_type=f32)  # [E*B, 32]
        msg_in_ref[:, 0:STATE_SIZE] = srcst

        # --- message MLP: one K=46 dot on the lane-packed input ---
        hm = jnp.maximum(
            jnp.dot(msg_in_ref[...], w1m_ref[...], preferred_element_type=f32)
            + b1m_ref[...], 0.0)
        m = jnp.dot(hm, w2m_ref[...], preferred_element_type=f32) + b2m_ref[...]
        m3 = m.reshape(n_edges, batch, MSG_SIZE)        # layout-preserving split

        # --- dgl.function.max('m','m_hat'): dense masked segment-max over edges ---
        # (static per-node loop; fully vectorized where + max over the edge axis)
        for n in range(n_nodes):
            sel = (dst == n)[:, :, None]                           # [E,1,1] bool
            masked = jnp.where(sel, m3, f32(NEG_FILL))             # [E,B,MSG]
            mh = jnp.max(masked, axis=0)                           # [B,MSG]
            # zero-in-degree nodes -> 0 (DGL fill for builtin reducers)
            mh = jnp.where(mh <= f32(NEG_THRESH), f32(0.0), mh)
            upd_in_ref[n * batch:(n + 1) * batch, 0:MSG_SIZE] = mh

        # --- update MLP: lane-packed [m_hat | state], one K=64 dot ---
        upd_in_ref[:, MSG_SIZE:UPD_IN] = state_ref[...]
        hu = jnp.maximum(
            jnp.dot(upd_in_ref[...], w1u_ref[...], preferred_element_type=f32)
            + b1u_ref[...], 0.0)
        state_ref[...] = jnp.dot(hu, w2u_ref[...], preferred_element_type=f32) + b2u_ref[...]

    # ---------------- output MLP (lane-padded 128-wide store) ----------------
    ho = jnp.maximum(
        jnp.dot(state_ref[...], w1o_ref[...], preferred_element_type=f32)
        + b1o_ref[...], 0.0)
    out_ref[...] = jnp.dot(ho, w2o_ref[...], preferred_element_type=f32) + b2o_ref[...]


# ------------------------------ parameter init ------------------------------
def _linear_params(key, d_in, d_out):
    kw, kb = jax.random.split(key)
    lim = 1.0 / jnp.sqrt(jnp.float32(d_in))
    w = jax.random.uniform(kw, (d_in, d_out), jnp.float32, -lim, lim)
    b = jax.random.uniform(kb, (1, d_out), jnp.float32, -lim, lim)
    return w, b


def _mlp_params(key, d_in, hidden, d_out):
    k1, k2 = jax.random.split(key)
    w1, b1 = _linear_params(k1, d_in, hidden)
    w2, b2 = _linear_params(k2, hidden, d_out)
    return (w1, b1, w2, b2)


def init_gnn_params(key):
    k_in, k_msg, k_upd, k_out = jax.random.split(key, 4)
    return {
        "input": _mlp_params(k_in, INPUT_SIZE, HIDDEN, STATE_SIZE),
        "message": _mlp_params(k_msg, MSG_IN, HIDDEN, MSG_SIZE),
        "update": _mlp_params(k_upd, UPD_IN, HIDDEN, STATE_SIZE),
        "output": _mlp_params(k_out, STATE_SIZE, HIDDEN, OUT_SIZE),
    }


def _flatten_and_pad_params(params):
    """Flatten the 4 MLPs; lane-pad the output head to 128 for unmasked stores."""
    w1i, b1i, w2i, b2i = params["input"]
    w1m, b1m, w2m, b2m = params["message"]
    w1u, b1u, w2u, b2u = params["update"]
    w1o, b1o, w2o, b2o = params["output"]
    w2o_pad = jnp.pad(w2o, ((0, 0), (0, OUT_PAD - OUT_SIZE)))
    b2o_pad = jnp.pad(b2o, ((0, 0), (0, OUT_PAD - OUT_SIZE)))
    return (w1i, b1i, w2i, b2i,
            w1m, b1m, w2m, b2m,
            w1u, b1u, w2u, b2u,
            w1o, b1o, w2o_pad, b2o_pad)


# --------------------------------- forward ----------------------------------
@jax.jit
def gnn_forward(state_vec, node_feat, edge_src, edge_dst, edge_feat, params):
    """GraphNeuralNetwork.forward (encoder=True).

    state_vec: [batch, 5 + 2*numNodes], node_feat: [numNodes, 6],
    edge_src/edge_dst: [numEdges] int32, edge_feat: [numEdges]
    returns: [numNodes, batch, OUT_SIZE]
    """
    batch, num_state_var = state_vec.shape
    n_nodes = (num_state_var - 5) // 2
    n_edges = edge_src.shape[0]

    # --- update_states_in_graph (encoder): build graph.ndata['input'] (one-time) ---
    glob = jnp.broadcast_to(state_vec[None, :, :5], (n_nodes, batch, 5))
    local_a = state_vec[:, 5:5 + n_nodes].T[:, :, None]
    local_b = state_vec[:, 5 + n_nodes:5 + 2 * n_nodes].T[:, :, None]
    gfeat = jnp.broadcast_to(node_feat[:, None, :], (n_nodes, batch, 6))
    node_input = jnp.concatenate([glob, local_a, local_b, gfeat], axis=-1)  # [N,B,13]

    # --- loop-invariant per-edge features [edge_feat(1) | src_input(13)] (one-time) ---
    src_input = jnp.take(node_input, edge_src, axis=0)                       # [E,B,13]
    edge_data = jnp.broadcast_to(edge_feat[:, None, None], (n_edges, batch, 1))
    edge_aux = jnp.concatenate([edge_data, src_input], axis=-1)              # [E,B,14]

    x_nodes = node_input.reshape(n_nodes * batch, INPUT_SIZE)
    x_edges = edge_aux.reshape(n_edges * batch, 1 + INPUT_SIZE)

    # --- one-hot gather matrix: row e*B+b has a 1 at column src[e]*B+b ---
    src_rows = (edge_src.astype(jnp.int32)[:, None] * batch
                + jnp.arange(batch, dtype=jnp.int32)[None, :]).reshape(n_edges * batch)
    g_src = (src_rows[:, None]
             == jnp.arange(n_nodes * batch, dtype=jnp.int32)[None, :]).astype(jnp.float32)

    dst_col = edge_dst.astype(jnp.int32)[:, None]                            # [E,1]

    flat_params = _flatten_and_pad_params(params)

    kernel = functools.partial(_gnn_fused_kernel, n_nodes, n_edges, batch)
    vmem = pl.BlockSpec(memory_space=pltpu.MemorySpace.VMEM)

    out_pad = pl.pallas_call(
        kernel,
        out_shape=jax.ShapeDtypeStruct((n_nodes * batch, OUT_PAD), jnp.float32),
        in_specs=[vmem] * (4 + len(flat_params)),
        out_specs=vmem,
        scratch_shapes=[
            pltpu.VMEM((n_nodes * batch, STATE_SIZE), jnp.float32),   # node state
            pltpu.VMEM((n_edges * batch, MSG_IN), jnp.float32),       # packed message input
            pltpu.VMEM((n_nodes * batch, UPD_IN), jnp.float32),       # packed update input
        ],
    )(g_src, dst_col, x_nodes, x_edges, *flat_params)

    return out_pad[:, :OUT_SIZE].reshape(n_nodes, batch, OUT_SIZE)


# ------------------------------ pure-JAX reference ------------------------------
def _mlp_ref(x, p):
    w1, b1, w2, b2 = p
    return jnp.maximum(x @ w1 + b1, 0.0) @ w2 + b2


def gnn_reference(state_vec, node_feat, edge_src, edge_dst, edge_feat, params):
    batch, nsv = state_vec.shape
    n_nodes = (nsv - 5) // 2
    n_edges = edge_src.shape[0]
    glob = jnp.broadcast_to(state_vec[None, :, :5], (n_nodes, batch, 5))
    la = state_vec[:, 5:5 + n_nodes].T[:, :, None]
    lb = state_vec[:, 5 + n_nodes:5 + 2 * n_nodes].T[:, :, None]
    gf = jnp.broadcast_to(node_feat[:, None, :], (n_nodes, batch, 6))
    node_input = jnp.concatenate([glob, la, lb, gf], axis=-1)
    state = _mlp_ref(node_input, params["input"])
    edge_data = jnp.broadcast_to(edge_feat[:, None, None], (n_edges, batch, 1))
    mask = edge_dst[None, :] == jnp.arange(n_nodes)[:, None]        # [N, E]
    for _ in range(NUM_MP_ITERS):
        msg_in = jnp.concatenate([state[edge_src], edge_data, node_input[edge_src]], -1)
        m = _mlp_ref(msg_in, params["message"])
        masked = jnp.where(mask[:, :, None, None], m[None], -jnp.inf)
        m_hat = jnp.max(masked, axis=1)
        m_hat = jnp.where(jnp.isfinite(m_hat), m_hat, 0.0)
        state = _mlp_ref(jnp.concatenate([m_hat, state], -1), params["update"])
    return _mlp_ref(state, params["output"])


# ----------------------------------- main ------------------------------------
if __name__ == "__main__":
    key = jax.random.PRNGKey(0)
    k_state, k_nfeat, k_efeat, k_params = jax.random.split(key, 4)

    num_nodes = 4
    batch = 8                                  # small demo batch
    num_state_var = 5 + 2 * num_nodes          # = 13

    state_vec = jax.random.normal(k_state, (batch, num_state_var), jnp.float32)
    node_feat = jax.random.normal(k_nfeat, (num_nodes, 6), jnp.float32)

    # small directed graph: bidirectional ring (every node has incoming edges)
    edge_src = jnp.array([0, 1, 2, 3, 1, 2, 3, 0], jnp.int32)
    edge_dst = jnp.array([1, 2, 3, 0, 0, 1, 2, 3], jnp.int32)
    edge_feat = jax.random.normal(k_efeat, (edge_src.shape[0],), jnp.float32)

    params = init_gnn_params(k_params)

    out = gnn_forward(state_vec, node_feat, edge_src, edge_dst, edge_feat, params)
    jax.block_until_ready(out)
    assert out.shape == (num_nodes, batch, OUT_SIZE)

    ref = gnn_reference(state_vec, node_feat, edge_src, edge_dst, edge_feat, params)
    max_diff = float(jnp.max(jnp.abs(out - ref)))
    assert max_diff < 1e-3, f"kernel/reference mismatch: max abs diff = {max_diff}"

    print("KERNEL_OK")
</pallas_src>

<mosaic_0001>
module attributes {stable_mosaic.version = 11 : i64} {
  func.func @_gnn_fused_kernel(%arg0: memref<64x32xf32, #tpu.memory_space<vmem>>, %arg1: memref<8x1xi32, #tpu.memory_space<vmem>>, %arg2: memref<32x13xf32, #tpu.memory_space<vmem>>, %arg3: memref<64x14xf32, #tpu.memory_space<vmem>>, %arg4: memref<13x64xf32, #tpu.memory_space<vmem>>, %arg5: memref<1x64xf32, #tpu.memory_space<vmem>>, %arg6: memref<64x32xf32, #tpu.memory_space<vmem>>, %arg7: memref<1x32xf32, #tpu.memory_space<vmem>>, %arg8: memref<46x64xf32, #tpu.memory_space<vmem>>, %arg9: memref<1x64xf32, #tpu.memory_space<vmem>>, %arg10: memref<64x32xf32, #tpu.memory_space<vmem>>, %arg11: memref<1x32xf32, #tpu.memory_space<vmem>>, %arg12: memref<64x64xf32, #tpu.memory_space<vmem>>, %arg13: memref<1x64xf32, #tpu.memory_space<vmem>>, %arg14: memref<64x32xf32, #tpu.memory_space<vmem>>, %arg15: memref<1x32xf32, #tpu.memory_space<vmem>>, %arg16: memref<32x64xf32, #tpu.memory_space<vmem>>, %arg17: memref<1x64xf32, #tpu.memory_space<vmem>>, %arg18: memref<64x128xf32, #tpu.memory_space<vmem>>, %arg19: memref<1x128xf32, #tpu.memory_space<vmem>>, %arg20: memref<32x128xf32, #tpu.memory_space<vmem>>, %arg21: memref<32x32xf32, #tpu.memory_space<vmem>>, %arg22: memref<64x46xf32, #tpu.memory_space<vmem>>, %arg23: memref<32x64xf32, #tpu.memory_space<vmem>>) attributes {dimension_semantics = [], scalar_prefetch = 0 : i64, scratch_operands = 3 : i64, tpu.core_type = #tpu.core_type<tc>} {
    %c0 = arith.constant 0 : index
    %c0_0 = arith.constant 0 : index
    %0 = vector.load %arg2[%c0, %c0_0] : memref<32x13xf32, #tpu.memory_space<vmem>>, vector<32x13xf32>
    %c0_1 = arith.constant 0 : index
    %c0_2 = arith.constant 0 : index
    %1 = vector.load %arg4[%c0_1, %c0_2] : memref<13x64xf32, #tpu.memory_space<vmem>>, vector<13x64xf32>
    %cst = arith.constant dense<0.000000e+00> : vector<32x64xf32>
    %2 = tpu.matmul %0, %1, %cst {dimension_numbers = #tpu.dot_dimension_numbers<[1], [0], [0], [1], [0, 0, 1, 1], [], []>} : vector<32x13xf32>, vector<13x64xf32>, vector<32x64xf32> -> vector<32x64xf32>
    %c0_3 = arith.constant 0 : index
    %c0_4 = arith.constant 0 : index
    %3 = vector.load %arg5[%c0_3, %c0_4] : memref<1x64xf32, #tpu.memory_space<vmem>>, vector<1x64xf32>
    %4 = vector.broadcast %3 : vector<1x64xf32> to vector<32x64xf32>
    %5 = arith.addf %2, %4 : vector<32x64xf32>
    %cst_5 = arith.constant 0.000000e+00 : f32
    %6 = vector.broadcast %cst_5 : f32 to vector<32x64xf32>
    %7 = arith.maximumf %5, %6 : vector<32x64xf32>
    %c0_6 = arith.constant 0 : index
    %c0_7 = arith.constant 0 : index
    %8 = vector.load %arg6[%c0_6, %c0_7] : memref<64x32xf32, #tpu.memory_space<vmem>>, vector<64x32xf32>
    %cst_8 = arith.constant dense<0.000000e+00> : vector<32x32xf32>
    %9 = tpu.matmul %7, %8, %cst_8 {dimension_numbers = #tpu.dot_dimension_numbers<[1], [0], [0], [1], [0, 0, 1, 1], [], []>} : vector<32x64xf32>, vector<64x32xf32>, vector<32x32xf32> -> vector<32x32xf32>
    %c0_9 = arith.constant 0 : index
    %c0_10 = arith.constant 0 : index
    %10 = vector.load %arg7[%c0_9, %c0_10] : memref<1x32xf32, #tpu.memory_space<vmem>>, vector<1x32xf32>
    %11 = vector.broadcast %10 : vector<1x32xf32> to vector<32x32xf32>
    %12 = arith.addf %9, %11 : vector<32x32xf32>
    %c0_11 = arith.constant 0 : index
    %c0_12 = arith.constant 0 : index
    %13 = vector.load %arg21[%c0_11, %c0_12] : memref<32x32xf32, #tpu.memory_space<vmem>>, vector<32x32xf32>
    tpu.vector_store %arg21[%c0_11, %c0_12], %12 {strides = array<i32>} : memref<32x32xf32, #tpu.memory_space<vmem>>, vector<32x32xf32>,
    %c0_13 = arith.constant 0 : index
    %c0_14 = arith.constant 0 : index
    %14 = vector.load %arg3[%c0_13, %c0_14] : memref<64x14xf32, #tpu.memory_space<vmem>>, vector<64x14xf32>
    %c0_15 = arith.constant 0 : index
    %c32 = arith.constant 32 : index
    %15 = vector.load %arg22[%c0_15, %c32] : memref<64x46xf32, #tpu.memory_space<vmem>>, vector<64x14xf32>
    tpu.vector_store %arg22[%c0_15, %c32], %14 {strides = array<i32>} : memref<64x46xf32, #tpu.memory_space<vmem>>, vector<64x14xf32>,
    %c0_16 = arith.constant 0 : index
    %c0_17 = arith.constant 0 : index
    %16 = vector.load %arg0[%c0_16, %c0_17] : memref<64x32xf32, #tpu.memory_space<vmem>>, vector<64x32xf32>
    %c0_18 = arith.constant 0 : index
    %c0_19 = arith.constant 0 : index
    %17 = vector.load %arg1[%c0_18, %c0_19] : memref<8x1xi32, #tpu.memory_space<vmem>>, vector<8x1xi32>
    %c0_20 = arith.constant 0 : index
    %c0_21 = arith.constant 0 : index
    %18 = vector.load %arg21[%c0_20, %c0_21] : memref<32x32xf32, #tpu.memory_space<vmem>>, vector<32x32xf32>
    %cst_22 = arith.constant dense<0.000000e+00> : vector<64x32xf32>
    %19 = tpu.matmul %16, %18, %cst_22 {dimension_numbers = #tpu.dot_dimension_numbers<[1], [0], [0], [1], [0, 0, 1, 1], [], []>} : vector<64x32xf32>, vector<32x32xf32>, vector<64x32xf32> -> vector<64x32xf32>
    %c0_23 = arith.constant 0 : index
    %c0_24 = arith.constant 0 : index
    %20 = vector.load %arg22[%c0_23, %c0_24] : memref<64x46xf32, #tpu.memory_space<vmem>>, vector<64x32xf32>
    tpu.vector_store %arg22[%c0_23, %c0_24], %19 {strides = array<i32>} : memref<64x46xf32, #tpu.memory_space<vmem>>, vector<64x32xf32>,
    %c0_25 = arith.constant 0 : index
    %c0_26 = arith.constant 0 : index
    %21 = vector.load %arg22[%c0_25, %c0_26] : memref<64x46xf32, #tpu.memory_space<vmem>>, vector<64x46xf32>
    %c0_27 = arith.constant 0 : index
    %c0_28 = arith.constant 0 : index
    %22 = vector.load %arg8[%c0_27, %c0_28] : memref<46x64xf32, #tpu.memory_space<vmem>>, vector<46x64xf32>
    %cst_29 = arith.constant dense<0.000000e+00> : vector<64x64xf32>
    %23 = tpu.matmul %21, %22, %cst_29 {dimension_numbers = #tpu.dot_dimension_numbers<[1], [0], [0], [1], [0, 0, 1, 1], [], []>} : vector<64x46xf32>, vector<46x64xf32>, vector<64x64xf32> -> vector<64x64xf32>
    %c0_30 = arith.constant 0 : index
    %c0_31 = arith.constant 0 : index
    %24 = vector.load %arg9[%c0_30, %c0_31] : memref<1x64xf32, #tpu.memory_space<vmem>>, vector<1x64xf32>
    %25 = vector.broadcast %24 : vector<1x64xf32> to vector<64x64xf32>
    %26 = arith.addf %23, %25 : vector<64x64xf32>
    %cst_32 = arith.constant 0.000000e+00 : f32
    %27 = vector.broadcast %cst_32 : f32 to vector<64x64xf32>
    %28 = arith.maximumf %26, %27 : vector<64x64xf32>
    %c0_33 = arith.constant 0 : index
    %c0_34 = arith.constant 0 : index
    %29 = vector.load %arg10[%c0_33, %c0_34] : memref<64x32xf32, #tpu.memory_space<vmem>>, vector<64x32xf32>
    %cst_35 = arith.constant dense<0.000000e+00> : vector<64x32xf32>
    %30 = tpu.matmul %28, %29, %cst_35 {dimension_numbers = #tpu.dot_dimension_numbers<[1], [0], [0], [1], [0, 0, 1, 1], [], []>} : vector<64x64xf32>, vector<64x32xf32>, vector<64x32xf32> -> vector<64x32xf32>
    %c0_36 = arith.constant 0 : index
    %c0_37 = arith.constant 0 : index
    %31 = vector.load %arg11[%c0_36, %c0_37] : memref<1x32xf32, #tpu.memory_space<vmem>>, vector<1x32xf32>
    %32 = vector.broadcast %31 : vector<1x32xf32> to vector<64x32xf32>
    %33 = arith.addf %30, %32 : vector<64x32xf32>
    %34 = vector.shape_cast %33 : vector<64x32xf32> to vector<8x8x32xf32>
    %c0_i32 = arith.constant 0 : i32
    %35 = vector.broadcast %c0_i32 : i32 to vector<8x1xi32>
    %36 = arith.cmpi eq, %17, %35 : vector<8x1xi32>
    %37 = vector.shape_cast %36 : vector<8x1xi1> to vector<8x1x1xi1>
    %cst_38 = arith.constant -1.000000e+30 : f32
    %38 = vector.shape_cast %37 : vector<8x1x1xi1> to vector<8x1x1xi1>
    %39 = vector.broadcast %38 : vector<8x1x1xi1> to vector<8x8x32xi1>
    %40 = vector.broadcast %cst_38 : f32 to vector<8x8x32xf32>
    %41 = arith.select %39, %34, %40 : vector<8x8x32xi1>, vector<8x8x32xf32>
    %cst_39 = arith.constant dense<0xFF800000> : vector<8x32xf32>
    %42 = vector.multi_reduction <maximumf>, %41, %cst_39 [0] : vector<8x8x32xf32> to vector<8x32xf32>
    %cst_40 = arith.constant -1.000000e+29 : f32
    %43 = vector.broadcast %cst_40 : f32 to vector<8x32xf32>
    %44 = arith.cmpf ole, %42, %43 : vector<8x32xf32>
    %cst_41 = arith.constant 0.000000e+00 : f32
    %45 = vector.broadcast %cst_41 : f32 to vector<8x32xf32>
    %46 = arith.select %44, %45, %42 : vector<8x32xi1>, vector<8x32xf32>
    %c0_42 = arith.constant 0 : index
    %c0_43 = arith.constant 0 : index
    %47 = vector.load %arg23[%c0_42, %c0_43] : memref<32x64xf32, #tpu.memory_space<vmem>>, vector<8x32xf32>
    tpu.vector_store %arg23[%c0_42, %c0_43], %46 {strides = array<i32>} : memref<32x64xf32, #tpu.memory_space<vmem>>, vector<8x32xf32>,
    %c1_i32 = arith.constant 1 : i32
    %48 = vector.broadcast %c1_i32 : i32 to vector<8x1xi32>
    %49 = arith.cmpi eq, %17, %48 : vector<8x1xi32>
    %50 = vector.shape_cast %49 : vector<8x1xi1> to vector<8x1x1xi1>
    %cst_44 = arith.constant -1.000000e+30 : f32
    %51 = vector.shape_cast %50 : vector<8x1x1xi1> to vector<8x1x1xi1>
    %52 = vector.broadcast %51 : vector<8x1x1xi1> to vector<8x8x32xi1>
    %53 = vector.broadcast %cst_44 : f32 to vector<8x8x32xf32>
    %54 = arith.select %52, %34, %53 : vector<8x8x32xi1>, vector<8x8x32xf32>
    %cst_45 = arith.constant dense<0xFF800000> : vector<8x32xf32>
    %55 = vector.multi_reduction <maximumf>, %54, %cst_45 [0] : vector<8x8x32xf32> to vector<8x32xf32>
    %cst_46 = arith.constant -1.000000e+29 : f32
    %56 = vector.broadcast %cst_46 : f32 to vector<8x32xf32>
    %57 = arith.cmpf ole, %55, %56 : vector<8x32xf32>
    %cst_47 = arith.constant 0.000000e+00 : f32
    %58 = vector.broadcast %cst_47 : f32 to vector<8x32xf32>
    %59 = arith.select %57, %58, %55 : vector<8x32xi1>, vector<8x32xf32>
    %c8 = arith.constant 8 : index
    %c0_48 = arith.constant 0 : index
    %60 = vector.load %arg23[%c8, %c0_48] : memref<32x64xf32, #tpu.memory_space<vmem>>, vector<8x32xf32>
    tpu.vector_store %arg23[%c8, %c0_48], %59 {strides = array<i32>} : memref<32x64xf32, #tpu.memory_space<vmem>>, vector<8x32xf32>,
    %c2_i32 = arith.constant 2 : i32
    %61 = vector.broadcast %c2_i32 : i32 to vector<8x1xi32>
    %62 = arith.cmpi eq, %17, %61 : vector<8x1xi32>
    %63 = vector.shape_cast %62 : vector<8x1xi1> to vector<8x1x1xi1>
    %cst_49 = arith.constant -1.000000e+30 : f32
    %64 = vector.shape_cast %63 : vector<8x1x1xi1> to vector<8x1x1xi1>
    %65 = vector.broadcast %64 : vector<8x1x1xi1> to vector<8x8x32xi1>
    %66 = vector.broadcast %cst_49 : f32 to vector<8x8x32xf32>
    %67 = arith.select %65, %34, %66 : vector<8x8x32xi1>, vector<8x8x32xf32>
    %cst_50 = arith.constant dense<0xFF800000> : vector<8x32xf32>
    %68 = vector.multi_reduction <maximumf>, %67, %cst_50 [0] : vector<8x8x32xf32> to vector<8x32xf32>
    %cst_51 = arith.constant -1.000000e+29 : f32
    %69 = vector.broadcast %cst_51 : f32 to vector<8x32xf32>
    %70 = arith.cmpf ole, %68, %69 : vector<8x32xf32>
    %cst_52 = arith.constant 0.000000e+00 : f32
    %71 = vector.broadcast %cst_52 : f32 to vector<8x32xf32>
    %72 = arith.select %70, %71, %68 : vector<8x32xi1>, vector<8x32xf32>
    %c16 = arith.constant 16 : index
    %c0_53 = arith.constant 0 : index
    %73 = vector.load %arg23[%c16, %c0_53] : memref<32x64xf32, #tpu.memory_space<vmem>>, vector<8x32xf32>
    tpu.vector_store %arg23[%c16, %c0_53], %72 {strides = array<i32>} : memref<32x64xf32, #tpu.memory_space<vmem>>, vector<8x32xf32>,
    %c3_i32 = arith.constant 3 : i32
    %74 = vector.broadcast %c3_i32 : i32 to vector<8x1xi32>
    %75 = arith.cmpi eq, %17, %74 : vector<8x1xi32>
    %76 = vector.shape_cast %75 : vector<8x1xi1> to vector<8x1x1xi1>
    %cst_54 = arith.constant -1.000000e+30 : f32
    %77 = vector.shape_cast %76 : vector<8x1x1xi1> to vector<8x1x1xi1>
    %78 = vector.broadcast %77 : vector<8x1x1xi1> to vector<8x8x32xi1>
    %79 = vector.broadcast %cst_54 : f32 to vector<8x8x32xf32>
    %80 = arith.select %78, %34, %79 : vector<8x8x32xi1>, vector<8x8x32xf32>
    %cst_55 = arith.constant dense<0xFF800000> : vector<8x32xf32>
    %81 = vector.multi_reduction <maximumf>, %80, %cst_55 [0] : vector<8x8x32xf32> to vector<8x32xf32>
    %cst_56 = arith.constant -1.000000e+29 : f32
    %82 = vector.broadcast %cst_56 : f32 to vector<8x32xf32>
    %83 = arith.cmpf ole, %81, %82 : vector<8x32xf32>
    %cst_57 = arith.constant 0.000000e+00 : f32
    %84 = vector.broadcast %cst_57 : f32 to vector<8x32xf32>
    %85 = arith.select %83, %84, %81 : vector<8x32xi1>, vector<8x32xf32>
    %c24 = arith.constant 24 : index
    %c0_58 = arith.constant 0 : index
    %86 = vector.load %arg23[%c24, %c0_58] : memref<32x64xf32, #tpu.memory_space<vmem>>, vector<8x32xf32>
    tpu.vector_store %arg23[%c24, %c0_58], %85 {strides = array<i32>} : memref<32x64xf32, #tpu.memory_space<vmem>>, vector<8x32xf32>,
    %c0_59 = arith.constant 0 : index
    %c0_60 = arith.constant 0 : index
    %87 = vector.load %arg21[%c0_59, %c0_60] : memref<32x32xf32, #tpu.memory_space<vmem>>, vector<32x32xf32>
    %c0_61 = arith.constant 0 : index
    %c32_62 = arith.constant 32 : index
    %88 = vector.load %arg23[%c0_61, %c32_62] : memref<32x64xf32, #tpu.memory_space<vmem>>, vector<32x32xf32>
    tpu.vector_store %arg23[%c0_61, %c32_62], %87 {strides = array<i32>} : memref<32x64xf32, #tpu.memory_space<vmem>>, vector<32x32xf32>,
    %c0_63 = arith.constant 0 : index
    %c0_64 = arith.constant 0 : index
    %89 = vector.load %arg23[%c0_63, %c0_64] : memref<32x64xf32, #tpu.memory_space<vmem>>, vector<32x64xf32>
    %c0_65 = arith.constant 0 : index
    %c0_66 = arith.constant 0 : index
    %90 = vector.load %arg12[%c0_65, %c0_66] : memref<64x64xf32, #tpu.memory_space<vmem>>, vector<64x64xf32>
    %cst_67 = arith.constant dense<0.000000e+00> : vector<32x64xf32>
    %91 = tpu.matmul %89, %90, %cst_67 {dimension_numbers = #tpu.dot_dimension_numbers<[1], [0], [0], [1], [0, 0, 1, 1], [], []>} : vector<32x64xf32>, vector<64x64xf32>, vector<32x64xf32> -> vector<32x64xf32>
    %c0_68 = arith.constant 0 : index
    %c0_69 = arith.constant 0 : index
    %92 = vector.load %arg13[%c0_68, %c0_69] : memref<1x64xf32, #tpu.memory_space<vmem>>, vector<1x64xf32>
    %93 = vector.broadcast %92 : vector<1x64xf32> to vector<32x64xf32>
    %94 = arith.addf %91, %93 : vector<32x64xf32>
    %cst_70 = arith.constant 0.000000e+00 : f32
    %95 = vector.broadcast %cst_70 : f32 to vector<32x64xf32>
    %96 = arith.maximumf %94, %95 : vector<32x64xf32>
    %c0_71 = arith.constant 0 : index
    %c0_72 = arith.constant 0 : index
    %97 = vector.load %arg14[%c0_71, %c0_72] : memref<64x32xf32, #tpu.memory_space<vmem>>, vector<64x32xf32>
    %cst_73 = arith.constant dense<0.000000e+00> : vector<32x32xf32>
    %98 = tpu.matmul %96, %97, %cst_73 {dimension_numbers = #tpu.dot_dimension_numbers<[1], [0], [0], [1], [0, 0, 1, 1], [], []>} : vector<32x64xf32>, vector<64x32xf32>, vector<32x32xf32> -> vector<32x32xf32>
    %c0_74 = arith.constant 0 : index
    %c0_75 = arith.constant 0 : index
    %99 = vector.load %arg15[%c0_74, %c0_75] : memref<1x32xf32, #tpu.memory_space<vmem>>, vector<1x32xf32>
    %100 = vector.broadcast %99 : vector<1x32xf32> to vector<32x32xf32>
    %101 = arith.addf %98, %100 : vector<32x32xf32>
    %c0_76 = arith.constant 0 : index
    %c0_77 = arith.constant 0 : index
    %102 = vector.load %arg21[%c0_76, %c0_77] : memref<32x32xf32, #tpu.memory_space<vmem>>, vector<32x32xf32>
    tpu.vector_store %arg21[%c0_76, %c0_77], %101 {strides = array<i32>} : memref<32x32xf32, #tpu.memory_space<vmem>>, vector<32x32xf32>,
    %c0_78 = arith.constant 0 : index
    %c0_79 = arith.constant 0 : index
    %103 = vector.load %arg21[%c0_78, %c0_79] : memref<32x32xf32, #tpu.memory_space<vmem>>, vector<32x32xf32>
    %cst_80 = arith.constant dense<0.000000e+00> : vector<64x32xf32>
    %104 = tpu.matmul %16, %103, %cst_80 {dimension_numbers = #tpu.dot_dimension_numbers<[1], [0], [0], [1], [0, 0, 1, 1], [], []>} : vector<64x32xf32>, vector<32x32xf32>, vector<64x32xf32> -> vector<64x32xf32>
    %c0_81 = arith.constant 0 : index
    %c0_82 = arith.constant 0 : index
    %105 = vector.load %arg22[%c0_81, %c0_82] : memref<64x46xf32, #tpu.memory_space<vmem>>, vector<64x32xf32>
    tpu.vector_store %arg22[%c0_81, %c0_82], %104 {strides = array<i32>} : memref<64x46xf32, #tpu.memory_space<vmem>>, vector<64x32xf32>,
    %c0_83 = arith.constant 0 : index
    %c0_84 = arith.constant 0 : index
    %106 = vector.load %arg22[%c0_83, %c0_84] : memref<64x46xf32, #tpu.memory_space<vmem>>, vector<64x46xf32>
    %c0_85 = arith.constant 0 : index
    %c0_86 = arith.constant 0 : index
    %107 = vector.load %arg8[%c0_85, %c0_86] : memref<46x64xf32, #tpu.memory_space<vmem>>, vector<46x64xf32>
    %cst_87 = arith.constant dense<0.000000e+00> : vector<64x64xf32>
    %108 = tpu.matmul %106, %107, %cst_87 {dimension_numbers = #tpu.dot_dimension_numbers<[1], [0], [0], [1], [0, 0, 1, 1], [], []>} : vector<64x46xf32>, vector<46x64xf32>, vector<64x64xf32> -> vector<64x64xf32>
    %c0_88 = arith.constant 0 : index
    %c0_89 = arith.constant 0 : index
    %109 = vector.load %arg9[%c0_88, %c0_89] : memref<1x64xf32, #tpu.memory_space<vmem>>, vector<1x64xf32>
    %110 = vector.broadcast %109 : vector<1x64xf32> to vector<64x64xf32>
    %111 = arith.addf %108, %110 : vector<64x64xf32>
    %cst_90 = arith.constant 0.000000e+00 : f32
    %112 = vector.broadcast %cst_90 : f32 to vector<64x64xf32>
    %113 = arith.maximumf %111, %112 : vector<64x64xf32>
    %c0_91 = arith.constant 0 : index
    %c0_92 = arith.constant 0 : index
    %114 = vector.load %arg10[%c0_91, %c0_92] : memref<64x32xf32, #tpu.memory_space<vmem>>, vector<64x32xf32>
    %cst_93 = arith.constant dense<0.000000e+00> : vector<64x32xf32>
    %115 = tpu.matmul %113, %114, %cst_93 {dimension_numbers = #tpu.dot_dimension_numbers<[1], [0], [0], [1], [0, 0, 1, 1], [], []>} : vector<64x64xf32>, vector<64x32xf32>, vector<64x32xf32> -> vector<64x32xf32>
    %c0_94 = arith.constant 0 : index
    %c0_95 = arith.constant 0 : index
    %116 = vector.load %arg11[%c0_94, %c0_95] : memref<1x32xf32, #tpu.memory_space<vmem>>, vector<1x32xf32>
    %117 = vector.broadcast %116 : vector<1x32xf32> to vector<64x32xf32>
    %118 = arith.addf %115, %117 : vector<64x32xf32>
    %119 = vector.shape_cast %118 : vector<64x32xf32> to vector<8x8x32xf32>
    %c0_i32_96 = arith.constant 0 : i32
    %120 = vector.broadcast %c0_i32_96 : i32 to vector<8x1xi32>
    %121 = arith.cmpi eq, %17, %120 : vector<8x1xi32>
    %122 = vector.shape_cast %121 : vector<8x1xi1> to vector<8x1x1xi1>
    %cst_97 = arith.constant -1.000000e+30 : f32
    %123 = vector.shape_cast %122 : vector<8x1x1xi1> to vector<8x1x1xi1>
    %124 = vector.broadcast %123 : vector<8x1x1xi1> to vector<8x8x32xi1>
    %125 = vector.broadcast %cst_97 : f32 to vector<8x8x32xf32>
    %126 = arith.select %124, %119, %125 : vector<8x8x32xi1>, vector<8x8x32xf32>
    %cst_98 = arith.constant dense<0xFF800000> : vector<8x32xf32>
    %127 = vector.multi_reduction <maximumf>, %126, %cst_98 [0] : vector<8x8x32xf32> to vector<8x32xf32>
    %cst_99 = arith.constant -1.000000e+29 : f32
    %128 = vector.broadcast %cst_99 : f32 to vector<8x32xf32>
    %129 = arith.cmpf ole, %127, %128 : vector<8x32xf32>
    %cst_100 = arith.constant 0.000000e+00 : f32
    %130 = vector.broadcast %cst_100 : f32 to vector<8x32xf32>
    %131 = arith.select %129, %130, %127 : vector<8x32xi1>, vector<8x32xf32>
    %c0_101 = arith.constant 0 : index
    %c0_102 = arith.constant 0 : index
    %132 = vector.load %arg23[%c0_101, %c0_102] : memref<32x64xf32, #tpu.memory_space<vmem>>, vector<8x32xf32>
    tpu.vector_store %arg23[%c0_101, %c0_102], %131 {strides = array<i32>} : memref<32x64xf32, #tpu.memory_space<vmem>>, vector<8x32xf32>,
    %c1_i32_103 = arith.constant 1 : i32
    %133 = vector.broadcast %c1_i32_103 : i32 to vector<8x1xi32>
    %134 = arith.cmpi eq, %17, %133 : vector<8x1xi32>
    %135 = vector.shape_cast %134 : vector<8x1xi1> to vector<8x1x1xi1>
    %cst_104 = arith.constant -1.000000e+30 : f32
    %136 = vector.shape_cast %135 : vector<8x1x1xi1> to vector<8x1x1xi1>
    %137 = vector.broadcast %136 : vector<8x1x1xi1> to vector<8x8x32xi1>
    %138 = vector.broadcast %cst_104 : f32 to vector<8x8x32xf32>
    %139 = arith.select %137, %119, %138 : vector<8x8x32xi1>, vector<8x8x32xf32>
    %cst_105 = arith.constant dense<0xFF800000> : vector<8x32xf32>
    %140 = vector.multi_reduction <maximumf>, %139, %cst_105 [0] : vector<8x8x32xf32> to vector<8x32xf32>
    %cst_106 = arith.constant -1.000000e+29 : f32
    %141 = vector.broadcast %cst_106 : f32 to vector<8x32xf32>
    %142 = arith.cmpf ole, %140, %141 : vector<8x32xf32>
    %cst_107 = arith.constant 0.000000e+00 : f32
    %143 = vector.broadcast %cst_107 : f32 to vector<8x32xf32>
    %144 = arith.select %142, %143, %140 : vector<8x32xi1>, vector<8x32xf32>
    %c8_108 = arith.constant 8 : index
    %c0_109 = arith.constant 0 : index
    %145 = vector.load %arg23[%c8_108, %c0_109] : memref<32x64xf32, #tpu.memory_space<vmem>>, vector<8x32xf32>
    tpu.vector_store %arg23[%c8_108, %c0_109], %144 {strides = array<i32>} : memref<32x64xf32, #tpu.memory_space<vmem>>, vector<8x32xf32>,
    %c2_i32_110 = arith.constant 2 : i32
    %146 = vector.broadcast %c2_i32_110 : i32 to vector<8x1xi32>
    %147 = arith.cmpi eq, %17, %146 : vector<8x1xi32>
    %148 = vector.shape_cast %147 : vector<8x1xi1> to vector<8x1x1xi1>
    %cst_111 = arith.constant -1.000000e+30 : f32
    %149 = vector.shape_cast %148 : vector<8x1x1xi1> to vector<8x1x1xi1>
    %150 = vector.broadcast %149 : vector<8x1x1xi1> to vector<8x8x32xi1>
    %151 = vector.broadcast %cst_111 : f32 to vector<8x8x32xf32>
    %152 = arith.select %150, %119, %151 : vector<8x8x32xi1>, vector<8x8x32xf32>
    %cst_112 = arith.constant dense<0xFF800000> : vector<8x32xf32>
    %153 = vector.multi_reduction <maximumf>, %152, %cst_112 [0] : vector<8x8x32xf32> to vector<8x32xf32>
    %cst_113 = arith.constant -1.000000e+29 : f32
    %154 = vector.broadcast %cst_113 : f32 to vector<8x32xf32>
    %155 = arith.cmpf ole, %153, %154 : vector<8x32xf32>
    %cst_114 = arith.constant 0.000000e+00 : f32
    %156 = vector.broadcast %cst_114 : f32 to vector<8x32xf32>
    %157 = arith.select %155, %156, %153 : vector<8x32xi1>, vector<8x32xf32>
    %c16_115 = arith.constant 16 : index
    %c0_116 = arith.constant 0 : index
    %158 = vector.load %arg23[%c16_115, %c0_116] : memref<32x64xf32, #tpu.memory_space<vmem>>, vector<8x32xf32>
    tpu.vector_store %arg23[%c16_115, %c0_116], %157 {strides = array<i32>} : memref<32x64xf32, #tpu.memory_space<vmem>>, vector<8x32xf32>,
    %c3_i32_117 = arith.constant 3 : i32
    %159 = vector.broadcast %c3_i32_117 : i32 to vector<8x1xi32>
    %160 = arith.cmpi eq, %17, %159 : vector<8x1xi32>
    %161 = vector.shape_cast %160 : vector<8x1xi1> to vector<8x1x1xi1>
    %cst_118 = arith.constant -1.000000e+30 : f32
    %162 = vector.shape_cast %161 : vector<8x1x1xi1> to vector<8x1x1xi1>
    %163 = vector.broadcast %162 : vector<8x1x1xi1> to vector<8x8x32xi1>
    %164 = vector.broadcast %cst_118 : f32 to vector<8x8x32xf32>
    %165 = arith.select %163, %119, %164 : vector<8x8x32xi1>, vector<8x8x32xf32>
    %cst_119 = arith.constant dense<0xFF800000> : vector<8x32xf32>
    %166 = vector.multi_reduction <maximumf>, %165, %cst_119 [0] : vector<8x8x32xf32> to vector<8x32xf32>
    %cst_120 = arith.constant -1.000000e+29 : f32
    %167 = vector.broadcast %cst_120 : f32 to vector<8x32xf32>
    %168 = arith.cmpf ole, %166, %167 : vector<8x32xf32>
    %cst_121 = arith.constant 0.000000e+00 : f32
    %169 = vector.broadcast %cst_121 : f32 to vector<8x32xf32>
    %170 = arith.select %168, %169, %166 : vector<8x32xi1>, vector<8x32xf32>
    %c24_122 = arith.constant 24 : index
    %c0_123 = arith.constant 0 : index
    %171 = vector.load %arg23[%c24_122, %c0_123] : memref<32x64xf32, #tpu.memory_space<vmem>>, vector<8x32xf32>
    tpu.vector_store %arg23[%c24_122, %c0_123], %170 {strides = array<i32>} : memref<32x64xf32, #tpu.memory_space<vmem>>, vector<8x32xf32>,
    %c0_124 = arith.constant 0 : index
    %c0_125 = arith.constant 0 : index
    %172 = vector.load %arg21[%c0_124, %c0_125] : memref<32x32xf32, #tpu.memory_space<vmem>>, vector<32x32xf32>
    %c0_126 = arith.constant 0 : index
    %c32_127 = arith.constant 32 : index
    %173 = vector.load %arg23[%c0_126, %c32_127] : memref<32x64xf32, #tpu.memory_space<vmem>>, vector<32x32xf32>
    tpu.vector_store %arg23[%c0_126, %c32_127], %172 {strides = array<i32>} : memref<32x64xf32, #tpu.memory_space<vmem>>, vector<32x32xf32>,
    %c0_128 = arith.constant 0 : index
    %c0_129 = arith.constant 0 : index
    %174 = vector.load %arg23[%c0_128, %c0_129] : memref<32x64xf32, #tpu.memory_space<vmem>>, vector<32x64xf32>
    %c0_130 = arith.constant 0 : index
    %c0_131 = arith.constant 0 : index
    %175 = vector.load %arg12[%c0_130, %c0_131] : memref<64x64xf32, #tpu.memory_space<vmem>>, vector<64x64xf32>
    %cst_132 = arith.constant dense<0.000000e+00> : vector<32x64xf32>
    %176 = tpu.matmul %174, %175, %cst_132 {dimension_numbers = #tpu.dot_dimension_numbers<[1], [0], [0], [1], [0, 0, 1, 1], [], []>} : vector<32x64xf32>, vector<64x64xf32>, vector<32x64xf32> -> vector<32x64xf32>
    %c0_133 = arith.constant 0 : index
    %c0_134 = arith.constant 0 : index
    %177 = vector.load %arg13[%c0_133, %c0_134] : memref<1x64xf32, #tpu.memory_space<vmem>>, vector<1x64xf32>
    %178 = vector.broadcast %177 : vector<1x64xf32> to vector<32x64xf32>
    %179 = arith.addf %176, %178 : vector<32x64xf32>
    %cst_135 = arith.constant 0.000000e+00 : f32
    %180 = vector.broadcast %cst_135 : f32 to vector<32x64xf32>
    %181 = arith.maximumf %179, %180 : vector<32x64xf32>
    %c0_136 = arith.constant 0 : index
    %c0_137 = arith.constant 0 : index
    %182 = vector.load %arg14[%c0_136, %c0_137] : memref<64x32xf32, #tpu.memory_space<vmem>>, vector<64x32xf32>
    %cst_138 = arith.constant dense<0.000000e+00> : vector<32x32xf32>
    %183 = tpu.matmul %181, %182, %cst_138 {dimension_numbers = #tpu.dot_dimension_numbers<[1], [0], [0], [1], [0, 0, 1, 1], [], []>} : vector<32x64xf32>, vector<64x32xf32>, vector<32x32xf32> -> vector<32x32xf32>
    %c0_139 = arith.constant 0 : index
    %c0_140 = arith.constant 0 : index
    %184 = vector.load %arg15[%c0_139, %c0_140] : memref<1x32xf32, #tpu.memory_space<vmem>>, vector<1x32xf32>
    %185 = vector.broadcast %184 : vector<1x32xf32> to vector<32x32xf32>
    %186 = arith.addf %183, %185 : vector<32x32xf32>
    %c0_141 = arith.constant 0 : index
    %c0_142 = arith.constant 0 : index
    %187 = vector.load %arg21[%c0_141, %c0_142] : memref<32x32xf32, #tpu.memory_space<vmem>>, vector<32x32xf32>
    tpu.vector_store %arg21[%c0_141, %c0_142], %186 {strides = array<i32>} : memref<32x32xf32, #tpu.memory_space<vmem>>, vector<32x32xf32>,
    %c0_143 = arith.constant 0 : index
    %c0_144 = arith.constant 0 : index
    %188 = vector.load %arg21[%c0_143, %c0_144] : memref<32x32xf32, #tpu.memory_space<vmem>>, vector<32x32xf32>
    %cst_145 = arith.constant dense<0.000000e+00> : vector<64x32xf32>
    %189 = tpu.matmul %16, %188, %cst_145 {dimension_numbers = #tpu.dot_dimension_numbers<[1], [0], [0], [1], [0, 0, 1, 1], [], []>} : vector<64x32xf32>, vector<32x32xf32>, vector<64x32xf32> -> vector<64x32xf32>
    %c0_146 = arith.constant 0 : index
    %c0_147 = arith.constant 0 : index
    %190 = vector.load %arg22[%c0_146, %c0_147] : memref<64x46xf32, #tpu.memory_space<vmem>>, vector<64x32xf32>
    tpu.vector_store %arg22[%c0_146, %c0_147], %189 {strides = array<i32>} : memref<64x46xf32, #tpu.memory_space<vmem>>, vector<64x32xf32>,
    %c0_148 = arith.constant 0 : index
    %c0_149 = arith.constant 0 : index
    %191 = vector.load %arg22[%c0_148, %c0_149] : memref<64x46xf32, #tpu.memory_space<vmem>>, vector<64x46xf32>
    %c0_150 = arith.constant 0 : index
    %c0_151 = arith.constant 0 : index
    %192 = vector.load %arg8[%c0_150, %c0_151] : memref<46x64xf32, #tpu.memory_space<vmem>>, vector<46x64xf32>
    %cst_152 = arith.constant dense<0.000000e+00> : vector<64x64xf32>
    %193 = tpu.matmul %191, %192, %cst_152 {dimension_numbers = #tpu.dot_dimension_numbers<[1], [0], [0], [1], [0, 0, 1, 1], [], []>} : vector<64x46xf32>, vector<46x64xf32>, vector<64x64xf32> -> vector<64x64xf32>
    %c0_153 = arith.constant 0 : index
    %c0_154 = arith.constant 0 : index
    %194 = vector.load %arg9[%c0_153, %c0_154] : memref<1x64xf32, #tpu.memory_space<vmem>>, vector<1x64xf32>
    %195 = vector.broadcast %194 : vector<1x64xf32> to vector<64x64xf32>
    %196 = arith.addf %193, %195 : vector<64x64xf32>
    %cst_155 = arith.constant 0.000000e+00 : f32
    %197 = vector.broadcast %cst_155 : f32 to vector<64x64xf32>
    %198 = arith.maximumf %196, %197 : vector<64x64xf32>
    %c0_156 = arith.constant 0 : index
    %c0_157 = arith.constant 0 : index
    %199 = vector.load %arg10[%c0_156, %c0_157] : memref<64x32xf32, #tpu.memory_space<vmem>>, vector<64x32xf32>
    %cst_158 = arith.constant dense<0.000000e+00> : vector<64x32xf32>
    %200 = tpu.matmul %198, %199, %cst_158 {dimension_numbers = #tpu.dot_dimension_numbers<[1], [0], [0], [1], [0, 0, 1, 1], [], []>} : vector<64x64xf32>, vector<64x32xf32>, vector<64x32xf32> -> vector<64x32xf32>
    %c0_159 = arith.constant 0 : index
    %c0_160 = arith.constant 0 : index
    %201 = vector.load %arg11[%c0_159, %c0_160] : memref<1x32xf32, #tpu.memory_space<vmem>>, vector<1x32xf32>
    %202 = vector.broadcast %201 : vector<1x32xf32> to vector<64x32xf32>
    %203 = arith.addf %200, %202 : vector<64x32xf32>
    %204 = vector.shape_cast %203 : vector<64x32xf32> to vector<8x8x32xf32>
    %c0_i32_161 = arith.constant 0 : i32
    %205 = vector.broadcast %c0_i32_161 : i32 to vector<8x1xi32>
    %206 = arith.cmpi eq, %17, %205 : vector<8x1xi32>
    %207 = vector.shape_cast %206 : vector<8x1xi1> to vector<8x1x1xi1>
    %cst_162 = arith.constant -1.000000e+30 : f32
    %208 = vector.shape_cast %207 : vector<8x1x1xi1> to vector<8x1x1xi1>
    %209 = vector.broadcast %208 : vector<8x1x1xi1> to vector<8x8x32xi1>
    %210 = vector.broadcast %cst_162 : f32 to vector<8x8x32xf32>
    %211 = arith.select %209, %204, %210 : vector<8x8x32xi1>, vector<8x8x32xf32>
    %cst_163 = arith.constant dense<0xFF800000> : vector<8x32xf32>
    %212 = vector.multi_reduction <maximumf>, %211, %cst_163 [0] : vector<8x8x32xf32> to vector<8x32xf32>
    %cst_164 = arith.constant -1.000000e+29 : f32
    %213 = vector.broadcast %cst_164 : f32 to vector<8x32xf32>
    %214 = arith.cmpf ole, %212, %213 : vector<8x32xf32>
    %cst_165 = arith.constant 0.000000e+00 : f32
    %215 = vector.broadcast %cst_165 : f32 to vector<8x32xf32>
    %216 = arith.select %214, %215, %212 : vector<8x32xi1>, vector<8x32xf32>
    %c0_166 = arith.constant 0 : index
    %c0_167 = arith.constant 0 : index
    %217 = vector.load %arg23[%c0_166, %c0_167] : memref<32x64xf32, #tpu.memory_space<vmem>>, vector<8x32xf32>
    tpu.vector_store %arg23[%c0_166, %c0_167], %216 {strides = array<i32>} : memref<32x64xf32, #tpu.memory_space<vmem>>, vector<8x32xf32>,
    %c1_i32_168 = arith.constant 1 : i32
    %218 = vector.broadcast %c1_i32_168 : i32 to vector<8x1xi32>
    %219 = arith.cmpi eq, %17, %218 : vector<8x1xi32>
    %220 = vector.shape_cast %219 : vector<8x1xi1> to vector<8x1x1xi1>
    %cst_169 = arith.constant -1.000000e+30 : f32
    %221 = vector.shape_cast %220 : vector<8x1x1xi1> to vector<8x1x1xi1>
    %222 = vector.broadcast %221 : vector<8x1x1xi1> to vector<8x8x32xi1>
    %223 = vector.broadcast %cst_169 : f32 to vector<8x8x32xf32>
    %224 = arith.select %222, %204, %223 : vector<8x8x32xi1>, vector<8x8x32xf32>
    %cst_170 = arith.constant dense<0xFF800000> : vector<8x32xf32>
    %225 = vector.multi_reduction <maximumf>, %224, %cst_170 [0] : vector<8x8x32xf32> to vector<8x32xf32>
    %cst_171 = arith.constant -1.000000e+29 : f32
    %226 = vector.broadcast %cst_171 : f32 to vector<8x32xf32>
    %227 = arith.cmpf ole, %225, %226 : vector<8x32xf32>
    %cst_172 = arith.constant 0.000000e+00 : f32
    %228 = vector.broadcast %cst_172 : f32 to vector<8x32xf32>
    %229 = arith.select %227, %228, %225 : vector<8x32xi1>, vector<8x32xf32>
    %c8_173 = arith.constant 8 : index
    %c0_174 = arith.constant 0 : index
    %230 = vector.load %arg23[%c8_173, %c0_174] : memref<32x64xf32, #tpu.memory_space<vmem>>, vector<8x32xf32>
    tpu.vector_store %arg23[%c8_173, %c0_174], %229 {strides = array<i32>} : memref<32x64xf32, #tpu.memory_space<vmem>>, vector<8x32xf32>,
    %c2_i32_175 = arith.constant 2 : i32
    %231 = vector.broadcast %c2_i32_175 : i32 to vector<8x1xi32>
    %232 = arith.cmpi eq, %17, %231 : vector<8x1xi32>
    %233 = vector.shape_cast %232 : vector<8x1xi1> to vector<8x1x1xi1>
    %cst_176 = arith.constant -1.000000e+30 : f32
    %234 = vector.shape_cast %233 : vector<8x1x1xi1> to vector<8x1x1xi1>
    %235 = vector.broadcast %234 : vector<8x1x1xi1> to vector<8x8x32xi1>
    %236 = vector.broadcast %cst_176 : f32 to vector<8x8x32xf32>
    %237 = arith.select %235, %204, %236 : vector<8x8x32xi1>, vector<8x8x32xf32>
    %cst_177 = arith.constant dense<0xFF800000> : vector<8x32xf32>
    %238 = vector.multi_reduction <maximumf>, %237, %cst_177 [0] : vector<8x8x32xf32> to vector<8x32xf32>
    %cst_178 = arith.constant -1.000000e+29 : f32
    %239 = vector.broadcast %cst_178 : f32 to vector<8x32xf32>
    %240 = arith.cmpf ole, %238, %239 : vector<8x32xf32>
    %cst_179 = arith.constant 0.000000e+00 : f32
    %241 = vector.broadcast %cst_179 : f32 to vector<8x32xf32>
    %242 = arith.select %240, %241, %238 : vector<8x32xi1>, vector<8x32xf32>
    %c16_180 = arith.constant 16 : index
    %c0_181 = arith.constant 0 : index
    %243 = vector.load %arg23[%c16_180, %c0_181] : memref<32x64xf32, #tpu.memory_space<vmem>>, vector<8x32xf32>
    tpu.vector_store %arg23[%c16_180, %c0_181], %242 {strides = array<i32>} : memref<32x64xf32, #tpu.memory_space<vmem>>, vector<8x32xf32>,
    %c3_i32_182 = arith.constant 3 : i32
    %244 = vector.broadcast %c3_i32_182 : i32 to vector<8x1xi32>
    %245 = arith.cmpi eq, %17, %244 : vector<8x1xi32>
    %246 = vector.shape_cast %245 : vector<8x1xi1> to vector<8x1x1xi1>
    %cst_183 = arith.constant -1.000000e+30 : f32
    %247 = vector.shape_cast %246 : vector<8x1x1xi1> to vector<8x1x1xi1>
    %248 = vector.broadcast %247 : vector<8x1x1xi1> to vector<8x8x32xi1>
    %249 = vector.broadcast %cst_183 : f32 to vector<8x8x32xf32>
    %250 = arith.select %248, %204, %249 : vector<8x8x32xi1>, vector<8x8x32xf32>
    %cst_184 = arith.constant dense<0xFF800000> : vector<8x32xf32>
    %251 = vector.multi_reduction <maximumf>, %250, %cst_184 [0] : vector<8x8x32xf32> to vector<8x32xf32>
    %cst_185 = arith.constant -1.000000e+29 : f32
    %252 = vector.broadcast %cst_185 : f32 to vector<8x32xf32>
    %253 = arith.cmpf ole, %251, %252 : vector<8x32xf32>
    %cst_186 = arith.constant 0.000000e+00 : f32
    %254 = vector.broadcast %cst_186 : f32 to vector<8x32xf32>
    %255 = arith.select %253, %254, %251 : vector<8x32xi1>, vector<8x32xf32>
    %c24_187 = arith.constant 24 : index
    %c0_188 = arith.constant 0 : index
    %256 = vector.load %arg23[%c24_187, %c0_188] : memref<32x64xf32, #tpu.memory_space<vmem>>, vector<8x32xf32>
    tpu.vector_store %arg23[%c24_187, %c0_188], %255 {strides = array<i32>} : memref<32x64xf32, #tpu.memory_space<vmem>>, vector<8x32xf32>,
    %c0_189 = arith.constant 0 : index
    %c0_190 = arith.constant 0 : index
    %257 = vector.load %arg21[%c0_189, %c0_190] : memref<32x32xf32, #tpu.memory_space<vmem>>, vector<32x32xf32>
    %c0_191 = arith.constant 0 : index
    %c32_192 = arith.constant 32 : index
    %258 = vector.load %arg23[%c0_191, %c32_192] : memref<32x64xf32, #tpu.memory_space<vmem>>, vector<32x32xf32>
    tpu.vector_store %arg23[%c0_191, %c32_192], %257 {strides = array<i32>} : memref<32x64xf32, #tpu.memory_space<vmem>>, vector<32x32xf32>,
    %c0_193 = arith.constant 0 : index
    %c0_194 = arith.constant 0 : index
    %259 = vector.load %arg23[%c0_193, %c0_194] : memref<32x64xf32, #tpu.memory_space<vmem>>, vector<32x64xf32>
    %c0_195 = arith.constant 0 : index
    %c0_196 = arith.constant 0 : index
    %260 = vector.load %arg12[%c0_195, %c0_196] : memref<64x64xf32, #tpu.memory_space<vmem>>, vector<64x64xf32>
    %cst_197 = arith.constant dense<0.000000e+00> : vector<32x64xf32>
    %261 = tpu.matmul %259, %260, %cst_197 {dimension_numbers = #tpu.dot_dimension_numbers<[1], [0], [0], [1], [0, 0, 1, 1], [], []>} : vector<32x64xf32>, vector<64x64xf32>, vector<32x64xf32> -> vector<32x64xf32>
    %c0_198 = arith.constant 0 : index
    %c0_199 = arith.constant 0 : index
    %262 = vector.load %arg13[%c0_198, %c0_199] : memref<1x64xf32, #tpu.memory_space<vmem>>, vector<1x64xf32>
    %263 = vector.broadcast %262 : vector<1x64xf32> to vector<32x64xf32>
    %264 = arith.addf %261, %263 : vector<32x64xf32>
    %cst_200 = arith.constant 0.000000e+00 : f32
    %265 = vector.broadcast %cst_200 : f32 to vector<32x64xf32>
    %266 = arith.maximumf %264, %265 : vector<32x64xf32>
    %c0_201 = arith.constant 0 : index
    %c0_202 = arith.constant 0 : index
    %267 = vector.load %arg14[%c0_201, %c0_202] : memref<64x32xf32, #tpu.memory_space<vmem>>, vector<64x32xf32>
    %cst_203 = arith.constant dense<0.000000e+00> : vector<32x32xf32>
    %268 = tpu.matmul %266, %267, %cst_203 {dimension_numbers = #tpu.dot_dimension_numbers<[1], [0], [0], [1], [0, 0, 1, 1], [], []>} : vector<32x64xf32>, vector<64x32xf32>, vector<32x32xf32> -> vector<32x32xf32>
    %c0_204 = arith.constant 0 : index
    %c0_205 = arith.constant 0 : index
    %269 = vector.load %arg15[%c0_204, %c0_205] : memref<1x32xf32, #tpu.memory_space<vmem>>, vector<1x32xf32>
    %270 = vector.broadcast %269 : vector<1x32xf32> to vector<32x32xf32>
    %271 = arith.addf %268, %270 : vector<32x32xf32>
    %c0_206 = arith.constant 0 : index
    %c0_207 = arith.constant 0 : index
    %272 = vector.load %arg21[%c0_206, %c0_207] : memref<32x32xf32, #tpu.memory_space<vmem>>, vector<32x32xf32>
    tpu.vector_store %arg21[%c0_206, %c0_207], %271 {strides = array<i32>} : memref<32x32xf32, #tpu.memory_space<vmem>>, vector<32x32xf32>,
    %c0_208 = arith.constant 0 : index
    %c0_209 = arith.constant 0 : index
    %273 = vector.load %arg21[%c0_208, %c0_209] : memref<32x32xf32, #tpu.memory_space<vmem>>, vector<32x32xf32>
    %cst_210 = arith.constant dense<0.000000e+00> : vector<64x32xf32>
    %274 = tpu.matmul %16, %273, %cst_210 {dimension_numbers = #tpu.dot_dimension_numbers<[1], [0], [0], [1], [0, 0, 1, 1], [], []>} : vector<64x32xf32>, vector<32x32xf32>, vector<64x32xf32> -> vector<64x32xf32>
    %c0_211 = arith.constant 0 : index
    %c0_212 = arith.constant 0 : index
    %275 = vector.load %arg22[%c0_211, %c0_212] : memref<64x46xf32, #tpu.memory_space<vmem>>, vector<64x32xf32>
    tpu.vector_store %arg22[%c0_211, %c0_212], %274 {strides = array<i32>} : memref<64x46xf32, #tpu.memory_space<vmem>>, vector<64x32xf32>,
    %c0_213 = arith.constant 0 : index
    %c0_214 = arith.constant 0 : index
    %276 = vector.load %arg22[%c0_213, %c0_214] : memref<64x46xf32, #tpu.memory_space<vmem>>, vector<64x46xf32>
    %c0_215 = arith.constant 0 : index
    %c0_216 = arith.constant 0 : index
    %277 = vector.load %arg8[%c0_215, %c0_216] : memref<46x64xf32, #tpu.memory_space<vmem>>, vector<46x64xf32>
    %cst_217 = arith.constant dense<0.000000e+00> : vector<64x64xf32>
    %278 = tpu.matmul %276, %277, %cst_217 {dimension_numbers = #tpu.dot_dimension_numbers<[1], [0], [0], [1], [0, 0, 1, 1], [], []>} : vector<64x46xf32>, vector<46x64xf32>, vector<64x64xf32> -> vector<64x64xf32>
    %c0_218 = arith.constant 0 : index
    %c0_219 = arith.constant 0 : index
    %279 = vector.load %arg9[%c0_218, %c0_219] : memref<1x64xf32, #tpu.memory_space<vmem>>, vector<1x64xf32>
    %280 = vector.broadcast %279 : vector<1x64xf32> to vector<64x64xf32>
    %281 = arith.addf %278, %280 : vector<64x64xf32>
    %cst_220 = arith.constant 0.000000e+00 : f32
    %282 = vector.broadcast %cst_220 : f32 to vector<64x64xf32>
    %283 = arith.maximumf %281, %282 : vector<64x64xf32>
    %c0_221 = arith.constant 0 : index
    %c0_222 = arith.constant 0 : index
    %284 = vector.load %arg10[%c0_221, %c0_222] : memref<64x32xf32, #tpu.memory_space<vmem>>, vector<64x32xf32>
    %cst_223 = arith.constant dense<0.000000e+00> : vector<64x32xf32>
    %285 = tpu.matmul %283, %284, %cst_223 {dimension_numbers = #tpu.dot_dimension_numbers<[1], [0], [0], [1], [0, 0, 1, 1], [], []>} : vector<64x64xf32>, vector<64x32xf32>, vector<64x32xf32> -> vector<64x32xf32>
    %c0_224 = arith.constant 0 : index
    %c0_225 = arith.constant 0 : index
    %286 = vector.load %arg11[%c0_224, %c0_225] : memref<1x32xf32, #tpu.memory_space<vmem>>, vector<1x32xf32>
    %287 = vector.broadcast %286 : vector<1x32xf32> to vector<64x32xf32>
    %288 = arith.addf %285, %287 : vector<64x32xf32>
    %289 = vector.shape_cast %288 : vector<64x32xf32> to vector<8x8x32xf32>
    %c0_i32_226 = arith.constant 0 : i32
    %290 = vector.broadcast %c0_i32_226 : i32 to vector<8x1xi32>
    %291 = arith.cmpi eq, %17, %290 : vector<8x1xi32>
    %292 = vector.shape_cast %291 : vector<8x1xi1> to vector<8x1x1xi1>
    %cst_227 = arith.constant -1.000000e+30 : f32
    %293 = vector.shape_cast %292 : vector<8x1x1xi1> to vector<8x1x1xi1>
    %294 = vector.broadcast %293 : vector<8x1x1xi1> to vector<8x8x32xi1>
    %295 = vector.broadcast %cst_227 : f32 to vector<8x8x32xf32>
    %296 = arith.select %294, %289, %295 : vector<8x8x32xi1>, vector<8x8x32xf32>
    %cst_228 = arith.constant dense<0xFF800000> : vector<8x32xf32>
    %297 = vector.multi_reduction <maximumf>, %296, %cst_228 [0] : vector<8x8x32xf32> to vector<8x32xf32>
    %cst_229 = arith.constant -1.000000e+29 : f32
    %298 = vector.broadcast %cst_229 : f32 to vector<8x32xf32>
    %299 = arith.cmpf ole, %297, %298 : vector<8x32xf32>
    %cst_230 = arith.constant 0.000000e+00 : f32
    %300 = vector.broadcast %cst_230 : f32 to vector<8x32xf32>
    %301 = arith.select %299, %300, %297 : vector<8x32xi1>, vector<8x32xf32>
    %c0_231 = arith.constant 0 : index
    %c0_232 = arith.constant 0 : index
    %302 = vector.load %arg23[%c0_231, %c0_232] : memref<32x64xf32, #tpu.memory_space<vmem>>, vector<8x32xf32>
    tpu.vector_store %arg23[%c0_231, %c0_232], %301 {strides = array<i32>} : memref<32x64xf32, #tpu.memory_space<vmem>>, vector<8x32xf32>,
    %c1_i32_233 = arith.constant 1 : i32
    %303 = vector.broadcast %c1_i32_233 : i32 to vector<8x1xi32>
    %304 = arith.cmpi eq, %17, %303 : vector<8x1xi32>
    %305 = vector.shape_cast %304 : vector<8x1xi1> to vector<8x1x1xi1>
    %cst_234 = arith.constant -1.000000e+30 : f32
    %306 = vector.shape_cast %305 : vector<8x1x1xi1> to vector<8x1x1xi1>
    %307 = vector.broadcast %306 : vector<8x1x1xi1> to vector<8x8x32xi1>
    %308 = vector.broadcast %cst_234 : f32 to vector<8x8x32xf32>
    %309 = arith.select %307, %289, %308 : vector<8x8x32xi1>, vector<8x8x32xf32>
    %cst_235 = arith.constant dense<0xFF800000> : vector<8x32xf32>
    %310 = vector.multi_reduction <maximumf>, %309, %cst_235 [0] : vector<8x8x32xf32> to vector<8x32xf32>
    %cst_236 = arith.constant -1.000000e+29 : f32
    %311 = vector.broadcast %cst_236 : f32 to vector<8x32xf32>
    %312 = arith.cmpf ole, %310, %311 : vector<8x32xf32>
    %cst_237 = arith.constant 0.000000e+00 : f32
    %313 = vector.broadcast %cst_237 : f32 to vector<8x32xf32>
    %314 = arith.select %312, %313, %310 : vector<8x32xi1>, vector<8x32xf32>
    %c8_238 = arith.constant 8 : index
    %c0_239 = arith.constant 0 : index
    %315 = vector.load %arg23[%c8_238, %c0_239] : memref<32x64xf32, #tpu.memory_space<vmem>>, vector<8x32xf32>
    tpu.vector_store %arg23[%c8_238, %c0_239], %314 {strides = array<i32>} : memref<32x64xf32, #tpu.memory_space<vmem>>, vector<8x32xf32>,
    %c2_i32_240 = arith.constant 2 : i32
    %316 = vector.broadcast %c2_i32_240 : i32 to vector<8x1xi32>
    %317 = arith.cmpi eq, %17, %316 : vector<8x1xi32>
    %318 = vector.shape_cast %317 : vector<8x1xi1> to vector<8x1x1xi1>
    %cst_241 = arith.constant -1.000000e+30 : f32
    %319 = vector.shape_cast %318 : vector<8x1x1xi1> to vector<8x1x1xi1>
    %320 = vector.broadcast %319 : vector<8x1x1xi1> to vector<8x8x32xi1>
    %321 = vector.broadcast %cst_241 : f32 to vector<8x8x32xf32>
    %322 = arith.select %320, %289, %321 : vector<8x8x32xi1>, vector<8x8x32xf32>
    %cst_242 = arith.constant dense<0xFF800000> : vector<8x32xf32>
    %323 = vector.multi_reduction <maximumf>, %322, %cst_242 [0] : vector<8x8x32xf32> to vector<8x32xf32>
    %cst_243 = arith.constant -1.000000e+29 : f32
    %324 = vector.broadcast %cst_243 : f32 to vector<8x32xf32>
    %325 = arith.cmpf ole, %323, %324 : vector<8x32xf32>
    %cst_244 = arith.constant 0.000000e+00 : f32
    %326 = vector.broadcast %cst_244 : f32 to vector<8x32xf32>
    %327 = arith.select %325, %326, %323 : vector<8x32xi1>, vector<8x32xf32>
    %c16_245 = arith.constant 16 : index
    %c0_246 = arith.constant 0 : index
    %328 = vector.load %arg23[%c16_245, %c0_246] : memref<32x64xf32, #tpu.memory_space<vmem>>, vector<8x32xf32>
    tpu.vector_store %arg23[%c16_245, %c0_246], %327 {strides = array<i32>} : memref<32x64xf32, #tpu.memory_space<vmem>>, vector<8x32xf32>,
    %c3_i32_247 = arith.constant 3 : i32
    %329 = vector.broadcast %c3_i32_247 : i32 to vector<8x1xi32>
    %330 = arith.cmpi eq, %17, %329 : vector<8x1xi32>
    %331 = vector.shape_cast %330 : vector<8x1xi1> to vector<8x1x1xi1>
    %cst_248 = arith.constant -1.000000e+30 : f32
    %332 = vector.shape_cast %331 : vector<8x1x1xi1> to vector<8x1x1xi1>
    %333 = vector.broadcast %332 : vector<8x1x1xi1> to vector<8x8x32xi1>
    %334 = vector.broadcast %cst_248 : f32 to vector<8x8x32xf32>
    %335 = arith.select %333, %289, %334 : vector<8x8x32xi1>, vector<8x8x32xf32>
    %cst_249 = arith.constant dense<0xFF800000> : vector<8x32xf32>
    %336 = vector.multi_reduction <maximumf>, %335, %cst_249 [0] : vector<8x8x32xf32> to vector<8x32xf32>
    %cst_250 = arith.constant -1.000000e+29 : f32
    %337 = vector.broadcast %cst_250 : f32 to vector<8x32xf32>
    %338 = arith.cmpf ole, %336, %337 : vector<8x32xf32>
    %cst_251 = arith.constant 0.000000e+00 : f32
    %339 = vector.broadcast %cst_251 : f32 to vector<8x32xf32>
    %340 = arith.select %338, %339, %336 : vector<8x32xi1>, vector<8x32xf32>
    %c24_252 = arith.constant 24 : index
    %c0_253 = arith.constant 0 : index
    %341 = vector.load %arg23[%c24_252, %c0_253] : memref<32x64xf32, #tpu.memory_space<vmem>>, vector<8x32xf32>
    tpu.vector_store %arg23[%c24_252, %c0_253], %340 {strides = array<i32>} : memref<32x64xf32, #tpu.memory_space<vmem>>, vector<8x32xf32>,
    %c0_254 = arith.constant 0 : index
    %c0_255 = arith.constant 0 : index
    %342 = vector.load %arg21[%c0_254, %c0_255] : memref<32x32xf32, #tpu.memory_space<vmem>>, vector<32x32xf32>
    %c0_256 = arith.constant 0 : index
    %c32_257 = arith.constant 32 : index
    %343 = vector.load %arg23[%c0_256, %c32_257] : memref<32x64xf32, #tpu.memory_space<vmem>>, vector<32x32xf32>
    tpu.vector_store %arg23[%c0_256, %c32_257], %342 {strides = array<i32>} : memref<32x64xf32, #tpu.memory_space<vmem>>, vector<32x32xf32>,
    %c0_258 = arith.constant 0 : index
    %c0_259 = arith.constant 0 : index
    %344 = vector.load %arg23[%c0_258, %c0_259] : memref<32x64xf32, #tpu.memory_space<vmem>>, vector<32x64xf32>
    %c0_260 = arith.constant 0 : index
    %c0_261 = arith.constant 0 : index
    %345 = vector.load %arg12[%c0_260, %c0_261] : memref<64x64xf32, #tpu.memory_space<vmem>>, vector<64x64xf32>
    %cst_262 = arith.constant dense<0.000000e+00> : vector<32x64xf32>
    %346 = tpu.matmul %344, %345, %cst_262 {dimension_numbers = #tpu.dot_dimension_numbers<[1], [0], [0], [1], [0, 0, 1, 1], [], []>} : vector<32x64xf32>, vector<64x64xf32>, vector<32x64xf32> -> vector<32x64xf32>
    %c0_263 = arith.constant 0 : index
    %c0_264 = arith.constant 0 : index
    %347 = vector.load %arg13[%c0_263, %c0_264] : memref<1x64xf32, #tpu.memory_space<vmem>>, vector<1x64xf32>
    %348 = vector.broadcast %347 : vector<1x64xf32> to vector<32x64xf32>
    %349 = arith.addf %346, %348 : vector<32x64xf32>
    %cst_265 = arith.constant 0.000000e+00 : f32
    %350 = vector.broadcast %cst_265 : f32 to vector<32x64xf32>
    %351 = arith.maximumf %349, %350 : vector<32x64xf32>
    %c0_266 = arith.constant 0 : index
    %c0_267 = arith.constant 0 : index
    %352 = vector.load %arg14[%c0_266, %c0_267] : memref<64x32xf32, #tpu.memory_space<vmem>>, vector<64x32xf32>
    %cst_268 = arith.constant dense<0.000000e+00> : vector<32x32xf32>
    %353 = tpu.matmul %351, %352, %cst_268 {dimension_numbers = #tpu.dot_dimension_numbers<[1], [0], [0], [1], [0, 0, 1, 1], [], []>} : vector<32x64xf32>, vector<64x32xf32>, vector<32x32xf32> -> vector<32x32xf32>
    %c0_269 = arith.constant 0 : index
    %c0_270 = arith.constant 0 : index
    %354 = vector.load %arg15[%c0_269, %c0_270] : memref<1x32xf32, #tpu.memory_space<vmem>>, vector<1x32xf32>
    %355 = vector.broadcast %354 : vector<1x32xf32> to vector<32x32xf32>
    %356 = arith.addf %353, %355 : vector<32x32xf32>
    %c0_271 = arith.constant 0 : index
    %c0_272 = arith.constant 0 : index
    %357 = vector.load %arg21[%c0_271, %c0_272] : memref<32x32xf32, #tpu.memory_space<vmem>>, vector<32x32xf32>
    tpu.vector_store %arg21[%c0_271, %c0_272], %356 {strides = array<i32>} : memref<32x32xf32, #tpu.memory_space<vmem>>, vector<32x32xf32>,
    %c0_273 = arith.constant 0 : index
    %c0_274 = arith.constant 0 : index
    %358 = vector.load %arg21[%c0_273, %c0_274] : memref<32x32xf32, #tpu.memory_space<vmem>>, vector<32x32xf32>
    %c0_275 = arith.constant 0 : index
    %c0_276 = arith.constant 0 : index
    %359 = vector.load %arg16[%c0_275, %c0_276] : memref<32x64xf32, #tpu.memory_space<vmem>>, vector<32x64xf32>
    %cst_277 = arith.constant dense<0.000000e+00> : vector<32x64xf32>
    %360 = tpu.matmul %358, %359, %cst_277 {dimension_numbers = #tpu.dot_dimension_numbers<[1], [0], [0], [1], [0, 0, 1, 1], [], []>} : vector<32x32xf32>, vector<32x64xf32>, vector<32x64xf32> -> vector<32x64xf32>
    %c0_278 = arith.constant 0 : index
    %c0_279 = arith.constant 0 : index
    %361 = vector.load %arg17[%c0_278, %c0_279] : memref<1x64xf32, #tpu.memory_space<vmem>>, vector<1x64xf32>
    %362 = vector.broadcast %361 : vector<1x64xf32> to vector<32x64xf32>
    %363 = arith.addf %360, %362 : vector<32x64xf32>
    %cst_280 = arith.constant 0.000000e+00 : f32
    %364 = vector.broadcast %cst_280 : f32 to vector<32x64xf32>
    %365 = arith.maximumf %363, %364 : vector<32x64xf32>
    %c0_281 = arith.constant 0 : index
    %c0_282 = arith.constant 0 : index
    %366 = vector.load %arg18[%c0_281, %c0_282] : memref<64x128xf32, #tpu.memory_space<vmem>>, vector<64x128xf32>
    %cst_283 = arith.constant dense<0.000000e+00> : vector<32x128xf32>
    %367 = tpu.matmul %365, %366, %cst_283 {dimension_numbers = #tpu.dot_dimension_numbers<[1], [0], [0], [1], [0, 0, 1, 1], [], []>} : vector<32x64xf32>, vector<64x128xf32>, vector<32x128xf32> -> vector<32x128xf32>
    %c0_284 = arith.constant 0 : index
    %c0_285 = arith.constant 0 : index
    %368 = vector.load %arg19[%c0_284, %c0_285] : memref<1x128xf32, #tpu.memory_space<vmem>>, vector<1x128xf32>
    %369 = vector.broadcast %368 : vector<1x128xf32> to vector<32x128xf32>
    %370 = arith.addf %367, %369 : vector<32x128xf32>
    %c0_286 = arith.constant 0 : index
    %c0_287 = arith.constant 0 : index
    %371 = vector.load %arg20[%c0_286, %c0_287] : memref<32x128xf32, #tpu.memory_space<vmem>>, vector<32x128xf32>
    tpu.vector_store %arg20[%c0_286, %c0_287], %370 {strides = array<i32>} : memref<32x128xf32, #tpu.memory_space<vmem>>, vector<32x128xf32>,
    return
  }
}

</mosaic_0001>

<llo_original>
// kernel: gnn_forward.1
$region0: #{gnn_forward.1}
  #allocation0 [shape = 'u32[]', space=smem, size = 0x4, offset = 0x4, fixed_abs, tag = 'smem constant byte address 0x4 - core index']
  #allocation1 [shape = 'u32[72,128]{1,0:T(1,128)}', space=vmem, size = 0x9000, scoped, tag = 'internal scratch']
  #allocation2 [shape = 'f32[32,32]{1,0:T(8,128)}', space=vmem, size = 0x4000, scoped, tag = 'scratch operand']
  #allocation3 [shape = 'f32[64,46]{1,0:T(8,128)}', space=vmem, size = 0x8000, scoped, tag = 'scratch operand']
  #allocation4 [shape = 'f32[32,64]{1,0:T(8,128)}', space=vmem, size = 0x4000, scoped, tag = 'scratch operand']
  %s0 = inlined_call_operand.vmem [shape: f32[64,32], index: 0, kind: input, shape index: {}]
  %s1 = inlined_call_operand.vmem [shape: s32[8,1], index: 1, kind: input, shape index: {}]
  %s2 = inlined_call_operand.vmem [shape: f32[32,13], index: 2, kind: input, shape index: {}]
  %s3 = inlined_call_operand.vmem [shape: f32[64,14], index: 3, kind: input, shape index: {}]
  %s4 = inlined_call_operand.vmem [shape: f32[13,64], index: 4, kind: input, shape index: {}]
  %s5 = inlined_call_operand.vmem [shape: f32[1,64], index: 5, kind: input, shape index: {}]
  %s6 = inlined_call_operand.vmem [shape: f32[64,32], index: 6, kind: input, shape index: {}]
  %s7 = inlined_call_operand.vmem [shape: f32[1,32], index: 7, kind: input, shape index: {}]
  %s8 = inlined_call_operand.vmem [shape: f32[46,64], index: 8, kind: input, shape index: {}]
  %s9 = inlined_call_operand.vmem [shape: f32[1,64], index: 9, kind: input, shape index: {}]
  %s10 = inlined_call_operand.vmem [shape: f32[64,32], index: 10, kind: input, shape index: {}]
  %s11 = inlined_call_operand.vmem [shape: f32[1,32], index: 11, kind: input, shape index: {}]
  %s12 = inlined_call_operand.vmem [shape: f32[64,64], index: 12, kind: input, shape index: {}]
  %s13 = inlined_call_operand.vmem [shape: f32[1,64], index: 13, kind: input, shape index: {}]
  %s14 = inlined_call_operand.vmem [shape: f32[64,32], index: 14, kind: input, shape index: {}]
  %s15 = inlined_call_operand.vmem [shape: f32[1,32], index: 15, kind: input, shape index: {}]
  %s16 = inlined_call_operand.vmem [shape: f32[32,64], index: 16, kind: input, shape index: {}]
  %s17 = inlined_call_operand.vmem [shape: f32[1,64], index: 17, kind: input, shape index: {}]
  %s18 = inlined_call_operand.vmem [shape: f32[64,128], index: 18, kind: input, shape index: {}]
  %s19 = inlined_call_operand.vmem [shape: f32[1,128], index: 19, kind: input, shape index: {}]
  %s20 = inlined_call_operand.vmem [shape: f32[32,128], index: 20, kind: output, shape index: {}]
  %s21 = sld [smem:[#allocation0]]
  $region90: #{gnn_forward.1} parent=0
    _
  %s23 = ssub.s32 1, %s21
  %s24 = scalar_select 0, %s23, %s21
  // Predicated region
  $region2: #{gnn_forward.1} parent=0 // pred_check
    _
  $region3: #{gnn_forward.1} parent=0 // pred_check_branch
    %26 = sbr.rel (0) target = $region5
  $region4: #{gnn_forward.1} parent=0 // pred_region
    _
  $region5: #{gnn_forward.1} parent=0 // pred_fallthru
    _
  // Predicated region
  $region6: #{gnn_forward.1} parent=0 // pred_check
    _
  $region7: #{gnn_forward.1} parent=0 // pred_check_branch
    %28 = sbr.rel (0) target = $region9
  $region8: #{gnn_forward.1} parent=0 // pred_region
    _
  $region9: #{gnn_forward.1} parent=0 // pred_fallthru
    _
  // Predicated region
  $region10: #{gnn_forward.1} parent=0 // pred_check
    _
  $region11: #{gnn_forward.1} parent=0 // pred_check_branch
    %30 = sbr.rel (0) target = $region13
  $region12: #{gnn_forward.1} parent=0 // pred_region
    _
  $region13: #{gnn_forward.1} parent=0 // pred_fallthru
    _
  // Predicated region
  $region14: #{gnn_forward.1} parent=0 // pred_check
    _
  $region15: #{gnn_forward.1} parent=0 // pred_check_branch
    %32 = sbr.rel (0) target = $region17
  $region16: #{gnn_forward.1} parent=0 // pred_region
    _
  $region17: #{gnn_forward.1} parent=0 // pred_fallthru
    _
  // Predicated region
  $region18: #{gnn_forward.1} parent=0 // pred_check
    _
  $region19: #{gnn_forward.1} parent=0 // pred_check_branch
    %34 = sbr.rel (0) target = $region21
  $region20: #{gnn_forward.1} parent=0 // pred_region
    _
  $region21: #{gnn_forward.1} parent=0 // pred_fallthru
    _
  // Predicated region
  $region22: #{gnn_forward.1} parent=0 // pred_check
    _
  $region23: #{gnn_forward.1} parent=0 // pred_check_branch
    %36 = sbr.rel (0) target = $region25
  $region24: #{gnn_forward.1} parent=0 // pred_region
    _
  $region25: #{gnn_forward.1} parent=0 // pred_fallthru
    _
  // Predicated region
  $region26: #{gnn_forward.1} parent=0 // pred_check
    _
  $region27: #{gnn_forward.1} parent=0 // pred_check_branch
    %38 = sbr.rel (0) target = $region29
  $region28: #{gnn_forward.1} parent=0 // pred_region
    _
  $region29: #{gnn_forward.1} parent=0 // pred_fallthru
    _
  // Predicated region
  $region30: #{gnn_forward.1} parent=0 // pred_check
    _
  $region31: #{gnn_forward.1} parent=0 // pred_check_branch
    %40 = sbr.rel (0) target = $region33
  $region32: #{gnn_forward.1} parent=0 // pred_region
    _
  $region33: #{gnn_forward.1} parent=0 // pred_fallthru
    _
  // Predicated region
  $region34: #{gnn_forward.1} parent=0 // pred_check
    _
  $region35: #{gnn_forward.1} parent=0 // pred_check_branch
    %42 = sbr.rel (0) target = $region37
  $region36: #{gnn_forward.1} parent=0 // pred_region
    _
  $region37: #{gnn_forward.1} parent=0 // pred_fallthru
    _
  // Predicated region
  $region38: #{gnn_forward.1} parent=0 // pred_check
    _
  $region39: #{gnn_forward.1} parent=0 // pred_check_branch
    %44 = sbr.rel (0) target = $region41
  $region40: #{gnn_forward.1} parent=0 // pred_region
    _
  $region41: #{gnn_forward.1} parent=0 // pred_fallthru
    _
  // Predicated region
  $region42: #{gnn_forward.1} parent=0 // pred_check
    _
  $region43: #{gnn_forward.1} parent=0 // pred_check_branch
    %46 = sbr.rel (0) target = $region45
  $region44: #{gnn_forward.1} parent=0 // pred_region
    _
  $region45: #{gnn_forward.1} parent=0 // pred_fallthru
    _
  // Predicated region
  $region46: #{gnn_forward.1} parent=0 // pred_check
    _
  $region47: #{gnn_forward.1} parent=0 // pred_check_branch
    %48 = sbr.rel (0) target = $region49
  $region48: #{gnn_forward.1} parent=0 // pred_region
    _
  $region49: #{gnn_forward.1} parent=0 // pred_fallthru
    _
  // Predicated region
  $region50: #{gnn_forward.1} parent=0 // pred_check
    _
  $region51: #{gnn_forward.1} parent=0 // pred_check_branch
    %50 = sbr.rel (0) target = $region53
  $region52: #{gnn_forward.1} parent=0 // pred_region
    _
  $region53: #{gnn_forward.1} parent=0 // pred_fallthru
    _
  // Predicated region
  $region54: #{gnn_forward.1} parent=0 // pred_check
    _
  $region55: #{gnn_forward.1} parent=0 // pred_check_branch
    %52 = sbr.rel (0) target = $region57
  $region56: #{gnn_forward.1} parent=0 // pred_region
    _
  $region57: #{gnn_forward.1} parent=0 // pred_fallthru
    _
  // Predicated region
  $region58: #{gnn_forward.1} parent=0 // pred_check
    _
  $region59: #{gnn_forward.1} parent=0 // pred_check_branch
    %54 = sbr.rel (0) target = $region61
  $region60: #{gnn_forward.1} parent=0 // pred_region
    _
  $region61: #{gnn_forward.1} parent=0 // pred_fallthru
    _
  // Predicated region
  $region62: #{gnn_forward.1} parent=0 // pred_check
    _
  $region63: #{gnn_forward.1} parent=0 // pred_check_branch
    %56 = sbr.rel (0) target = $region65
  $region64: #{gnn_forward.1} parent=0 // pred_region
    _
  $region65: #{gnn_forward.1} parent=0 // pred_fallthru
    _
  // Predicated region
  $region66: #{gnn_forward.1} parent=0 // pred_check
    _
  $region67: #{gnn_forward.1} parent=0 // pred_check_branch
    %58 = sbr.rel (0) target = $region69
  $region68: #{gnn_forward.1} parent=0 // pred_region
    _
  $region69: #{gnn_forward.1} parent=0 // pred_fallthru
    _
  // Predicated region
  $region70: #{gnn_forward.1} parent=0 // pred_check
    _
  $region71: #{gnn_forward.1} parent=0 // pred_check_branch
    %60 = sbr.rel (0) target = $region73
  $region72: #{gnn_forward.1} parent=0 // pred_region
    _
  $region73: #{gnn_forward.1} parent=0 // pred_fallthru
    _
  // Predicated region
  $region74: #{gnn_forward.1} parent=0 // pred_check
    _
  $region75: #{gnn_forward.1} parent=0 // pred_check_branch
    %62 = sbr.rel (0) target = $region77
  $region76: #{gnn_forward.1} parent=0 // pred_region
    _
  $region77: #{gnn_forward.1} parent=0 // pred_fallthru
    _
  // Predicated region
  $region78: #{gnn_forward.1} parent=0 // pred_check
    _
  $region79: #{gnn_forward.1} parent=0 // pred_check_branch
    %64 = sbr.rel (0) target = $region81
  $region80: #{gnn_forward.1} parent=0 // pred_region
    _
  $region81: #{gnn_forward.1} parent=0 // pred_fallthru
    _
  %v65 = vld [vmem:[%s2] sm:$0xff]
  %v66 = vld [vmem:[%s2 + $0x8] sm:$0xff]
  %v67 = vld [vmem:[%s2 + $0x10] sm:$0xff]
  %v68 = vld [vmem:[%s2 + $0x18] sm:$0xff]
  %v69 = vld [vmem:[%s4] sm:$0xff]
  %v70 = vld [vmem:[%s4 + $0x8] sm:$0x1f]
  %v71 = vld [vmem:[%s5] sm:$0x1]
  %v73 = vperm.slane %v71, 0
  %vm75 = vcmask 105472
  %v77 = vsel %vm75, %v65, 0
  %v80 = vsel %vm75, %v66, 0
  %v83 = vsel %vm75, %v67, 0
  %v86 = vsel %vm75, %v68, 0
  %vm88 = vcmask 1044480
  %v90 = vsel %vm88, %v70, 0
  %92 = vmatpush.msra.mxu0 0.0
  %93 = vmatpush.msra.mxu0 0.0
  %94 = vmatpush.msra.mxu0 0.0
  %95 = vmatpush.msra.mxu0 0.0
  %96 = vmatpush.msra.mxu0 0.0
  %97 = vmatpush.msra.mxu0 0.0
  %98 = vmatpush.msra.mxu0 0.0
  %99 = vmatpush.msra.mxu0 0.0
  %100 = vmatpush.msra.mxu0 0.0
  %101 = vmatpush.msra.mxu0 0.0
  %102 = vmatpush.msra.mxu0 0.0
  %103 = vmatpush.msra.mxu0 0.0
  %104 = vmatpush.msra.mxu0 0.0
  %105 = vmatpush.msra.mxu0 0.0
  %106 = vmatpush.msra.mxu0 %v90
  %107 = vmatpush.msra.mxu0 %v69
  %108 = vmatmul.f32.gmra.mxu0 %v77
  %v109 = vpop.f32.mrf.mxu0
  %v110 = vadd.f32 %v73, %v109
  %111 = vmatmul.f32.gmra.mxu0 %v80
  %v112 = vpop.f32.mrf.mxu0
  %v113 = vadd.f32 %v73, %v112
  %114 = vmatmul.f32.gmra.mxu0 %v83
  %v115 = vpop.f32.mrf.mxu0
  %v116 = vadd.f32 %v73, %v115
  %117 = vmatmul.f32.gmra.mxu0 %v86
  %v118 = vpop.f32.mrf.mxu0
  %v119 = vadd.f32 %v73, %v118
  %120 = vdwg.mxu0
  %v121 = vmax.f32 %v110, 0.0
  %v122 = vmax.f32 %v113, 0.0
  %v123 = vmax.f32 %v116, 0.0
  %v124 = vmax.f32 %v119, 0.0
  %v125 = vld [vmem:[%s6] sm:$0xff]
  %v126 = vld [vmem:[%s6 + $0x8] sm:$0xff]
  %v127 = vld [vmem:[%s6 + $0x10] sm:$0xff]
  %v128 = vld [vmem:[%s6 + $0x18] sm:$0xff]
  %v129 = vld [vmem:[%s6 + $0x20] sm:$0xff]
  %v130 = vld [vmem:[%s6 + $0x28] sm:$0xff]
  %v131 = vld [vmem:[%s6 + $0x30] sm:$0xff]
  %v132 = vld [vmem:[%s6 + $0x38] sm:$0xff]
  %v133 = vld [vmem:[%s7] sm:$0x1]
  %v135 = vperm.slane %v133, 0
  %vm137 = vcmask 523264
  %v139 = vsel %vm137, %v121, 0
  %v142 = vsel %vm137, %v122, 0
  %v145 = vsel %vm137, %v123, 0
  %v148 = vsel %vm137, %v124, 0
  %150 = vmatpush.msra.mxu0 0.0
  %151 = vmatpush.msra.mxu0 0.0
  %152 = vmatpush.msra.mxu0 0.0
  %153 = vmatpush.msra.mxu0 0.0
  %154 = vmatpush.msra.mxu0 0.0
  %155 = vmatpush.msra.mxu0 0.0
  %156 = vmatpush.msra.mxu0 0.0
  %157 = vmatpush.msra.mxu0 0.0
  %158 = vmatpush.msra.mxu0 %v132
  %159 = vmatpush.msra.mxu0 %v131
  %160 = vmatpush.msra.mxu0 %v130
  %161 = vmatpush.msra.mxu0 %v129
  %162 = vmatpush.msra.mxu0 %v128
  %163 = vmatpush.msra.mxu0 %v127
  %164 = vmatpush.msra.mxu0 %v126
  %165 = vmatpush.msra.mxu0 %v125
  %166 = vmatmul.f32.gmra.mxu0 %v139
  %v167 = vpop.f32.mrf.mxu0
  %v168 = vadd.f32 %v135, %v167
  %169 = vmatmul.f32.gmra.mxu0 %v142
  %v170 = vpop.f32.mrf.mxu0
  %v171 = vadd.f32 %v135, %v170
  %172 = vmatmul.f32.gmra.mxu0 %v145
  %v173 = vpop.f32.mrf.mxu0
  %v174 = vadd.f32 %v135, %v173
  %175 = vmatmul.f32.gmra.mxu0 %v148
  %v176 = vpop.f32.mrf.mxu0
  %v177 = vadd.f32 %v135, %v176
  %178 = vdwg.mxu0
  %vm179 = vcmask 261120
  %180 = vst.msk [vmem:[#allocation2] sm:$0xff] %vm179, %v168
  %181 = vst.msk [vmem:[#allocation2 + $0x8] sm:$0xff] %vm179, %v171
  %182 = vst.msk [vmem:[#allocation2 + $0x10] sm:$0xff] %vm179, %v174
  %183 = vst.msk [vmem:[#allocation2 + $0x18] sm:$0xff] %vm179, %v177
  %v184 = vld [vmem:[%s3] sm:$0xff]
  %v185 = vld [vmem:[%s3 + $0x8] sm:$0xff]
  %v186 = vld [vmem:[%s3 + $0x10] sm:$0xff]
  %v187 = vld [vmem:[%s3 + $0x18] sm:$0xff]
  %v188 = vld [vmem:[%s3 + $0x20] sm:$0xff]
  %v189 = vld [vmem:[%s3 + $0x28] sm:$0xff]
  %v190 = vld [vmem:[%s3 + $0x30] sm:$0xff]
  %v191 = vld [vmem:[%s3 + $0x38] sm:$0xff]
  %200 = vrot.lane.b32.xlu0 %v184, 32
  %v201 = vpop.permute.xlu0 %200
  %202 = vrot.lane.b32.xlu0 %v185, 32
  %v203 = vpop.permute.xlu0 %202
  %204 = vrot.lane.b32.xlu0 %v186, 32
  %v205 = vpop.permute.xlu0 %204
  %206 = vrot.lane.b32.xlu0 %v187, 32
  %v207 = vpop.permute.xlu0 %206
  %208 = vrot.lane.b32.xlu0 %v188, 32
  %v209 = vpop.permute.xlu0 %208
  %210 = vrot.lane.b32.xlu0 %v189, 32
  %v211 = vpop.permute.xlu0 %210
  %212 = vrot.lane.b32.xlu0 %v190, 32
  %v213 = vpop.permute.xlu0 %212
  %214 = vrot.lane.b32.xlu0 %v191, 32
  %v215 = vpop.permute.xlu0 %214
  %vm224 = vcmask 376064
  %225 = vst.msk [vmem:[#allocation3] sm:$0xff] %vm224, %v201
  %226 = vst.msk [vmem:[#allocation3 + $0x8] sm:$0xff] %vm224, %v203
  %227 = vst.msk [vmem:[#allocation3 + $0x10] sm:$0xff] %vm224, %v205
  %228 = vst.msk [vmem:[#allocation3 + $0x18] sm:$0xff] %vm224, %v207
  %229 = vst.msk [vmem:[#allocation3 + $0x20] sm:$0xff] %vm224, %v209
  %230 = vst.msk [vmem:[#allocation3 + $0x28] sm:$0xff] %vm224, %v211
  %231 = vst.msk [vmem:[#allocation3 + $0x30] sm:$0xff] %vm224, %v213
  %232 = vst.msk [vmem:[#allocation3 + $0x38] sm:$0xff] %vm224, %v215
  %v233 = vld [vmem:[%s0] sm:$0xff]
  %v234 = vld [vmem:[%s0 + $0x8] sm:$0xff]
  %v235 = vld [vmem:[%s0 + $0x10] sm:$0xff]
  %v236 = vld [vmem:[%s0 + $0x18] sm:$0xff]
  %v237 = vld [vmem:[%s0 + $0x20] sm:$0xff]
  %v238 = vld [vmem:[%s0 + $0x28] sm:$0xff]
  %v239 = vld [vmem:[%s0 + $0x30] sm:$0xff]
  %v240 = vld [vmem:[%s0 + $0x38] sm:$0xff]
  %v241 = vld [vmem:[%s1] sm:$0xff]
  %v242 = vld [vmem:[#allocation2] sm:$0xff]
  %v243 = vld [vmem:[#allocation2 + $0x8] sm:$0xff]
  %v244 = vld [vmem:[#allocation2 + $0x10] sm:$0xff]
  %v245 = vld [vmem:[#allocation2 + $0x18] sm:$0xff]
  %v247 = vsel %vm179, %v233, 0
  %v250 = vsel %vm179, %v234, 0
  %v253 = vsel %vm179, %v235, 0
  %v256 = vsel %vm179, %v236, 0
  %v259 = vsel %vm179, %v237, 0
  %v262 = vsel %vm179, %v238, 0
  %v265 = vsel %vm179, %v239, 0
  %v268 = vsel %vm179, %v240, 0
  %270 = vmatpush.msra.mxu0 0.0
  %271 = vmatpush.msra.mxu0 0.0
  %272 = vmatpush.msra.mxu0 0.0
  %273 = vmatpush.msra.mxu0 0.0
  %274 = vmatpush.msra.mxu0 0.0
  %275 = vmatpush.msra.mxu0 0.0
  %276 = vmatpush.msra.mxu0 0.0
  %277 = vmatpush.msra.mxu0 0.0
  %278 = vmatpush.msra.mxu0 0.0
  %279 = vmatpush.msra.mxu0 0.0
  %280 = vmatpush.msra.mxu0 0.0
  %281 = vmatpush.msra.mxu0 0.0
  %282 = vmatpush.msra.mxu0 %v245
  %283 = vmatpush.msra.mxu0 %v244
  %284 = vmatpush.msra.mxu0 %v243
  %285 = vmatpush.msra.mxu0 %v242
  %286 = vmatmul.f32.gmra.mxu0 %v247
  %v287 = vpop.f32.mrf.mxu0
  %v288 = vadd.f32 0.0, %v287
  %289 = vmatmul.f32.gmra.mxu0 %v250
  %v290 = vpop.f32.mrf.mxu0
  %v291 = vadd.f32 0.0, %v290
  %292 = vmatmul.f32.gmra.mxu0 %v253
  %v293 = vpop.f32.mrf.mxu0
  %v294 = vadd.f32 0.0, %v293
  %295 = vmatmul.f32.gmra.mxu0 %v256
  %v296 = vpop.f32.mrf.mxu0
  %v297 = vadd.f32 0.0, %v296
  %298 = vmatmul.f32.gmra.mxu0 %v259
  %v299 = vpop.f32.mrf.mxu0
  %v300 = vadd.f32 0.0, %v299
  %301 = vmatmul.f32.gmra.mxu0 %v262
  %v302 = vpop.f32.mrf.mxu0
  %v303 = vadd.f32 0.0, %v302
  %304 = vmatmul.f32.gmra.mxu0 %v265
  %v305 = vpop.f32.mrf.mxu0
  %v306 = vadd.f32 0.0, %v305
  %307 = vmatmul.f32.gmra.mxu0 %v268
  %v308 = vpop.f32.mrf.mxu0
  %v309 = vadd.f32 0.0, %v308
  %310 = vdwg.mxu0
  %311 = vst.msk [vmem:[#allocation3] sm:$0xff] %vm179, %v288
  %312 = vst.msk [vmem:[#allocation3 + $0x8] sm:$0xff] %vm179, %v291
  %313 = vst.msk [vmem:[#allocation3 + $0x10] sm:$0xff] %vm179, %v294
  %314 = vst.msk [vmem:[#allocation3 + $0x18] sm:$0xff] %vm179, %v297
  %315 = vst.msk [vmem:[#allocation3 + $0x20] sm:$0xff] %vm179, %v300
  %316 = vst.msk [vmem:[#allocation3 + $0x28] sm:$0xff] %vm179, %v303
  %317 = vst.msk [vmem:[#allocation3 + $0x30] sm:$0xff] %vm179, %v306
  %318 = vst.msk [vmem:[#allocation3 + $0x38] sm:$0xff] %vm179, %v309
  %v319 = vld [vmem:[#allocation3] sm:$0xff]
  %v320 = vld [vmem:[#allocation3 + $0x8] sm:$0xff]
  %v321 = vld [vmem:[#allocation3 + $0x10] sm:$0xff]
  %v322 = vld [vmem:[#allocation3 + $0x18] sm:$0xff]
  %v323 = vld [vmem:[#allocation3 + $0x20] sm:$0xff]
  %v324 = vld [vmem:[#allocation3 + $0x28] sm:$0xff]
  %v325 = vld [vmem:[#allocation3 + $0x30] sm:$0xff]
  %v326 = vld [vmem:[#allocation3 + $0x38] sm:$0xff]
  %v327 = vld [vmem:[%s8] sm:$0xff]
  %v328 = vld [vmem:[%s8 + $0x8] sm:$0xff]
  %v329 = vld [vmem:[%s8 + $0x10] sm:$0xff]
  %v330 = vld [vmem:[%s8 + $0x18] sm:$0xff]
  %v331 = vld [vmem:[%s8 + $0x20] sm:$0xff]
  %v332 = vld [vmem:[%s8 + $0x28] sm:$0x3f]
  %v333 = vld [vmem:[%s9] sm:$0x1]
  %v335 = vperm.slane %v333, 0
  %vm337 = vcmask 375808
  %v339 = vsel %vm337, %v319, 0
  %v342 = vsel %vm337, %v320, 0
  %v345 = vsel %vm337, %v321, 0
  %v348 = vsel %vm337, %v322, 0
  %v351 = vsel %vm337, %v323, 0
  %v354 = vsel %vm337, %v324, 0
  %v357 = vsel %vm337, %v325, 0
  %v360 = vsel %vm337, %v326, 0
  %vm362 = vcmask 1045504
  %v364 = vsel %vm362, %v332, 0
  %366 = vmatpush.msra.mxu0 0.0
  %367 = vmatpush.msra.mxu0 0.0
  %368 = vmatpush.msra.mxu0 0.0
  %369 = vmatpush.msra.mxu0 0.0
  %370 = vmatpush.msra.mxu0 0.0
  %371 = vmatpush.msra.mxu0 0.0
  %372 = vmatpush.msra.mxu0 0.0
  %373 = vmatpush.msra.mxu0 0.0
  %374 = vmatpush.msra.mxu0 0.0
  %375 = vmatpush.msra.mxu0 0.0
  %376 = vmatpush.msra.mxu0 %v364
  %377 = vmatpush.msra.mxu0 %v331
  %378 = vmatpush.msra.mxu0 %v330
  %379 = vmatpush.msra.mxu0 %v329
  %380 = vmatpush.msra.mxu0 %v328
  %381 = vmatpush.msra.mxu0 %v327
  %382 = vmatmul.f32.gmra.mxu0 %v339
  %v383 = vpop.f32.mrf.mxu0
  %v384 = vadd.f32 %v335, %v383
  %385 = vmatmul.f32.gmra.mxu0 %v342
  %v386 = vpop.f32.mrf.mxu0
  %v387 = vadd.f32 %v335, %v386
  %388 = vmatmul.f32.gmra.mxu0 %v345
  %v389 = vpop.f32.mrf.mxu0
  %v390 = vadd.f32 %v335, %v389
  %391 = vmatmul.f32.gmra.mxu0 %v348
  %v392 = vpop.f32.mrf.mxu0
  %v393 = vadd.f32 %v335, %v392
  %394 = vmatmul.f32.gmra.mxu0 %v351
  %v395 = vpop.f32.mrf.mxu0
  %v396 = vadd.f32 %v335, %v395
  %397 = vmatmul.f32.gmra.mxu0 %v354
  %v398 = vpop.f32.mrf.mxu0
  %v399 = vadd.f32 %v335, %v398
  %400 = vmatmul.f32.gmra.mxu0 %v357
  %v401 = vpop.f32.mrf.mxu0
  %v402 = vadd.f32 %v335, %v401
  %403 = vmatmul.f32.gmra.mxu0 %v360
  %v404 = vpop.f32.mrf.mxu0
  %v405 = vadd.f32 %v335, %v404
  %406 = vdwg.mxu0
  %v407 = vmax.f32 %v384, 0.0
  %v408 = vmax.f32 %v387, 0.0
  %v409 = vmax.f32 %v390, 0.0
  %v410 = vmax.f32 %v393, 0.0
  %v411 = vmax.f32 %v396, 0.0
  %v412 = vmax.f32 %v399, 0.0
  %v413 = vmax.f32 %v402, 0.0
  %v414 = vmax.f32 %v405, 0.0
  %v415 = vld [vmem:[%s10] sm:$0xff]
  %v416 = vld [vmem:[%s10 + $0x8] sm:$0xff]
  %v417 = vld [vmem:[%s10 + $0x10] sm:$0xff]
  %v418 = vld [vmem:[%s10 + $0x18] sm:$0xff]
  %v419 = vld [vmem:[%s10 + $0x20] sm:$0xff]
  %v420 = vld [vmem:[%s10 + $0x28] sm:$0xff]
  %v421 = vld [vmem:[%s10 + $0x30] sm:$0xff]
  %v422 = vld [vmem:[%s10 + $0x38] sm:$0xff]
  %v423 = vld [vmem:[%s11] sm:$0x1]
  %v425 = vperm.slane %v423, 0
  %v428 = vsel %vm137, %v407, 0
  %v431 = vsel %vm137, %v408, 0
  %v434 = vsel %vm137, %v409, 0
  %v437 = vsel %vm137, %v410, 0
  %v440 = vsel %vm137, %v411, 0
  %v443 = vsel %vm137, %v412, 0
  %v446 = vsel %vm137, %v413, 0
  %v449 = vsel %vm137, %v414, 0
  %451 = vmatpush.msra.mxu0 0.0
  %452 = vmatpush.msra.mxu0 0.0
  %453 = vmatpush.msra.mxu0 0.0
  %454 = vmatpush.msra.mxu0 0.0
  %455 = vmatpush.msra.mxu0 0.0
  %456 = vmatpush.msra.mxu0 0.0
  %457 = vmatpush.msra.mxu0 0.0
  %458 = vmatpush.msra.mxu0 0.0
  %459 = vmatpush.msra.mxu0 %v422
  %460 = vmatpush.msra.mxu0 %v421
  %461 = vmatpush.msra.mxu0 %v420
  %462 = vmatpush.msra.mxu0 %v419
  %463 = vmatpush.msra.mxu0 %v418
  %464 = vmatpush.msra.mxu0 %v417
  %465 = vmatpush.msra.mxu0 %v416
  %466 = vmatpush.msra.mxu0 %v415
  %467 = vmatmul.f32.gmra.mxu0 %v428
  %v468 = vpop.f32.mrf.mxu0
  %v469 = vadd.f32 %v425, %v468
  %470 = vmatmul.f32.gmra.mxu0 %v431
  %v471 = vpop.f32.mrf.mxu0
  %v472 = vadd.f32 %v425, %v471
  %473 = vmatmul.f32.gmra.mxu0 %v434
  %v474 = vpop.f32.mrf.mxu0
  %v475 = vadd.f32 %v425, %v474
  %476 = vmatmul.f32.gmra.mxu0 %v437
  %v477 = vpop.f32.mrf.mxu0
  %v478 = vadd.f32 %v425, %v477
  %479 = vmatmul.f32.gmra.mxu0 %v440
  %v480 = vpop.f32.mrf.mxu0
  %v481 = vadd.f32 %v425, %v480
  %482 = vmatmul.f32.gmra.mxu0 %v443
  %v483 = vpop.f32.mrf.mxu0
  %v484 = vadd.f32 %v425, %v483
  %485 = vmatmul.f32.gmra.mxu0 %v446
  %v486 = vpop.f32.mrf.mxu0
  %v487 = vadd.f32 %v425, %v486
  %488 = vmatmul.f32.gmra.mxu0 %v449
  %v489 = vpop.f32.mrf.mxu0
  %v490 = vadd.f32 %v425, %v489
  %491 = vdwg.mxu0
  %vm492 = vcmp.eq.s32.totalorder %v241, 0
  %v493 = vsel %vm492, 1, 0
  %v494 = vrot.slane %v493, 1
  %v495 = vrot.slane %v493, 2
  %v496 = vrot.slane %v493, 3
  %v497 = vrot.slane %v493, 4
  %v498 = vrot.slane %v493, 5
  %v499 = vrot.slane %v493, 6
  %v500 = vrot.slane %v493, 7
  %vm501 = vcmp.ne.s32.totalorder %v494, 0
  %vm502 = vcmp.ne.s32.totalorder %v495, 0
  %vm503 = vcmp.ne.s32.totalorder %v496, 0
  %vm504 = vcmp.ne.s32.totalorder %v497, 0
  %vm505 = vcmp.ne.s32.totalorder %v498, 0
  %vm506 = vcmp.ne.s32.totalorder %v499, 0
  %vm507 = vcmp.ne.s32.totalorder %v500, 0
  %v508 = vsel %vm501, 1, 0
  %v509 = vsel %vm502, 1, 0
  %v510 = vsel %vm503, 1, 0
  %v511 = vsel %vm504, 1, 0
  %v512 = vsel %vm505, 1, 0
  %v513 = vsel %vm506, 1, 0
  %v514 = vsel %vm507, 1, 0
  %v515 = vperm.slane %v493, 0
  %v516 = vperm.slane %v508, 0
  %v517 = vperm.slane %v509, 0
  %v518 = vperm.slane %v510, 0
  %v519 = vperm.slane %v511, 0
  %v520 = vperm.slane %v512, 0
  %v521 = vperm.slane %v513, 0
  %v522 = vperm.slane %v514, 0
  %523 = vset.pattern.permute.xlu0 0
  %524 = vperm.xlu0 %523, %v515
  %v525 = vpop.permute.xlu0 %524
  %526 = vset.pattern.permute.xlu0 0
  %527 = vperm.xlu0 %526, %v516
  %v528 = vpop.permute.xlu0 %527
  %529 = vset.pattern.permute.xlu0 0
  %530 = vperm.xlu0 %529, %v517
  %v531 = vpop.permute.xlu0 %530
  %532 = vset.pattern.permute.xlu0 0
  %533 = vperm.xlu0 %532, %v518
  %v534 = vpop.permute.xlu0 %533
  %535 = vset.pattern.permute.xlu0 0
  %536 = vperm.xlu0 %535, %v519
  %v537 = vpop.permute.xlu0 %536
  %538 = vset.pattern.permute.xlu0 0
  %539 = vperm.xlu0 %538, %v520
  %v540 = vpop.permute.xlu0 %539
  %541 = vset.pattern.permute.xlu0 0
  %542 = vperm.xlu0 %541, %v521
  %v543 = vpop.permute.xlu0 %542
  %544 = vset.pattern.permute.xlu0 0
  %545 = vperm.xlu0 %544, %v522
  %v546 = vpop.permute.xlu0 %545
  %vm547 = vcmp.eq.s32.totalorder %v525, 1
  %vm548 = vcmp.eq.s32.totalorder %v528, 1
  %vm549 = vcmp.eq.s32.totalorder %v531, 1
  %vm550 = vcmp.eq.s32.totalorder %v534, 1
  %vm551 = vcmp.eq.s32.totalorder %v537, 1
  %vm552 = vcmp.eq.s32.totalorder %v540, 1
  %vm553 = vcmp.eq.s32.totalorder %v543, 1
  %vm554 = vcmp.eq.s32.totalorder %v546, 1
  %v555 = vsel %vm547, %v469, -1e+30
  %v556 = vsel %vm548, %v472, -1e+30
  %v557 = vsel %vm549, %v475, -1e+30
  %v558 = vsel %vm550, %v478, -1e+30
  %v559 = vsel %vm551, %v481, -1e+30
  %v560 = vsel %vm552, %v484, -1e+30
  %v561 = vsel %vm553, %v487, -1e+30
  %v562 = vsel %vm554, %v490, -1e+30
  %v563 = vsel %vm179, %v555, -inf
  %v564 = vsel %vm179, %v556, -inf
  %v565 = vsel %vm179, %v557, -inf
  %v566 = vsel %vm179, %v558, -inf
  %v567 = vsel %vm179, %v559, -inf
  %v568 = vmax.f32 %v563, %v567
  %v569 = vsel %vm179, %v560, -inf
  %v570 = vmax.f32 %v564, %v569
  %v571 = vsel %vm179, %v561, -inf
  %v572 = vmax.f32 %v565, %v571
  %v573 = vsel %vm179, %v562, -inf
  %v574 = vmax.f32 %v566, %v573
  %v575 = vmax.f32 %v568, %v570
  %v576 = vmax.f32 %v572, %v574
  %v577 = vmax.f32 %v575, %v576
  %vm578 = vcmp.le.f32.partialorder %v577, -1e+29
  %v579 = vsel %vm578, 0.0, %v577
  %580 = vst.msk [vmem:[#allocation4] sm:$0xff] %vm179, %v579
  %vm581 = vcmp.eq.s32.totalorder %v241, 1
  %v582 = vsel %vm581, 1, 0
  %v583 = vrot.slane %v582, 1
  %v584 = vrot.slane %v582, 2
  %v585 = vrot.slane %v582, 3
  %v586 = vrot.slane %v582, 4
  %v587 = vrot.slane %v582, 5
  %v588 = vrot.slane %v582, 6
  %v589 = vrot.slane %v582, 7
  %vm590 = vcmp.ne.s32.totalorder %v583, 0
  %vm591 = vcmp.ne.s32.totalorder %v584, 0
  %vm592 = vcmp.ne.s32.totalorder %v585, 0
  %vm593 = vcmp.ne.s32.totalorder %v586, 0
  %vm594 = vcmp.ne.s32.totalorder %v587, 0
  %vm595 = vcmp.ne.s32.totalorder %v588, 0
  %vm596 = vcmp.ne.s32.totalorder %v589, 0
  %v597 = vsel %vm590, 1, 0
  %v598 = vsel %vm591, 1, 0
  %v599 = vsel %vm592, 1, 0
  %v600 = vsel %vm593, 1, 0
  %v601 = vsel %vm594, 1, 0
  %v602 = vsel %vm595, 1, 0
  %v603 = vsel %vm596, 1, 0
  %v604 = vperm.slane %v582, 0
  %v605 = vperm.slane %v597, 0
  %v606 = vperm.slane %v598, 0
  %v607 = vperm.slane %v599, 0
  %v608 = vperm.slane %v600, 0
  %v609 = vperm.slane %v601, 0
  %v610 = vperm.slane %v602, 0
  %v611 = vperm.slane %v603, 0
  %612 = vset.pattern.permute.xlu0 0
  %613 = vperm.xlu0 %612, %v604
  %v614 = vpop.permute.xlu0 %613
  %615 = vset.pattern.permute.xlu0 0
  %616 = vperm.xlu0 %615, %v605
  %v617 = vpop.permute.xlu0 %616
  %618 = vset.pattern.permute.xlu0 0
  %619 = vperm.xlu0 %618, %v606
  %v620 = vpop.permute.xlu0 %619
  %621 = vset.pattern.permute.xlu0 0
  %622 = vperm.xlu0 %621, %v607
  %v623 = vpop.permute.xlu0 %622
  %624 = vset.pattern.permute.xlu0 0
  %625 = vperm.xlu0 %624, %v608
  %v626 = vpop.permute.xlu0 %625
  %627 = vset.pattern.permute.xlu0 0
  %628 = vperm.xlu0 %627, %v609
  %v629 = vpop.permute.xlu0 %628
  %630 = vset.pattern.permute.xlu0 0
  %631 = vperm.xlu0 %630, %v610
  %v632 = vpop.permute.xlu0 %631
  %633 = vset.pattern.permute.xlu0 0
  %634 = vperm.xlu0 %633, %v611
  %v635 = vpop.permute.xlu0 %634
  %vm636 = vcmp.eq.s32.totalorder %v614, 1
  %vm637 = vcmp.eq.s32.totalorder %v617, 1
  %vm638 = vcmp.eq.s32.totalorder %v620, 1
  %vm639 = vcmp.eq.s32.totalorder %v623, 1
  %vm640 = vcmp.eq.s32.totalorder %v626, 1
  %vm641 = vcmp.eq.s32.totalorder %v629, 1
  %vm642 = vcmp.eq.s32.totalorder %v632, 1
  %vm643 = vcmp.eq.s32.totalorder %v635, 1
  %v644 = vsel %vm636, %v469, -1e+30
  %v645 = vsel %vm637, %v472, -1e+30
  %v646 = vsel %vm638, %v475, -1e+30
  %v647 = vsel %vm639, %v478, -1e+30
  %v648 = vsel %vm640, %v481, -1e+30
  %v649 = vsel %vm641, %v484, -1e+30
  %v650 = vsel %vm642, %v487, -1e+30
  %v651 = vsel %vm643, %v490, -1e+30
  %v652 = vsel %vm179, %v644, -inf
  %v653 = vsel %vm179, %v645, -inf
  %v654 = vsel %vm179, %v646, -inf
  %v655 = vsel %vm179, %v647, -inf
  %v656 = vsel %vm179, %v648, -inf
  %v657 = vmax.f32 %v652, %v656
  %v658 = vsel %vm179, %v649, -inf
  %v659 = vmax.f32 %v653, %v658
  %v660 = vsel %vm179, %v650, -inf
  %v661 = vmax.f32 %v654, %v660
  %v662 = vsel %vm179, %v651, -inf
  %v663 = vmax.f32 %v655, %v662
  %v664 = vmax.f32 %v657, %v659
  %v665 = vmax.f32 %v661, %v663
  %v666 = vmax.f32 %v664, %v665
  %vm667 = vcmp.le.f32.partialorder %v666, -1e+29
  %v668 = vsel %vm667, 0.0, %v666
  %669 = vst.msk [vmem:[#allocation4 + $0x8] sm:$0xff] %vm179, %v668
  %vm670 = vcmp.eq.s32.totalorder %v241, 2
  %v671 = vsel %vm670, 1, 0
  %v672 = vrot.slane %v671, 1
  %v673 = vrot.slane %v671, 2
  %v674 = vrot.slane %v671, 3
  %v675 = vrot.slane %v671, 4
  %v676 = vrot.slane %v671, 5
  %v677 = vrot.slane %v671, 6
  %v678 = vrot.slane %v671, 7
  %vm679 = vcmp.ne.s32.totalorder %v672, 0
  %vm680 = vcmp.ne.s32.totalorder %v673, 0
  %vm681 = vcmp.ne.s32.totalorder %v674, 0
  %vm682 = vcmp.ne.s32.totalorder %v675, 0
  %vm683 = vcmp.ne.s32.totalorder %v676, 0
  %vm684 = vcmp.ne.s32.totalorder %v677, 0
  %vm685 = vcmp.ne.s32.totalorder %v678, 0
  %v686 = vsel %vm679, 1, 0
  %v687 = vsel %vm680, 1, 0
  %v688 = vsel %vm681, 1, 0
  %v689 = vsel %vm682, 1, 0
  %v690 = vsel %vm683, 1, 0
  %v691 = vsel %vm684, 1, 0
  %v692 = vsel %vm685, 1, 0
  %v693 = vperm.slane %v671, 0
  %v694 = vperm.slane %v686, 0
  %v695 = vperm.slane %v687, 0
  %v696 = vperm.slane %v688, 0
  %v697 = vperm.slane %v689, 0
  %v698 = vperm.slane %v690, 0
  %v699 = vperm.slane %v691, 0
  %v700 = vperm.slane %v692, 0
  %701 = vset.pattern.permute.xlu0 0
  %702 = vperm.xlu0 %701, %v693
  %v703 = vpop.permute.xlu0 %702
  %704 = vset.pattern.permute.xlu0 0
  %705 = vperm.xlu0 %704, %v694
  %v706 = vpop.permute.xlu0 %705
  %707 = vset.pattern.permute.xlu0 0
  %708 = vperm.xlu0 %707, %v695
  %v709 = vpop.permute.xlu0 %708
  %710 = vset.pattern.permute.xlu0 0
  %711 = vperm.xlu0 %710, %v696
  %v712 = vpop.permute.xlu0 %711
  %713 = vset.pattern.permute.xlu0 0
  %714 = vperm.xlu0 %713, %v697
  %v715 = vpop.permute.xlu0 %714
  %716 = vset.pattern.permute.xlu0 0
  %717 = vperm.xlu0 %716, %v698
  %v718 = vpop.permute.xlu0 %717
  %719 = vset.pattern.permute.xlu0 0
  %720 = vperm.xlu0 %719, %v699
  %v721 = vpop.permute.xlu0 %720
  %722 = vset.pattern.permute.xlu0 0
  %723 = vperm.xlu0 %722, %v700
  %v724 = vpop.permute.xlu0 %723
  %vm725 = vcmp.eq.s32.totalorder %v703, 1
  %vm726 = vcmp.eq.s32.totalorder %v706, 1
  %vm727 = vcmp.eq.s32.totalorder %v709, 1
  %vm728 = vcmp.eq.s32.totalorder %v712, 1
  %vm729 = vcmp.eq.s32.totalorder %v715, 1
  %vm730 = vcmp.eq.s32.totalorder %v718, 1
  %vm731 = vcmp.eq.s32.totalorder %v721, 1
  %vm732 = vcmp.eq.s32.totalorder %v724, 1
  %v733 = vsel %vm725, %v469, -1e+30
  %v734 = vsel %vm726, %v472, -1e+30
  %v735 = vsel %vm727, %v475, -1e+30
  %v736 = vsel %vm728, %v478, -1e+30
  %v737 = vsel %vm729, %v481, -1e+30
  %v738 = vsel %vm730, %v484, -1e+30
  %v739 = vsel %vm731, %v487, -1e+30
  %v740 = vsel %vm732, %v490, -1e+30
  %v741 = vsel %vm179, %v733, -inf
  %v742 = vsel %vm179, %v734, -inf
  %v743 = vsel %vm179, %v735, -inf
  %v744 = vsel %vm179, %v736, -inf
  %v745 = vsel %vm179, %v737, -inf
  %v746 = vmax.f32 %v741, %v745
  %v747 = vsel %vm179, %v738, -inf
  %v748 = vmax.f32 %v742, %v747
  %v749 = vsel %vm179, %v739, -inf
  %v750 = vmax.f32 %v743, %v749
  %v751 = vsel %vm179, %v740, -inf
  %v752 = vmax.f32 %v744, %v751
  %v753 = vmax.f32 %v746, %v748
  %v754 = vmax.f32 %v750, %v752
  %v755 = vmax.f32 %v753, %v754
  %vm756 = vcmp.le.f32.partialorder %v755, -1e+29
  %v757 = vsel %vm756, 0.0, %v755
  %758 = vst.msk [vmem:[#allocation4 + $0x10] sm:$0xff] %vm179, %v757
  %vm759 = vcmp.eq.s32.totalorder %v241, 3
  %v760 = vsel %vm759, 1, 0
  %v761 = vrot.slane %v760, 1
  %v762 = vrot.slane %v760, 2
  %v763 = vrot.slane %v760, 3
  %v764 = vrot.slane %v760, 4
  %v765 = vrot.slane %v760, 5
  %v766 = vrot.slane %v760, 6
  %v767 = vrot.slane %v760, 7
  %vm768 = vcmp.ne.s32.totalorder %v761, 0
  %vm769 = vcmp.ne.s32.totalorder %v762, 0
  %vm770 = vcmp.ne.s32.totalorder %v763, 0
  %vm771 = vcmp.ne.s32.totalorder %v764, 0
  %vm772 = vcmp.ne.s32.totalorder %v765, 0
  %vm773 = vcmp.ne.s32.totalorder %v766, 0
  %vm774 = vcmp.ne.s32.totalorder %v767, 0
  %v775 = vsel %vm768, 1, 0
  %v776 = vsel %vm769, 1, 0
  %v777 = vsel %vm770, 1, 0
  %v778 = vsel %vm771, 1, 0
  %v779 = vsel %vm772, 1, 0
  %v780 = vsel %vm773, 1, 0
  %v781 = vsel %vm774, 1, 0
  %v782 = vperm.slane %v760, 0
  %v783 = vperm.slane %v775, 0
  %v784 = vperm.slane %v776, 0
  %v785 = vperm.slane %v777, 0
  %v786 = vperm.slane %v778, 0
  %v787 = vperm.slane %v779, 0
  %v788 = vperm.slane %v780, 0
  %v789 = vperm.slane %v781, 0
  %790 = vset.pattern.permute.xlu0 0
  %791 = vperm.xlu0 %790, %v782
  %v792 = vpop.permute.xlu0 %791
  %793 = vset.pattern.permute.xlu0 0
  %794 = vperm.xlu0 %793, %v783
  %v795 = vpop.permute.xlu0 %794
  %796 = vset.pattern.permute.xlu0 0
  %797 = vperm.xlu0 %796, %v784
  %v798 = vpop.permute.xlu0 %797
  %799 = vset.pattern.permute.xlu0 0
  %800 = vperm.xlu0 %799, %v785
  %v801 = vpop.permute.xlu0 %800
  %802 = vset.pattern.permute.xlu0 0
  %803 = vperm.xlu0 %802, %v786
  %v804 = vpop.permute.xlu0 %803
  %805 = vset.pattern.permute.xlu0 0
  %806 = vperm.xlu0 %805, %v787
  %v807 = vpop.permute.xlu0 %806
  %808 = vset.pattern.permute.xlu0 0
  %809 = vperm.xlu0 %808, %v788
  %v810 = vpop.permute.xlu0 %809
  %811 = vset.pattern.permute.xlu0 0
  %812 = vperm.xlu0 %811, %v789
  %v813 = vpop.permute.xlu0 %812
  %vm814 = vcmp.eq.s32.totalorder %v792, 1
  %vm815 = vcmp.eq.s32.totalorder %v795, 1
  %vm816 = vcmp.eq.s32.totalorder %v798, 1
  %vm817 = vcmp.eq.s32.totalorder %v801, 1
  %vm818 = vcmp.eq.s32.totalorder %v804, 1
  %vm819 = vcmp.eq.s32.totalorder %v807, 1
  %vm820 = vcmp.eq.s32.totalorder %v810, 1
  %vm821 = vcmp.eq.s32.totalorder %v813, 1
  %v822 = vsel %vm814, %v469, -1e+30
  %v823 = vsel %vm815, %v472, -1e+30
  %v824 = vsel %vm816, %v475, -1e+30
  %v825 = vsel %vm817, %v478, -1e+30
  %v826 = vsel %vm818, %v481, -1e+30
  %v827 = vsel %vm819, %v484, -1e+30
  %v828 = vsel %vm820, %v487, -1e+30
  %v829 = vsel %vm821, %v490, -1e+30
  %v830 = vsel %vm179, %v822, -inf
  %v831 = vsel %vm179, %v823, -inf
  %v832 = vsel %vm179, %v824, -inf
  %v833 = vsel %vm179, %v825, -inf
  %v834 = vsel %vm179, %v826, -inf
  %v835 = vmax.f32 %v830, %v834
  %v836 = vsel %vm179, %v827, -inf
  %v837 = vmax.f32 %v831, %v836
  %v838 = vsel %vm179, %v828, -inf
  %v839 = vmax.f32 %v832, %v838
  %v840 = vsel %vm179, %v829, -inf
  %v841 = vmax.f32 %v833, %v840
  %v842 = vmax.f32 %v835, %v837
  %v843 = vmax.f32 %v839, %v841
  %v844 = vmax.f32 %v842, %v843
  %vm845 = vcmp.le.f32.partialorder %v844, -1e+29
  %v846 = vsel %vm845, 0.0, %v844
  %847 = vst.msk [vmem:[#allocation4 + $0x18] sm:$0xff] %vm179, %v846
  %v848 = vld [vmem:[#allocation2] sm:$0xff]
  %v849 = vld [vmem:[#allocation2 + $0x8] sm:$0xff]
  %v850 = vld [vmem:[#allocation2 + $0x10] sm:$0xff]
  %v851 = vld [vmem:[#allocation2 + $0x18] sm:$0xff]
  %856 = vrot.lane.b32.xlu0 %v848, 32
  %v857 = vpop.permute.xlu0 %856
  %858 = vrot.lane.b32.xlu0 %v849, 32
  %v859 = vpop.permute.xlu0 %858
  %860 = vrot.lane.b32.xlu0 %v850, 32
  %v861 = vpop.permute.xlu0 %860
  %862 = vrot.lane.b32.xlu0 %v851, 32
  %v863 = vpop.permute.xlu0 %862
  %vm868 = vcmask 523520
  %869 = vst.msk [vmem:[#allocation4] sm:$0xff] %vm868, %v857
  %870 = vst.msk [vmem:[#allocation4 + $0x8] sm:$0xff] %vm868, %v859
  %871 = vst.msk [vmem:[#allocation4 + $0x10] sm:$0xff] %vm868, %v861
  %872 = vst.msk [vmem:[#allocation4 + $0x18] sm:$0xff] %vm868, %v863
  %v873 = vld [vmem:[#allocation4] sm:$0xff]
  %v874 = vld [vmem:[#allocation4 + $0x8] sm:$0xff]
  %v875 = vld [vmem:[#allocation4 + $0x10] sm:$0xff]
  %v876 = vld [vmem:[#allocation4 + $0x18] sm:$0xff]
  %v877 = vld [vmem:[%s12] sm:$0xff]
  %v878 = vld [vmem:[%s12 + $0x8] sm:$0xff]
  %v879 = vld [vmem:[%s12 + $0x10] sm:$0xff]
  %v880 = vld [vmem:[%s12 + $0x18] sm:$0xff]
  %v881 = vld [vmem:[%s12 + $0x20] sm:$0xff]
  %v882 = vld [vmem:[%s12 + $0x28] sm:$0xff]
  %v883 = vld [vmem:[%s12 + $0x30] sm:$0xff]
  %v884 = vld [vmem:[%s12 + $0x38] sm:$0xff]
  %v885 = vld [vmem:[%s13] sm:$0x1]
  %v887 = vperm.slane %v885, 0
  %v890 = vsel %vm137, %v873, 0
  %v893 = vsel %vm137, %v874, 0
  %v896 = vsel %vm137, %v875, 0
  %v899 = vsel %vm137, %v876, 0
  %901 = vmatpush.msra.mxu0 0.0
  %902 = vmatpush.msra.mxu0 0.0
  %903 = vmatpush.msra.mxu0 0.0
  %904 = vmatpush.msra.mxu0 0.0
  %905 = vmatpush.msra.mxu0 0.0
  %906 = vmatpush.msra.mxu0 0.0
  %907 = vmatpush.msra.mxu0 0.0
  %908 = vmatpush.msra.mxu0 0.0
  %909 = vmatpush.msra.mxu0 %v884
  %910 = vmatpush.msra.mxu0 %v883
  %911 = vmatpush.msra.mxu0 %v882
  %912 = vmatpush.msra.mxu0 %v881
  %913 = vmatpush.msra.mxu0 %v880
  %914 = vmatpush.msra.mxu0 %v879
  %915 = vmatpush.msra.mxu0 %v878
  %916 = vmatpush.msra.mxu0 %v877
  %917 = vmatmul.f32.gmra.mxu0 %v890
  %v918 = vpop.f32.mrf.mxu0
  %v919 = vadd.f32 %v887, %v918
  %920 = vmatmul.f32.gmra.mxu0 %v893
  %v921 = vpop.f32.mrf.mxu0
  %v922 = vadd.f32 %v887, %v921
  %923 = vmatmul.f32.gmra.mxu0 %v896
  %v924 = vpop.f32.mrf.mxu0
  %v925 = vadd.f32 %v887, %v924
  %926 = vmatmul.f32.gmra.mxu0 %v899
  %v927 = vpop.f32.mrf.mxu0
  %v928 = vadd.f32 %v887, %v927
  %929 = vdwg.mxu0
  %v930 = vmax.f32 %v919, 0.0
  %v931 = vmax.f32 %v922, 0.0
  %v932 = vmax.f32 %v925, 0.0
  %v933 = vmax.f32 %v928, 0.0
  %v934 = vld [vmem:[%s14] sm:$0xff]
  %v935 = vld [vmem:[%s14 + $0x8] sm:$0xff]
  %v936 = vld [vmem:[%s14 + $0x10] sm:$0xff]
  %v937 = vld [vmem:[%s14 + $0x18] sm:$0xff]
  %v938 = vld [vmem:[%s14 + $0x20] sm:$0xff]
  %v939 = vld [vmem:[%s14 + $0x28] sm:$0xff]
  %v940 = vld [vmem:[%s14 + $0x30] sm:$0xff]
  %v941 = vld [vmem:[%s14 + $0x38] sm:$0xff]
  %v942 = vld [vmem:[%s15] sm:$0x1]
  %v944 = vperm.slane %v942, 0
  %v947 = vsel %vm137, %v930, 0
  %v950 = vsel %vm137, %v931, 0
  %v953 = vsel %vm137, %v932, 0
  %v956 = vsel %vm137, %v933, 0
  %958 = vmatpush.msra.mxu0 0.0
  %959 = vmatpush.msra.mxu0 0.0
  %960 = vmatpush.msra.mxu0 0.0
  %961 = vmatpush.msra.mxu0 0.0
  %962 = vmatpush.msra.mxu0 0.0
  %963 = vmatpush.msra.mxu0 0.0
  %964 = vmatpush.msra.mxu0 0.0
  %965 = vmatpush.msra.mxu0 0.0
  %966 = vmatpush.msra.mxu0 %v941
  %967 = vmatpush.msra.mxu0 %v940
  %968 = vmatpush.msra.mxu0 %v939
  %969 = vmatpush.msra.mxu0 %v938
  %970 = vmatpush.msra.mxu0 %v937
  %971 = vmatpush.msra.mxu0 %v936
  %972 = vmatpush.msra.mxu0 %v935
  %973 = vmatpush.msra.mxu0 %v934
  %974 = vmatmul.f32.gmra.mxu0 %v947
  %v975 = vpop.f32.mrf.mxu0
  %v976 = vadd.f32 %v944, %v975
  %977 = vmatmul.f32.gmra.mxu0 %v950
  %v978 = vpop.f32.mrf.mxu0
  %v979 = vadd.f32 %v944, %v978
  %980 = vmatmul.f32.gmra.mxu0 %v953
  %v981 = vpop.f32.mrf.mxu0
  %v982 = vadd.f32 %v944, %v981
  %983 = vmatmul.f32.gmra.mxu0 %v956
  %v984 = vpop.f32.mrf.mxu0
  %v985 = vadd.f32 %v944, %v984
  %986 = vdwg.mxu0
  %987 = vst.msk [vmem:[#allocation2] sm:$0xff] %vm179, %v976
  %988 = vst.msk [vmem:[#allocation2 + $0x8] sm:$0xff] %vm179, %v979
  %989 = vst.msk [vmem:[#allocation2 + $0x10] sm:$0xff] %vm179, %v982
  %990 = vst.msk [vmem:[#allocation2 + $0x18] sm:$0xff] %vm179, %v985
  %v991 = vld [vmem:[#allocation2] sm:$0xff]
  %v992 = vld [vmem:[#allocation2 + $0x8] sm:$0xff]
  %v993 = vld [vmem:[#allocation2 + $0x10] sm:$0xff]
  %v994 = vld [vmem:[#allocation2 + $0x18] sm:$0xff]
  %995 = vmatpush.msra.mxu0 0.0
  %996 = vmatpush.msra.mxu0 0.0
  %997 = vmatpush.msra.mxu0 0.0
  %998 = vmatpush.msra.mxu0 0.0
  %999 = vmatpush.msra.mxu0 0.0
  %1000 = vmatpush.msra.mxu0 0.0
  %1001 = vmatpush.msra.mxu0 0.0
  %1002 = vmatpush.msra.mxu0 0.0
  %1003 = vmatpush.msra.mxu0 0.0
  %1004 = vmatpush.msra.mxu0 0.0
  %1005 = vmatpush.msra.mxu0 0.0
  %1006 = vmatpush.msra.mxu0 0.0
  %1007 = vmatpush.msra.mxu0 %v994
  %1008 = vmatpush.msra.mxu0 %v993
  %1009 = vmatpush.msra.mxu0 %v992
  %1010 = vmatpush.msra.mxu0 %v991
  %1011 = vmatmul.f32.gmra.mxu0 %v247
  %v1012 = vpop.f32.mrf.mxu0
  %v1013 = vadd.f32 0.0, %v1012
  %1014 = vmatmul.f32.gmra.mxu0 %v250
  %v1015 = vpop.f32.mrf.mxu0
  %v1016 = vadd.f32 0.0, %v1015
  %1017 = vmatmul.f32.gmra.mxu0 %v253
  %v1018 = vpop.f32.mrf.mxu0
  %v1019 = vadd.f32 0.0, %v1018
  %1020 = vmatmul.f32.gmra.mxu0 %v256
  %v1021 = vpop.f32.mrf.mxu0
  %v1022 = vadd.f32 0.0, %v1021
  %1023 = vmatmul.f32.gmra.mxu0 %v259
  %v1024 = vpop.f32.mrf.mxu0
  %v1025 = vadd.f32 0.0, %v1024
  %1026 = vmatmul.f32.gmra.mxu0 %v262
  %v1027 = vpop.f32.mrf.mxu0
  %v1028 = vadd.f32 0.0, %v1027
  %1029 = vmatmul.f32.gmra.mxu0 %v265
  %v1030 = vpop.f32.mrf.mxu0
  %v1031 = vadd.f32 0.0, %v1030
  %1032 = vmatmul.f32.gmra.mxu0 %v268
  %v1033 = vpop.f32.mrf.mxu0
  %v1034 = vadd.f32 0.0, %v1033
  %1035 = vdwg.mxu0
  %1036 = vst.msk [vmem:[#allocation3] sm:$0xff] %vm179, %v1013
  %1037 = vst.msk [vmem:[#allocation3 + $0x8] sm:$0xff] %vm179, %v1016
  %1038 = vst.msk [vmem:[#allocation3 + $0x10] sm:$0xff] %vm179, %v1019
  %1039 = vst.msk [vmem:[#allocation3 + $0x18] sm:$0xff] %vm179, %v1022
  %1040 = vst.msk [vmem:[#allocation3 + $0x20] sm:$0xff] %vm179, %v1025
  %1041 = vst.msk [vmem:[#allocation3 + $0x28] sm:$0xff] %vm179, %v1028
  %1042 = vst.msk [vmem:[#allocation3 + $0x30] sm:$0xff] %vm179, %v1031
  %1043 = vst.msk [vmem:[#allocation3 + $0x38] sm:$0xff] %vm179, %v1034
  %v1044 = vld [vmem:[#allocation3] sm:$0xff]
  %v1045 = vld [vmem:[#allocation3 + $0x8] sm:$0xff]
  %v1046 = vld [vmem:[#allocation3 + $0x10] sm:$0xff]
  %v1047 = vld [vmem:[#allocation3 + $0x18] sm:$0xff]
  %v1048 = vld [vmem:[#allocation3 + $0x20] sm:$0xff]
  %v1049 = vld [vmem:[#allocation3 + $0x28] sm:$0xff]
  %v1050 = vld [vmem:[#allocation3 + $0x30] sm:$0xff]
  %v1051 = vld [vmem:[#allocation3 + $0x38] sm:$0xff]
  %v1052 = vld [vmem:[%s8] sm:$0xff]
  %v1053 = vld [vmem:[%s8 + $0x8] sm:$0xff]
  %v1054 = vld [vmem:[%s8 + $0x10] sm:$0xff]
  %v1055 = vld [vmem:[%s8 + $0x18] sm:$0xff]
  %v1056 = vld [vmem:[%s8 + $0x20] sm:$0xff]
  %v1057 = vld [vmem:[%s8 + $0x28] sm:$0x3f]
  %v1058 = vld [vmem:[%s9] sm:$0x1]
  %v1060 = vperm.slane %v1058, 0
  %v1063 = vsel %vm337, %v1044, 0
  %v1066 = vsel %vm337, %v1045, 0
  %v1069 = vsel %vm337, %v1046, 0
  %v1072 = vsel %vm337, %v1047, 0
  %v1075 = vsel %vm337, %v1048, 0
  %v1078 = vsel %vm337, %v1049, 0
  %v1081 = vsel %vm337, %v1050, 0
  %v1084 = vsel %vm337, %v1051, 0
  %v1087 = vsel %vm362, %v1057, 0
  %1089 = vmatpush.msra.mxu0 0.0
  %1090 = vmatpush.msra.mxu0 0.0
  %1091 = vmatpush.msra.mxu0 0.0
  %1092 = vmatpush.msra.mxu0 0.0
  %1093 = vmatpush.msra.mxu0 0.0
  %1094 = vmatpush.msra.mxu0 0.0
  %1095 = vmatpush.msra.mxu0 0.0
  %1096 = vmatpush.msra.mxu0 0.0
  %1097 = vmatpush.msra.mxu0 0.0
  %1098 = vmatpush.msra.mxu0 0.0
  %1099 = vmatpush.msra.mxu0 %v1087
  %1100 = vmatpush.msra.mxu0 %v1056
  %1101 = vmatpush.msra.mxu0 %v1055
  %1102 = vmatpush.msra.mxu0 %v1054
  %1103 = vmatpush.msra.mxu0 %v1053
  %1104 = vmatpush.msra.mxu0 %v1052
  %1105 = vmatmul.f32.gmra.mxu0 %v1063
  %v1106 = vpop.f32.mrf.mxu0
  %v1107 = vadd.f32 %v1060, %v1106
  %1108 = vmatmul.f32.gmra.mxu0 %v1066
  %v1109 = vpop.f32.mrf.mxu0
  %v1110 = vadd.f32 %v1060, %v1109
  %1111 = vmatmul.f32.gmra.mxu0 %v1069
  %v1112 = vpop.f32.mrf.mxu0
  %v1113 = vadd.f32 %v1060, %v1112
  %1114 = vmatmul.f32.gmra.mxu0 %v1072
  %v1115 = vpop.f32.mrf.mxu0
  %v1116 = vadd.f32 %v1060, %v1115
  %1117 = vmatmul.f32.gmra.mxu0 %v1075
  %v1118 = vpop.f32.mrf.mxu0
  %v1119 = vadd.f32 %v1060, %v1118
  %1120 = vmatmul.f32.gmra.mxu0 %v1078
  %v1121 = vpop.f32.mrf.mxu0
  %v1122 = vadd.f32 %v1060, %v1121
  %1123 = vmatmul.f32.gmra.mxu0 %v1081
  %v1124 = vpop.f32.mrf.mxu0
  %v1125 = vadd.f32 %v1060, %v1124
  %1126 = vmatmul.f32.gmra.mxu0 %v1084
  %v1127 = vpop.f32.mrf.mxu0
  %v1128 = vadd.f32 %v1060, %v1127
  %1129 = vdwg.mxu0
  %v1130 = vmax.f32 %v1107, 0.0
  %v1131 = vmax.f32 %v1110, 0.0
  %v1132 = vmax.f32 %v1113, 0.0
  %v1133 = vmax.f32 %v1116, 0.0
  %v1134 = vmax.f32 %v1119, 0.0
  %v1135 = vmax.f32 %v1122, 0.0
  %v1136 = vmax.f32 %v1125, 0.0
  %v1137 = vmax.f32 %v1128, 0.0
  %v1138 = vld [vmem:[%s10] sm:$0xff]
  %v1139 = vld [vmem:[%s10 + $0x8] sm:$0xff]
  %v1140 = vld [vmem:[%s10 + $0x10] sm:$0xff]
  %v1141 = vld [vmem:[%s10 + $0x18] sm:$0xff]
  %v1142 = vld [vmem:[%s10 + $0x20] sm:$0xff]
  %v1143 = vld [vmem:[%s10 + $0x28] sm:$0xff]
  %v1144 = vld [vmem:[%s10 + $0x30] sm:$0xff]
  %v1145 = vld [vmem:[%s10 + $0x38] sm:$0xff]
  %v1146 = vld [vmem:[%s11] sm:$0x1]
  %v1148 = vperm.slane %v1146, 0
  %v1151 = vsel %vm137, %v1130, 0
  %v1154 = vsel %vm137, %v1131, 0
  %v1157 = vsel %vm137, %v1132, 0
  %v1160 = vsel %vm137, %v1133, 0
  %v1163 = vsel %vm137, %v1134, 0
  %v1166 = vsel %vm137, %v1135, 0
  %v1169 = vsel %vm137, %v1136, 0
  %v1172 = vsel %vm137, %v1137, 0
  %1174 = vmatpush.msra.mxu0 0.0
  %1175 = vmatpush.msra.mxu0 0.0
  %1176 = vmatpush.msra.mxu0 0.0
  %1177 = vmatpush.msra.mxu0 0.0
  %1178 = vmatpush.msra.mxu0 0.0
  %1179 = vmatpush.msra.mxu0 0.0
  %1180 = vmatpush.msra.mxu0 0.0
  %1181 = vmatpush.msra.mxu0 0.0
  %1182 = vmatpush.msra.mxu0 %v1145
  %1183 = vmatpush.msra.mxu0 %v1144
  %1184 = vmatpush.msra.mxu0 %v1143
  %1185 = vmatpush.msra.mxu0 %v1142
  %1186 = vmatpush.msra.mxu0 %v1141
  %1187 = vmatpush.msra.mxu0 %v1140
  %1188 = vmatpush.msra.mxu0 %v1139
  %1189 = vmatpush.msra.mxu0 %v1138
  %1190 = vmatmul.f32.gmra.mxu0 %v1151
  %v1191 = vpop.f32.mrf.mxu0
  %v1192 = vadd.f32 %v1148, %v1191
  %1193 = vmatmul.f32.gmra.mxu0 %v1154
  %v1194 = vpop.f32.mrf.mxu0
  %v1195 = vadd.f32 %v1148, %v1194
  %1196 = vmatmul.f32.gmra.mxu0 %v1157
  %v1197 = vpop.f32.mrf.mxu0
  %v1198 = vadd.f32 %v1148, %v1197
  %1199 = vmatmul.f32.gmra.mxu0 %v1160
  %v1200 = vpop.f32.mrf.mxu0
  %v1201 = vadd.f32 %v1148, %v1200
  %1202 = vmatmul.f32.gmra.mxu0 %v1163
  %v1203 = vpop.f32.mrf.mxu0
  %v1204 = vadd.f32 %v1148, %v1203
  %1205 = vmatmul.f32.gmra.mxu0 %v1166
  %v1206 = vpop.f32.mrf.mxu0
  %v1207 = vadd.f32 %v1148, %v1206
  %1208 = vmatmul.f32.gmra.mxu0 %v1169
  %v1209 = vpop.f32.mrf.mxu0
  %v1210 = vadd.f32 %v1148, %v1209
  %1211 = vmatmul.f32.gmra.mxu0 %v1172
  %v1212 = vpop.f32.mrf.mxu0
  %v1213 = vadd.f32 %v1148, %v1212
  %1214 = vdwg.mxu0
  %v1215 = vsel %vm547, %v1192, -1e+30
  %v1216 = vsel %vm548, %v1195, -1e+30
  %v1217 = vsel %vm549, %v1198, -1e+30
  %v1218 = vsel %vm550, %v1201, -1e+30
  %v1219 = vsel %vm551, %v1204, -1e+30
  %v1220 = vsel %vm552, %v1207, -1e+30
  %v1221 = vsel %vm553, %v1210, -1e+30
  %v1222 = vsel %vm554, %v1213, -1e+30
  %v1223 = vsel %vm179, %v1215, -inf
  %v1224 = vsel %vm179, %v1216, -inf
  %v1225 = vsel %vm179, %v1217, -inf
  %v1226 = vsel %vm179, %v1218, -inf
  %v1227 = vsel %vm179, %v1219, -inf
  %v1228 = vmax.f32 %v1223, %v1227
  %v1229 = vsel %vm179, %v1220, -inf
  %v1230 = vmax.f32 %v1224, %v1229
  %v1231 = vsel %vm179, %v1221, -inf
  %v1232 = vmax.f32 %v1225, %v1231
  %v1233 = vsel %vm179, %v1222, -inf
  %v1234 = vmax.f32 %v1226, %v1233
  %v1235 = vmax.f32 %v1228, %v1230
  %v1236 = vmax.f32 %v1232, %v1234
  %v1237 = vmax.f32 %v1235, %v1236
  %vm1238 = vcmp.le.f32.partialorder %v1237, -1e+29
  %v1239 = vsel %vm1238, 0.0, %v1237
  %1240 = vst.msk [vmem:[#allocation4] sm:$0xff] %vm179, %v1239
  %v1241 = vsel %vm636, %v1192, -1e+30
  %v1242 = vsel %vm637, %v1195, -1e+30
  %v1243 = vsel %vm638, %v1198, -1e+30
  %v1244 = vsel %vm639, %v1201, -1e+30
  %v1245 = vsel %vm640, %v1204, -1e+30
  %v1246 = vsel %vm641, %v1207, -1e+30
  %v1247 = vsel %vm642, %v1210, -1e+30
  %v1248 = vsel %vm643, %v1213, -1e+30
  %v1249 = vsel %vm179, %v1241, -inf
  %v1250 = vsel %vm179, %v1242, -inf
  %v1251 = vsel %vm179, %v1243, -inf
  %v1252 = vsel %vm179, %v1244, -inf
  %v1253 = vsel %vm179, %v1245, -inf
  %v1254 = vmax.f32 %v1249, %v1253
  %v1255 = vsel %vm179, %v1246, -inf
  %v1256 = vmax.f32 %v1250, %v1255
  %v1257 = vsel %vm179, %v1247, -inf
  %v1258 = vmax.f32 %v1251, %v1257
  %v1259 = vsel %vm179, %v1248, -inf
  %v1260 = vmax.f32 %v1252, %v1259
  %v1261 = vmax.f32 %v1254, %v1256
  %v1262 = vmax.f32 %v1258, %v1260
  %v1263 = vmax.f32 %v1261, %v1262
  %vm1264 = vcmp.le.f32.partialorder %v1263, -1e+29
  %v1265 = vsel %vm1264, 0.0, %v1263
  %1266 = vst.msk [vmem:[#allocation4 + $0x8] sm:$0xff] %vm179, %v1265
  %v1267 = vsel %vm725, %v1192, -1e+30
  %v1268 = vsel %vm726, %v1195, -1e+30
  %v1269 = vsel %vm727, %v1198, -1e+30
  %v1270 = vsel %vm728, %v1201, -1e+30
  %v1271 = vsel %vm729, %v1204, -1e+30
  %v1272 = vsel %vm730, %v1207, -1e+30
  %v1273 = vsel %vm731, %v1210, -1e+30
  %v1274 = vsel %vm732, %v1213, -1e+30
  %v1275 = vsel %vm179, %v1267, -inf
  %v1276 = vsel %vm179, %v1268, -inf
  %v1277 = vsel %vm179, %v1269, -inf
  %v1278 = vsel %vm179, %v1270, -inf
  %v1279 = vsel %vm179, %v1271, -inf
  %v1280 = vmax.f32 %v1275, %v1279
  %v1281 = vsel %vm179, %v1272, -inf
  %v1282 = vmax.f32 %v1276, %v1281
  %v1283 = vsel %vm179, %v1273, -inf
  %v1284 = vmax.f32 %v1277, %v1283
  %v1285 = vsel %vm179, %v1274, -inf
  %v1286 = vmax.f32 %v1278, %v1285
  %v1287 = vmax.f32 %v1280, %v1282
  %v1288 = vmax.f32 %v1284, %v1286
  %v1289 = vmax.f32 %v1287, %v1288
  %vm1290 = vcmp.le.f32.partialorder %v1289, -1e+29
  %v1291 = vsel %vm1290, 0.0, %v1289
  %1292 = vst.msk [vmem:[#allocation4 + $0x10] sm:$0xff] %vm179, %v1291
  %v1293 = vsel %vm814, %v1192, -1e+30
  %v1294 = vsel %vm815, %v1195, -1e+30
  %v1295 = vsel %vm816, %v1198, -1e+30
  %v1296 = vsel %vm817, %v1201, -1e+30
  %v1297 = vsel %vm818, %v1204, -1e+30
  %v1298 = vsel %vm819, %v1207, -1e+30
  %v1299 = vsel %vm820, %v1210, -1e+30
  %v1300 = vsel %vm821, %v1213, -1e+30
  %v1301 = vsel %vm179, %v1293, -inf
  %v1302 = vsel %vm179, %v1294, -inf
  %v1303 = vsel %vm179, %v1295, -inf
  %v1304 = vsel %vm179, %v1296, -inf
  %v1305 = vsel %vm179, %v1297, -inf
  %v1306 = vmax.f32 %v1301, %v1305
  %v1307 = vsel %vm179, %v1298, -inf
  %v1308 = vmax.f32 %v1302, %v1307
  %v1309 = vsel %vm179, %v1299, -inf
  %v1310 = vmax.f32 %v1303, %v1309
  %v1311 = vsel %vm179, %v1300, -inf
  %v1312 = vmax.f32 %v1304, %v1311
  %v1313 = vmax.f32 %v1306, %v1308
  %v1314 = vmax.f32 %v1310, %v1312
  %v1315 = vmax.f32 %v1313, %v1314
  %vm1316 = vcmp.le.f32.partialorder %v1315, -1e+29
  %v1317 = vsel %vm1316, 0.0, %v1315
  %1318 = vst.msk [vmem:[#allocation4 + $0x18] sm:$0xff] %vm179, %v1317
  %v1319 = vld [vmem:[#allocation2] sm:$0xff]
  %v1320 = vld [vmem:[#allocation2 + $0x8] sm:$0xff]
  %v1321 = vld [vmem:[#allocation2 + $0x10] sm:$0xff]
  %v1322 = vld [vmem:[#allocation2 + $0x18] sm:$0xff]
  %1327 = vrot.lane.b32.xlu0 %v1319, 32
  %v1328 = vpop.permute.xlu0 %1327
  %1329 = vrot.lane.b32.xlu0 %v1320, 32
  %v1330 = vpop.permute.xlu0 %1329
  %1331 = vrot.lane.b32.xlu0 %v1321, 32
  %v1332 = vpop.permute.xlu0 %1331
  %1333 = vrot.lane.b32.xlu0 %v1322, 32
  %v1334 = vpop.permute.xlu0 %1333
  %1339 = vst.msk [vmem:[#allocation4] sm:$0xff] %vm868, %v1328
  %1340 = vst.msk [vmem:[#allocation4 + $0x8] sm:$0xff] %vm868, %v1330
  %1341 = vst.msk [vmem:[#allocation4 + $0x10] sm:$0xff] %vm868, %v1332
  %1342 = vst.msk [vmem:[#allocation4 + $0x18] sm:$0xff] %vm868, %v1334
  %v1343 = vld [vmem:[#allocation4] sm:$0xff]
  %v1344 = vld [vmem:[#allocation4 + $0x8] sm:$0xff]
  %v1345 = vld [vmem:[#allocation4 + $0x10] sm:$0xff]
  %v1346 = vld [vmem:[#allocation4 + $0x18] sm:$0xff]
  %v1347 = vld [vmem:[%s12] sm:$0xff]
  %v1348 = vld [vmem:[%s12 + $0x8] sm:$0xff]
  %v1349 = vld [vmem:[%s12 + $0x10] sm:$0xff]
  %v1350 = vld [vmem:[%s12 + $0x18] sm:$0xff]
  %v1351 = vld [vmem:[%s12 + $0x20] sm:$0xff]
  %v1352 = vld [vmem:[%s12 + $0x28] sm:$0xff]
  %v1353 = vld [vmem:[%s12 + $0x30] sm:$0xff]
  %v1354 = vld [vmem:[%s12 + $0x38] sm:$0xff]
  %v1355 = vld [vmem:[%s13] sm:$0x1]
  %v1357 = vperm.slane %v1355, 0
  %v1360 = vsel %vm137, %v1343, 0
  %v1363 = vsel %vm137, %v1344, 0
  %v1366 = vsel %vm137, %v1345, 0
  %v1369 = vsel %vm137, %v1346, 0
  %1371 = vmatpush.msra.mxu0 0.0
  %1372 = vmatpush.msra.mxu0 0.0
  %1373 = vmatpush.msra.mxu0 0.0
  %1374 = vmatpush.msra.mxu0 0.0
  %1375 = vmatpush.msra.mxu0 0.0
  %1376 = vmatpush.msra.mxu0 0.0
  %1377 = vmatpush.msra.mxu0 0.0
  %1378 = vmatpush.msra.mxu0 0.0
  %1379 = vmatpush.msra.mxu0 %v1354
  %1380 = vmatpush.msra.mxu0 %v1353
  %1381 = vmatpush.msra.mxu0 %v1352
  %1382 = vmatpush.msra.mxu0 %v1351
  %1383 = vmatpush.msra.mxu0 %v1350
  %1384 = vmatpush.msra.mxu0 %v1349
  %1385 = vmatpush.msra.mxu0 %v1348
  %1386 = vmatpush.msra.mxu0 %v1347
  %1387 = vmatmul.f32.gmra.mxu0 %v1360
  %v1388 = vpop.f32.mrf.mxu0
  %v1389 = vadd.f32 %v1357, %v1388
  %1390 = vmatmul.f32.gmra.mxu0 %v1363
  %v1391 = vpop.f32.mrf.mxu0
  %v1392 = vadd.f32 %v1357, %v1391
  %1393 = vmatmul.f32.gmra.mxu0 %v1366
  %v1394 = vpop.f32.mrf.mxu0
  %v1395 = vadd.f32 %v1357, %v1394
  %1396 = vmatmul.f32.gmra.mxu0 %v1369
  %v1397 = vpop.f32.mrf.mxu0
  %v1398 = vadd.f32 %v1357, %v1397
  %1399 = vdwg.mxu0
  %v1400 = vmax.f32 %v1389, 0.0
  %v1401 = vmax.f32 %v1392, 0.0
  %v1402 = vmax.f32 %v1395, 0.0
  %v1403 = vmax.f32 %v1398, 0.0
  %v1404 = vld [vmem:[%s14] sm:$0xff]
  %v1405 = vld [vmem:[%s14 + $0x8] sm:$0xff]
  %v1406 = vld [vmem:[%s14 + $0x10] sm:$0xff]
  %v1407 = vld [vmem:[%s14 + $0x18] sm:$0xff]
  %v1408 = vld [vmem:[%s14 + $0x20] sm:$0xff]
  %v1409 = vld [vmem:[%s14 + $0x28] sm:$0xff]
  %v1410 = vld [vmem:[%s14 + $0x30] sm:$0xff]
  %v1411 = vld [vmem:[%s14 + $0x38] sm:$0xff]
  %v1412 = vld [vmem:[%s15] sm:$0x1]
  %v1414 = vperm.slane %v1412, 0
  %v1417 = vsel %vm137, %v1400, 0
  %v1420 = vsel %vm137, %v1401, 0
  %v1423 = vsel %vm137, %v1402, 0
  %v1426 = vsel %vm137, %v1403, 0
  %1428 = vmatpush.msra.mxu0 0.0
  %1429 = vmatpush.msra.mxu0 0.0
  %1430 = vmatpush.msra.mxu0 0.0
  %1431 = vmatpush.msra.mxu0 0.0
  %1432 = vmatpush.msra.mxu0 0.0
  %1433 = vmatpush.msra.mxu0 0.0
  %1434 = vmatpush.msra.mxu0 0.0
  %1435 = vmatpush.msra.mxu0 0.0
  %1436 = vmatpush.msra.mxu0 %v1411
  %1437 = vmatpush.msra.mxu0 %v1410
  %1438 = vmatpush.msra.mxu0 %v1409
  %1439 = vmatpush.msra.mxu0 %v1408
  %1440 = vmatpush.msra.mxu0 %v1407
  %1441 = vmatpush.msra.mxu0 %v1406
  %1442 = vmatpush.msra.mxu0 %v1405
  %1443 = vmatpush.msra.mxu0 %v1404
  %1444 = vmatmul.f32.gmra.mxu0 %v1417
  %v1445 = vpop.f32.mrf.mxu0
  %v1446 = vadd.f32 %v1414, %v1445
  %1447 = vmatmul.f32.gmra.mxu0 %v1420
  %v1448 = vpop.f32.mrf.mxu0
  %v1449 = vadd.f32 %v1414, %v1448
  %1450 = vmatmul.f32.gmra.mxu0 %v1423
  %v1451 = vpop.f32.mrf.mxu0
  %v1452 = vadd.f32 %v1414, %v1451
  %1453 = vmatmul.f32.gmra.mxu0 %v1426
  %v1454 = vpop.f32.mrf.mxu0
  %v1455 = vadd.f32 %v1414, %v1454
  %1456 = vdwg.mxu0
  %1457 = vst.msk [vmem:[#allocation2] sm:$0xff] %vm179, %v1446
  %1458 = vst.msk [vmem:[#allocation2 + $0x8] sm:$0xff] %vm179, %v1449
  %1459 = vst.msk [vmem:[#allocation2 + $0x10] sm:$0xff] %vm179, %v1452
  %1460 = vst.msk [vmem:[#allocation2 + $0x18] sm:$0xff] %vm179, %v1455
  %v1461 = vld [vmem:[#allocation2] sm:$0xff]
  %v1462 = vld [vmem:[#allocation2 + $0x8] sm:$0xff]
  %v1463 = vld [vmem:[#allocation2 + $0x10] sm:$0xff]
  %v1464 = vld [vmem:[#allocation2 + $0x18] sm:$0xff]
  %1465 = vmatpush.msra.mxu0 0.0
  %1466 = vmatpush.msra.mxu0 0.0
  %1467 = vmatpush.msra.mxu0 0.0
  %1468 = vmatpush.msra.mxu0 0.0
  %1469 = vmatpush.msra.mxu0 0.0
  %1470 = vmatpush.msra.mxu0 0.0
  %1471 = vmatpush.msra.mxu0 0.0
  %1472 = vmatpush.msra.mxu0 0.0
  %1473 = vmatpush.msra.mxu0 0.0
  %1474 = vmatpush.msra.mxu0 0.0
  %1475 = vmatpush.msra.mxu0 0.0
  %1476 = vmatpush.msra.mxu0 0.0
  %1477 = vmatpush.msra.mxu0 %v1464
  %1478 = vmatpush.msra.mxu0 %v1463
  %1479 = vmatpush.msra.mxu0 %v1462
  %1480 = vmatpush.msra.mxu0 %v1461
  %1481 = vmatmul.f32.gmra.mxu0 %v247
  %v1482 = vpop.f32.mrf.mxu0
  %v1483 = vadd.f32 0.0, %v1482
  %1484 = vmatmul.f32.gmra.mxu0 %v250
  %v1485 = vpop.f32.mrf.mxu0
  %v1486 = vadd.f32 0.0, %v1485
  %1487 = vmatmul.f32.gmra.mxu0 %v253
  %v1488 = vpop.f32.mrf.mxu0
  %v1489 = vadd.f32 0.0, %v1488
  %1490 = vmatmul.f32.gmra.mxu0 %v256
  %v1491 = vpop.f32.mrf.mxu0
  %v1492 = vadd.f32 0.0, %v1491
  %1493 = vmatmul.f32.gmra.mxu0 %v259
  %v1494 = vpop.f32.mrf.mxu0
  %v1495 = vadd.f32 0.0, %v1494
  %1496 = vmatmul.f32.gmra.mxu0 %v262
  %v1497 = vpop.f32.mrf.mxu0
  %v1498 = vadd.f32 0.0, %v1497
  %1499 = vmatmul.f32.gmra.mxu0 %v265
  %v1500 = vpop.f32.mrf.mxu0
  %v1501 = vadd.f32 0.0, %v1500
  %1502 = vmatmul.f32.gmra.mxu0 %v268
  %v1503 = vpop.f32.mrf.mxu0
  %v1504 = vadd.f32 0.0, %v1503
  %1505 = vdwg.mxu0
  %1506 = vst.msk [vmem:[#allocation3] sm:$0xff] %vm179, %v1483
  %1507 = vst.msk [vmem:[#allocation3 + $0x8] sm:$0xff] %vm179, %v1486
  %1508 = vst.msk [vmem:[#allocation3 + $0x10] sm:$0xff] %vm179, %v1489
  %1509 = vst.msk [vmem:[#allocation3 + $0x18] sm:$0xff] %vm179, %v1492
  %1510 = vst.msk [vmem:[#allocation3 + $0x20] sm:$0xff] %vm179, %v1495
  %1511 = vst.msk [vmem:[#allocation3 + $0x28] sm:$0xff] %vm179, %v1498
  %1512 = vst.msk [vmem:[#allocation3 + $0x30] sm:$0xff] %vm179, %v1501
  %1513 = vst.msk [vmem:[#allocation3 + $0x38] sm:$0xff] %vm179, %v1504
  %v1514 = vld [vmem:[#allocation3] sm:$0xff]
  %v1515 = vld [vmem:[#allocation3 + $0x8] sm:$0xff]
  %v1516 = vld [vmem:[#allocation3 + $0x10] sm:$0xff]
  %v1517 = vld [vmem:[#allocation3 + $0x18] sm:$0xff]
  %v1518 = vld [vmem:[#allocation3 + $0x20] sm:$0xff]
  %v1519 = vld [vmem:[#allocation3 + $0x28] sm:$0xff]
  %v1520 = vld [vmem:[#allocation3 + $0x30] sm:$0xff]
  %v1521 = vld [vmem:[#allocation3 + $0x38] sm:$0xff]
  %v1522 = vld [vmem:[%s8] sm:$0xff]
  %v1523 = vld [vmem:[%s8 + $0x8] sm:$0xff]
  %v1524 = vld [vmem:[%s8 + $0x10] sm:$0xff]
  %v1525 = vld [vmem:[%s8 + $0x18] sm:$0xff]
  %v1526 = vld [vmem:[%s8 + $0x20] sm:$0xff]
  %v1527 = vld [vmem:[%s8 + $0x28] sm:$0x3f]
  %v1528 = vld [vmem:[%s9] sm:$0x1]
  %v1530 = vperm.slane %v1528, 0
  %v1533 = vsel %vm337, %v1514, 0
  %v1536 = vsel %vm337, %v1515, 0
  %v1539 = vsel %vm337, %v1516, 0
  %v1542 = vsel %vm337, %v1517, 0
  %v1545 = vsel %vm337, %v1518, 0
  %v1548 = vsel %vm337, %v1519, 0
  %v1551 = vsel %vm337, %v1520, 0
  %v1554 = vsel %vm337, %v1521, 0
  %v1557 = vsel %vm362, %v1527, 0
  %1559 = vmatpush.msra.mxu0 0.0
  %1560 = vmatpush.msra.mxu0 0.0
  %1561 = vmatpush.msra.mxu0 0.0
  %1562 = vmatpush.msra.mxu0 0.0
  %1563 = vmatpush.msra.mxu0 0.0
  %1564 = vmatpush.msra.mxu0 0.0
  %1565 = vmatpush.msra.mxu0 0.0
  %1566 = vmatpush.msra.mxu0 0.0
  %1567 = vmatpush.msra.mxu0 0.0
  %1568 = vmatpush.msra.mxu0 0.0
  %1569 = vmatpush.msra.mxu0 %v1557
  %1570 = vmatpush.msra.mxu0 %v1526
  %1571 = vmatpush.msra.mxu0 %v1525
  %1572 = vmatpush.msra.mxu0 %v1524
  %1573 = vmatpush.msra.mxu0 %v1523
  %1574 = vmatpush.msra.mxu0 %v1522
  %1575 = vmatmul.f32.gmra.mxu0 %v1533
  %v1576 = vpop.f32.mrf.mxu0
  %v1577 = vadd.f32 %v1530, %v1576
  %1578 = vmatmul.f32.gmra.mxu0 %v1536
  %v1579 = vpop.f32.mrf.mxu0
  %v1580 = vadd.f32 %v1530, %v1579
  %1581 = vmatmul.f32.gmra.mxu0 %v1539
  %v1582 = vpop.f32.mrf.mxu0
  %v1583 = vadd.f32 %v1530, %v1582
  %1584 = vmatmul.f32.gmra.mxu0 %v1542
  %v1585 = vpop.f32.mrf.mxu0
  %v1586 = vadd.f32 %v1530, %v1585
  %1587 = vmatmul.f32.gmra.mxu0 %v1545
  %v1588 = vpop.f32.mrf.mxu0
  %v1589 = vadd.f32 %v1530, %v1588
  %1590 = vmatmul.f32.gmra.mxu0 %v1548
  %v1591 = vpop.f32.mrf.mxu0
  %v1592 = vadd.f32 %v1530, %v1591
  %1593 = vmatmul.f32.gmra.mxu0 %v1551
  %v1594 = vpop.f32.mrf.mxu0
  %v1595 = vadd.f32 %v1530, %v1594
  %1596 = vmatmul.f32.gmra.mxu0 %v1554
  %v1597 = vpop.f32.mrf.mxu0
  %v1598 = vadd.f32 %v1530, %v1597
  %1599 = vdwg.mxu0
  %v1600 = vmax.f32 %v1577, 0.0
  %v1601 = vmax.f32 %v1580, 0.0
  %v1602 = vmax.f32 %v1583, 0.0
  %v1603 = vmax.f32 %v1586, 0.0
  %v1604 = vmax.f32 %v1589, 0.0
  %v1605 = vmax.f32 %v1592, 0.0
  %v1606 = vmax.f32 %v1595, 0.0
  %v1607 = vmax.f32 %v1598, 0.0
  %v1608 = vld [vmem:[%s10] sm:$0xff]
  %v1609 = vld [vmem:[%s10 + $0x8] sm:$0xff]
  %v1610 = vld [vmem:[%s10 + $0x10] sm:$0xff]
  %v1611 = vld [vmem:[%s10 + $0x18] sm:$0xff]
  %v1612 = vld [vmem:[%s10 + $0x20] sm:$0xff]
  %v1613 = vld [vmem:[%s10 + $0x28] sm:$0xff]
  %v1614 = vld [vmem:[%s10 + $0x30] sm:$0xff]
  %v1615 = vld [vmem:[%s10 + $0x38] sm:$0xff]
  %v1616 = vld [vmem:[%s11] sm:$0x1]
  %v1618 = vperm.slane %v1616, 0
  %v1621 = vsel %vm137, %v1600, 0
  %v1624 = vsel %vm137, %v1601, 0
  %v1627 = vsel %vm137, %v1602, 0
  %v1630 = vsel %vm137, %v1603, 0
  %v1633 = vsel %vm137, %v1604, 0
  %v1636 = vsel %vm137, %v1605, 0
  %v1639 = vsel %vm137, %v1606, 0
  %v1642 = vsel %vm137, %v1607, 0
  %1644 = vmatpush.msra.mxu0 0.0
  %1645 = vmatpush.msra.mxu0 0.0
  %1646 = vmatpush.msra.mxu0 0.0
  %1647 = vmatpush.msra.mxu0 0.0
  %1648 = vmatpush.msra.mxu0 0.0
  %1649 = vmatpush.msra.mxu0 0.0
  %1650 = vmatpush.msra.mxu0 0.0
  %1651 = vmatpush.msra.mxu0 0.0
  %1652 = vmatpush.msra.mxu0 %v1615
  %1653 = vmatpush.msra.mxu0 %v1614
  %1654 = vmatpush.msra.mxu0 %v1613
  %1655 = vmatpush.msra.mxu0 %v1612
  %1656 = vmatpush.msra.mxu0 %v1611
  %1657 = vmatpush.msra.mxu0 %v1610
  %1658 = vmatpush.msra.mxu0 %v1609
  %1659 = vmatpush.msra.mxu0 %v1608
  %1660 = vmatmul.f32.gmra.mxu0 %v1621
  %v1661 = vpop.f32.mrf.mxu0
  %v1662 = vadd.f32 %v1618, %v1661
  %1663 = vmatmul.f32.gmra.mxu0 %v1624
  %v1664 = vpop.f32.mrf.mxu0
  %v1665 = vadd.f32 %v1618, %v1664
  %1666 = vmatmul.f32.gmra.mxu0 %v1627
  %v1667 = vpop.f32.mrf.mxu0
  %v1668 = vadd.f32 %v1618, %v1667
  %1669 = vmatmul.f32.gmra.mxu0 %v1630
  %v1670 = vpop.f32.mrf.mxu0
  %v1671 = vadd.f32 %v1618, %v1670
  %1672 = vmatmul.f32.gmra.mxu0 %v1633
  %v1673 = vpop.f32.mrf.mxu0
  %v1674 = vadd.f32 %v1618, %v1673
  %1675 = vmatmul.f32.gmra.mxu0 %v1636
  %v1676 = vpop.f32.mrf.mxu0
  %v1677 = vadd.f32 %v1618, %v1676
  %1678 = vmatmul.f32.gmra.mxu0 %v1639
  %v1679 = vpop.f32.mrf.mxu0
  %v1680 = vadd.f32 %v1618, %v1679
  %1681 = vmatmul.f32.gmra.mxu0 %v1642
  %v1682 = vpop.f32.mrf.mxu0
  %v1683 = vadd.f32 %v1618, %v1682
  %1684 = vdwg.mxu0
  %v1685 = vsel %vm547, %v1662, -1e+30
  %v1686 = vsel %vm548, %v1665, -1e+30
  %v1687 = vsel %vm549, %v1668, -1e+30
  %v1688 = vsel %vm550, %v1671, -1e+30
  %v1689 = vsel %vm551, %v1674, -1e+30
  %v1690 = vsel %vm552, %v1677, -1e+30
  %v1691 = vsel %vm553, %v1680, -1e+30
  %v1692 = vsel %vm554, %v1683, -1e+30
  %v1693 = vsel %vm179, %v1685, -inf
  %v1694 = vsel %vm179, %v1686, -inf
  %v1695 = vsel %vm179, %v1687, -inf
  %v1696 = vsel %vm179, %v1688, -inf
  %v1697 = vsel %vm179, %v1689, -inf
  %v1698 = vmax.f32 %v1693, %v1697
  %v1699 = vsel %vm179, %v1690, -inf
  %v1700 = vmax.f32 %v1694, %v1699
  %v1701 = vsel %vm179, %v1691, -inf
  %v1702 = vmax.f32 %v1695, %v1701
  %v1703 = vsel %vm179, %v1692, -inf
  %v1704 = vmax.f32 %v1696, %v1703
  %v1705 = vmax.f32 %v1698, %v1700
  %v1706 = vmax.f32 %v1702, %v1704
  %v1707 = vmax.f32 %v1705, %v1706
  %vm1708 = vcmp.le.f32.partialorder %v1707, -1e+29
  %v1709 = vsel %vm1708, 0.0, %v1707
  %1710 = vst.msk [vmem:[#allocation4] sm:$0xff] %vm179, %v1709
  %v1711 = vsel %vm636, %v1662, -1e+30
  %v1712 = vsel %vm637, %v1665, -1e+30
  %v1713 = vsel %vm638, %v1668, -1e+30
  %v1714 = vsel %vm639, %v1671, -1e+30
  %v1715 = vsel %vm640, %v1674, -1e+30
  %v1716 = vsel %vm641, %v1677, -1e+30
  %v1717 = vsel %vm642, %v1680, -1e+30
  %v1718 = vsel %vm643, %v1683, -1e+30
  %v1719 = vsel %vm179, %v1711, -inf
  %v1720 = vsel %vm179, %v1712, -inf
  %v1721 = vsel %vm179, %v1713, -inf
  %v1722 = vsel %vm179, %v1714, -inf
  %v1723 = vsel %vm179, %v1715, -inf
  %v1724 = vmax.f32 %v1719, %v1723
  %v1725 = vsel %vm179, %v1716, -inf
  %v1726 = vmax.f32 %v1720, %v1725
  %v1727 = vsel %vm179, %v1717, -inf
  %v1728 = vmax.f32 %v1721, %v1727
  %v1729 = vsel %vm179, %v1718, -inf
  %v1730 = vmax.f32 %v1722, %v1729
  %v1731 = vmax.f32 %v1724, %v1726
  %v1732 = vmax.f32 %v1728, %v1730
  %v1733 = vmax.f32 %v1731, %v1732
  %vm1734 = vcmp.le.f32.partialorder %v1733, -1e+29
  %v1735 = vsel %vm1734, 0.0, %v1733
  %1736 = vst.msk [vmem:[#allocation4 + $0x8] sm:$0xff] %vm179, %v1735
  %v1737 = vsel %vm725, %v1662, -1e+30
  %v1738 = vsel %vm726, %v1665, -1e+30
  %v1739 = vsel %vm727, %v1668, -1e+30
  %v1740 = vsel %vm728, %v1671, -1e+30
  %v1741 = vsel %vm729, %v1674, -1e+30
  %v1742 = vsel %vm730, %v1677, -1e+30
  %v1743 = vsel %vm731, %v1680, -1e+30
  %v1744 = vsel %vm732, %v1683, -1e+30
  %v1745 = vsel %vm179, %v1737, -inf
  %v1746 = vsel %vm179, %v1738, -inf
  %v1747 = vsel %vm179, %v1739, -inf
  %v1748 = vsel %vm179, %v1740, -inf
  %v1749 = vsel %vm179, %v1741, -inf
  %v1750 = vmax.f32 %v1745, %v1749
  %v1751 = vsel %vm179, %v1742, -inf
  %v1752 = vmax.f32 %v1746, %v1751
  %v1753 = vsel %vm179, %v1743, -inf
  %v1754 = vmax.f32 %v1747, %v1753
  %v1755 = vsel %vm179, %v1744, -inf
  %v1756 = vmax.f32 %v1748, %v1755
  %v1757 = vmax.f32 %v1750, %v1752
  %v1758 = vmax.f32 %v1754, %v1756
  %v1759 = vmax.f32 %v1757, %v1758
  %vm1760 = vcmp.le.f32.partialorder %v1759, -1e+29
  %v1761 = vsel %vm1760, 0.0, %v1759
  %1762 = vst.msk [vmem:[#allocation4 + $0x10] sm:$0xff] %vm179, %v1761
  %v1763 = vsel %vm814, %v1662, -1e+30
  %v1764 = vsel %vm815, %v1665, -1e+30
  %v1765 = vsel %vm816, %v1668, -1e+30
  %v1766 = vsel %vm817, %v1671, -1e+30
  %v1767 = vsel %vm818, %v1674, -1e+30
  %v1768 = vsel %vm819, %v1677, -1e+30
  %v1769 = vsel %vm820, %v1680, -1e+30
  %v1770 = vsel %vm821, %v1683, -1e+30
  %v1771 = vsel %vm179, %v1763, -inf
  %v1772 = vsel %vm179, %v1764, -inf
  %v1773 = vsel %vm179, %v1765, -inf
  %v1774 = vsel %vm179, %v1766, -inf
  %v1775 = vsel %vm179, %v1767, -inf
  %v1776 = vmax.f32 %v1771, %v1775
  %v1777 = vsel %vm179, %v1768, -inf
  %v1778 = vmax.f32 %v1772, %v1777
  %v1779 = vsel %vm179, %v1769, -inf
  %v1780 = vmax.f32 %v1773, %v1779
  %v1781 = vsel %vm179, %v1770, -inf
  %v1782 = vmax.f32 %v1774, %v1781
  %v1783 = vmax.f32 %v1776, %v1778
  %v1784 = vmax.f32 %v1780, %v1782
  %v1785 = vmax.f32 %v1783, %v1784
  %vm1786 = vcmp.le.f32.partialorder %v1785, -1e+29
  %v1787 = vsel %vm1786, 0.0, %v1785
  %1788 = vst.msk [vmem:[#allocation4 + $0x18] sm:$0xff] %vm179, %v1787
  %v1789 = vld [vmem:[#allocation2] sm:$0xff]
  %v1790 = vld [vmem:[#allocation2 + $0x8] sm:$0xff]
  %v1791 = vld [vmem:[#allocation2 + $0x10] sm:$0xff]
  %v1792 = vld [vmem:[#allocation2 + $0x18] sm:$0xff]
  %1797 = vrot.lane.b32.xlu0 %v1789, 32
  %v1798 = vpop.permute.xlu0 %1797
  %1799 = vrot.lane.b32.xlu0 %v1790, 32
  %v1800 = vpop.permute.xlu0 %1799
  %1801 = vrot.lane.b32.xlu0 %v1791, 32
  %v1802 = vpop.permute.xlu0 %1801
  %1803 = vrot.lane.b32.xlu0 %v1792, 32
  %v1804 = vpop.permute.xlu0 %1803
  %1809 = vst.msk [vmem:[#allocation4] sm:$0xff] %vm868, %v1798
  %1810 = vst.msk [vmem:[#allocation4 + $0x8] sm:$0xff] %vm868, %v1800
  %1811 = vst.msk [vmem:[#allocation4 + $0x10] sm:$0xff] %vm868, %v1802
  %1812 = vst.msk [vmem:[#allocation4 + $0x18] sm:$0xff] %vm868, %v1804
  %v1813 = vld [vmem:[#allocation4] sm:$0xff]
  %v1814 = vld [vmem:[#allocation4 + $0x8] sm:$0xff]
  %v1815 = vld [vmem:[#allocation4 + $0x10] sm:$0xff]
  %v1816 = vld [vmem:[#allocation4 + $0x18] sm:$0xff]
  %v1817 = vld [vmem:[%s12] sm:$0xff]
  %v1818 = vld [vmem:[%s12 + $0x8] sm:$0xff]
  %v1819 = vld [vmem:[%s12 + $0x10] sm:$0xff]
  %v1820 = vld [vmem:[%s12 + $0x18] sm:$0xff]
  %v1821 = vld [vmem:[%s12 + $0x20] sm:$0xff]
  %v1822 = vld [vmem:[%s12 + $0x28] sm:$0xff]
  %v1823 = vld [vmem:[%s12 + $0x30] sm:$0xff]
  %v1824 = vld [vmem:[%s12 + $0x38] sm:$0xff]
  %v1825 = vld [vmem:[%s13] sm:$0x1]
  %v1827 = vperm.slane %v1825, 0
  %v1830 = vsel %vm137, %v1813, 0
  %v1833 = vsel %vm137, %v1814, 0
  %v1836 = vsel %vm137, %v1815, 0
  %v1839 = vsel %vm137, %v1816, 0
  %1841 = vmatpush.msra.mxu0 0.0
  %1842 = vmatpush.msra.mxu0 0.0
  %1843 = vmatpush.msra.mxu0 0.0
  %1844 = vmatpush.msra.mxu0 0.0
  %1845 = vmatpush.msra.mxu0 0.0
  %1846 = vmatpush.msra.mxu0 0.0
  %1847 = vmatpush.msra.mxu0 0.0
  %1848 = vmatpush.msra.mxu0 0.0
  %1849 = vmatpush.msra.mxu0 %v1824
  %1850 = vmatpush.msra.mxu0 %v1823
  %1851 = vmatpush.msra.mxu0 %v1822
  %1852 = vmatpush.msra.mxu0 %v1821
  %1853 = vmatpush.msra.mxu0 %v1820
  %1854 = vmatpush.msra.mxu0 %v1819
  %1855 = vmatpush.msra.mxu0 %v1818
  %1856 = vmatpush.msra.mxu0 %v1817
  %1857 = vmatmul.f32.gmra.mxu0 %v1830
  %v1858 = vpop.f32.mrf.mxu0
  %v1859 = vadd.f32 %v1827, %v1858
  %1860 = vmatmul.f32.gmra.mxu0 %v1833
  %v1861 = vpop.f32.mrf.mxu0
  %v1862 = vadd.f32 %v1827, %v1861
  %1863 = vmatmul.f32.gmra.mxu0 %v1836
  %v1864 = vpop.f32.mrf.mxu0
  %v1865 = vadd.f32 %v1827, %v1864
  %1866 = vmatmul.f32.gmra.mxu0 %v1839
  %v1867 = vpop.f32.mrf.mxu0
  %v1868 = vadd.f32 %v1827, %v1867
  %1869 = vdwg.mxu0
  %v1870 = vmax.f32 %v1859, 0.0
  %v1871 = vmax.f32 %v1862, 0.0
  %v1872 = vmax.f32 %v1865, 0.0
  %v1873 = vmax.f32 %v1868, 0.0
  %v1874 = vld [vmem:[%s14] sm:$0xff]
  %v1875 = vld [vmem:[%s14 + $0x8] sm:$0xff]
  %v1876 = vld [vmem:[%s14 + $0x10] sm:$0xff]
  %v1877 = vld [vmem:[%s14 + $0x18] sm:$0xff]
  %v1878 = vld [vmem:[%s14 + $0x20] sm:$0xff]
  %v1879 = vld [vmem:[%s14 + $0x28] sm:$0xff]
  %v1880 = vld [vmem:[%s14 + $0x30] sm:$0xff]
  %v1881 = vld [vmem:[%s14 + $0x38] sm:$0xff]
  %v1882 = vld [vmem:[%s15] sm:$0x1]
  %v1884 = vperm.slane %v1882, 0
  %v1887 = vsel %vm137, %v1870, 0
  %v1890 = vsel %vm137, %v1871, 0
  %v1893 = vsel %vm137, %v1872, 0
  %v1896 = vsel %vm137, %v1873, 0
  %1898 = vmatpush.msra.mxu0 0.0
  %1899 = vmatpush.msra.mxu0 0.0
  %1900 = vmatpush.msra.mxu0 0.0
  %1901 = vmatpush.msra.mxu0 0.0
  %1902 = vmatpush.msra.mxu0 0.0
  %1903 = vmatpush.msra.mxu0 0.0
  %1904 = vmatpush.msra.mxu0 0.0
  %1905 = vmatpush.msra.mxu0 0.0
  %1906 = vmatpush.msra.mxu0 %v1881
  %1907 = vmatpush.msra.mxu0 %v1880
  %1908 = vmatpush.msra.mxu0 %v1879
  %1909 = vmatpush.msra.mxu0 %v1878
  %1910 = vmatpush.msra.mxu0 %v1877
  %1911 = vmatpush.msra.mxu0 %v1876
  %1912 = vmatpush.msra.mxu0 %v1875
  %1913 = vmatpush.msra.mxu0 %v1874
  %1914 = vmatmul.f32.gmra.mxu0 %v1887
  %v1915 = vpop.f32.mrf.mxu0
  %v1916 = vadd.f32 %v1884, %v1915
  %1917 = vmatmul.f32.gmra.mxu0 %v1890
  %v1918 = vpop.f32.mrf.mxu0
  %v1919 = vadd.f32 %v1884, %v1918
  %1920 = vmatmul.f32.gmra.mxu0 %v1893
  %v1921 = vpop.f32.mrf.mxu0
  %v1922 = vadd.f32 %v1884, %v1921
  %1923 = vmatmul.f32.gmra.mxu0 %v1896
  %v1924 = vpop.f32.mrf.mxu0
  %v1925 = vadd.f32 %v1884, %v1924
  %1926 = vdwg.mxu0
  %1927 = vst.msk [vmem:[#allocation2] sm:$0xff] %vm179, %v1916
  %1928 = vst.msk [vmem:[#allocation2 + $0x8] sm:$0xff] %vm179, %v1919
  %1929 = vst.msk [vmem:[#allocation2 + $0x10] sm:$0xff] %vm179, %v1922
  %1930 = vst.msk [vmem:[#allocation2 + $0x18] sm:$0xff] %vm179, %v1925
  %v1931 = vld [vmem:[#allocation2] sm:$0xff]
  %v1932 = vld [vmem:[#allocation2 + $0x8] sm:$0xff]
  %v1933 = vld [vmem:[#allocation2 + $0x10] sm:$0xff]
  %v1934 = vld [vmem:[#allocation2 + $0x18] sm:$0xff]
  %1935 = vmatpush.msra.mxu0 0.0
  %1936 = vmatpush.msra.mxu0 0.0
  %1937 = vmatpush.msra.mxu0 0.0
  %1938 = vmatpush.msra.mxu0 0.0
  %1939 = vmatpush.msra.mxu0 0.0
  %1940 = vmatpush.msra.mxu0 0.0
  %1941 = vmatpush.msra.mxu0 0.0
  %1942 = vmatpush.msra.mxu0 0.0
  %1943 = vmatpush.msra.mxu0 0.0
  %1944 = vmatpush.msra.mxu0 0.0
  %1945 = vmatpush.msra.mxu0 0.0
  %1946 = vmatpush.msra.mxu0 0.0
  %1947 = vmatpush.msra.mxu0 %v1934
  %1948 = vmatpush.msra.mxu0 %v1933
  %1949 = vmatpush.msra.mxu0 %v1932
  %1950 = vmatpush.msra.mxu0 %v1931
  %1951 = vmatmul.f32.gmra.mxu0 %v247
  %v1952 = vpop.f32.mrf.mxu0
  %v1953 = vadd.f32 0.0, %v1952
  %1954 = vmatmul.f32.gmra.mxu0 %v250
  %v1955 = vpop.f32.mrf.mxu0
  %v1956 = vadd.f32 0.0, %v1955
  %1957 = vmatmul.f32.gmra.mxu0 %v253
  %v1958 = vpop.f32.mrf.mxu0
  %v1959 = vadd.f32 0.0, %v1958
  %1960 = vmatmul.f32.gmra.mxu0 %v256
  %v1961 = vpop.f32.mrf.mxu0
  %v1962 = vadd.f32 0.0, %v1961
  %1963 = vmatmul.f32.gmra.mxu0 %v259
  %v1964 = vpop.f32.mrf.mxu0
  %v1965 = vadd.f32 0.0, %v1964
  %1966 = vmatmul.f32.gmra.mxu0 %v262
  %v1967 = vpop.f32.mrf.mxu0
  %v1968 = vadd.f32 0.0, %v1967
  %1969 = vmatmul.f32.gmra.mxu0 %v265
  %v1970 = vpop.f32.mrf.mxu0
  %v1971 = vadd.f32 0.0, %v1970
  %1972 = vmatmul.f32.gmra.mxu0 %v268
  %v1973 = vpop.f32.mrf.mxu0
  %v1974 = vadd.f32 0.0, %v1973
  %1975 = vdwg.mxu0
  %1976 = vst.msk [vmem:[#allocation3] sm:$0xff] %vm179, %v1953
  %1977 = vst.msk [vmem:[#allocation3 + $0x8] sm:$0xff] %vm179, %v1956
  %1978 = vst.msk [vmem:[#allocation3 + $0x10] sm:$0xff] %vm179, %v1959
  %1979 = vst.msk [vmem:[#allocation3 + $0x18] sm:$0xff] %vm179, %v1962
  %1980 = vst.msk [vmem:[#allocation3 + $0x20] sm:$0xff] %vm179, %v1965
  %1981 = vst.msk [vmem:[#allocation3 + $0x28] sm:$0xff] %vm179, %v1968
  %1982 = vst.msk [vmem:[#allocation3 + $0x30] sm:$0xff] %vm179, %v1971
  %1983 = vst.msk [vmem:[#allocation3 + $0x38] sm:$0xff] %vm179, %v1974
  %v1984 = vld [vmem:[#allocation3] sm:$0xff]
  %v1985 = vld [vmem:[#allocation3 + $0x8] sm:$0xff]
  %v1986 = vld [vmem:[#allocation3 + $0x10] sm:$0xff]
  %v1987 = vld [vmem:[#allocation3 + $0x18] sm:$0xff]
  %v1988 = vld [vmem:[#allocation3 + $0x20] sm:$0xff]
  %v1989 = vld [vmem:[#allocation3 + $0x28] sm:$0xff]
  %v1990 = vld [vmem:[#allocation3 + $0x30] sm:$0xff]
  %v1991 = vld [vmem:[#allocation3 + $0x38] sm:$0xff]
  %v1992 = vld [vmem:[%s8] sm:$0xff]
  %v1993 = vld [vmem:[%s8 + $0x8] sm:$0xff]
  %v1994 = vld [vmem:[%s8 + $0x10] sm:$0xff]
  %v1995 = vld [vmem:[%s8 + $0x18] sm:$0xff]
  %v1996 = vld [vmem:[%s8 + $0x20] sm:$0xff]
  %v1997 = vld [vmem:[%s8 + $0x28] sm:$0x3f]
  %v1998 = vld [vmem:[%s9] sm:$0x1]
  %v2000 = vperm.slane %v1998, 0
  %v2003 = vsel %vm337, %v1984, 0
  %v2006 = vsel %vm337, %v1985, 0
  %v2009 = vsel %vm337, %v1986, 0
  %v2012 = vsel %vm337, %v1987, 0
  %v2015 = vsel %vm337, %v1988, 0
  %v2018 = vsel %vm337, %v1989, 0
  %v2021 = vsel %vm337, %v1990, 0
  %v2024 = vsel %vm337, %v1991, 0
  %v2027 = vsel %vm362, %v1997, 0
  %2029 = vmatpush.msra.mxu0 0.0
  %2030 = vmatpush.msra.mxu0 0.0
  %2031 = vmatpush.msra.mxu0 0.0
  %2032 = vmatpush.msra.mxu0 0.0
  %2033 = vmatpush.msra.mxu0 0.0
  %2034 = vmatpush.msra.mxu0 0.0
  %2035 = vmatpush.msra.mxu0 0.0
  %2036 = vmatpush.msra.mxu0 0.0
  %2037 = vmatpush.msra.mxu0 0.0
  %2038 = vmatpush.msra.mxu0 0.0
  %2039 = vmatpush.msra.mxu0 %v2027
  %2040 = vmatpush.msra.mxu0 %v1996
  %2041 = vmatpush.msra.mxu0 %v1995
  %2042 = vmatpush.msra.mxu0 %v1994
  %2043 = vmatpush.msra.mxu0 %v1993
  %2044 = vmatpush.msra.mxu0 %v1992
  %2045 = vmatmul.f32.gmra.mxu0 %v2003
  %v2046 = vpop.f32.mrf.mxu0
  %v2047 = vadd.f32 %v2000, %v2046
  %2048 = vmatmul.f32.gmra.mxu0 %v2006
  %v2049 = vpop.f32.mrf.mxu0
  %v2050 = vadd.f32 %v2000, %v2049
  %2051 = vmatmul.f32.gmra.mxu0 %v2009
  %v2052 = vpop.f32.mrf.mxu0
  %v2053 = vadd.f32 %v2000, %v2052
  %2054 = vmatmul.f32.gmra.mxu0 %v2012
  %v2055 = vpop.f32.mrf.mxu0
  %v2056 = vadd.f32 %v2000, %v2055
  %2057 = vmatmul.f32.gmra.mxu0 %v2015
  %v2058 = vpop.f32.mrf.mxu0
  %v2059 = vadd.f32 %v2000, %v2058
  %2060 = vmatmul.f32.gmra.mxu0 %v2018
  %v2061 = vpop.f32.mrf.mxu0
  %v2062 = vadd.f32 %v2000, %v2061
  %2063 = vmatmul.f32.gmra.mxu0 %v2021
  %v2064 = vpop.f32.mrf.mxu0
  %v2065 = vadd.f32 %v2000, %v2064
  %2066 = vmatmul.f32.gmra.mxu0 %v2024
  %v2067 = vpop.f32.mrf.mxu0
  %v2068 = vadd.f32 %v2000, %v2067
  %2069 = vdwg.mxu0
  %v2070 = vmax.f32 %v2047, 0.0
  %v2071 = vmax.f32 %v2050, 0.0
  %v2072 = vmax.f32 %v2053, 0.0
  %v2073 = vmax.f32 %v2056, 0.0
  %v2074 = vmax.f32 %v2059, 0.0
  %v2075 = vmax.f32 %v2062, 0.0
  %v2076 = vmax.f32 %v2065, 0.0
  %v2077 = vmax.f32 %v2068, 0.0
  %v2078 = vld [vmem:[%s10] sm:$0xff]
  %v2079 = vld [vmem:[%s10 + $0x8] sm:$0xff]
  %v2080 = vld [vmem:[%s10 + $0x10] sm:$0xff]
  %v2081 = vld [vmem:[%s10 + $0x18] sm:$0xff]
  %v2082 = vld [vmem:[%s10 + $0x20] sm:$0xff]
  %v2083 = vld [vmem:[%s10 + $0x28] sm:$0xff]
  %v2084 = vld [vmem:[%s10 + $0x30] sm:$0xff]
  %v2085 = vld [vmem:[%s10 + $0x38] sm:$0xff]
  %v2086 = vld [vmem:[%s11] sm:$0x1]
  %v2088 = vperm.slane %v2086, 0
  %v2091 = vsel %vm137, %v2070, 0
  %v2094 = vsel %vm137, %v2071, 0
  %v2097 = vsel %vm137, %v2072, 0
  %v2100 = vsel %vm137, %v2073, 0
  %v2103 = vsel %vm137, %v2074, 0
  %v2106 = vsel %vm137, %v2075, 0
  %v2109 = vsel %vm137, %v2076, 0
  %v2112 = vsel %vm137, %v2077, 0
  %2114 = vmatpush.msra.mxu0 0.0
  %2115 = vmatpush.msra.mxu0 0.0
  %2116 = vmatpush.msra.mxu0 0.0
  %2117 = vmatpush.msra.mxu0 0.0
  %2118 = vmatpush.msra.mxu0 0.0
  %2119 = vmatpush.msra.mxu0 0.0
  %2120 = vmatpush.msra.mxu0 0.0
  %2121 = vmatpush.msra.mxu0 0.0
  %2122 = vmatpush.msra.mxu0 %v2085
  %2123 = vmatpush.msra.mxu0 %v2084
  %2124 = vmatpush.msra.mxu0 %v2083
  %2125 = vmatpush.msra.mxu0 %v2082
  %2126 = vmatpush.msra.mxu0 %v2081
  %2127 = vmatpush.msra.mxu0 %v2080
  %2128 = vmatpush.msra.mxu0 %v2079
  %2129 = vmatpush.msra.mxu0 %v2078
  %2130 = vmatmul.f32.gmra.mxu0 %v2091
  %v2131 = vpop.f32.mrf.mxu0
  %v2132 = vadd.f32 %v2088, %v2131
  %2133 = vmatmul.f32.gmra.mxu0 %v2094
  %v2134 = vpop.f32.mrf.mxu0
  %v2135 = vadd.f32 %v2088, %v2134
  %2136 = vmatmul.f32.gmra.mxu0 %v2097
  %v2137 = vpop.f32.mrf.mxu0
  %v2138 = vadd.f32 %v2088, %v2137
  %2139 = vmatmul.f32.gmra.mxu0 %v2100
  %v2140 = vpop.f32.mrf.mxu0
  %v2141 = vadd.f32 %v2088, %v2140
  %2142 = vmatmul.f32.gmra.mxu0 %v2103
  %v2143 = vpop.f32.mrf.mxu0
  %v2144 = vadd.f32 %v2088, %v2143
  %2145 = vmatmul.f32.gmra.mxu0 %v2106
  %v2146 = vpop.f32.mrf.mxu0
  %v2147 = vadd.f32 %v2088, %v2146
  %2148 = vmatmul.f32.gmra.mxu0 %v2109
  %v2149 = vpop.f32.mrf.mxu0
  %v2150 = vadd.f32 %v2088, %v2149
  %2151 = vmatmul.f32.gmra.mxu0 %v2112
  %v2152 = vpop.f32.mrf.mxu0
  %v2153 = vadd.f32 %v2088, %v2152
  %2154 = vdwg.mxu0
  %v2155 = vsel %vm547, %v2132, -1e+30
  %v2156 = vsel %vm548, %v2135, -1e+30
  %v2157 = vsel %vm549, %v2138, -1e+30
  %v2158 = vsel %vm550, %v2141, -1e+30
  %v2159 = vsel %vm551, %v2144, -1e+30
  %v2160 = vsel %vm552, %v2147, -1e+30
  %v2161 = vsel %vm553, %v2150, -1e+30
  %v2162 = vsel %vm554, %v2153, -1e+30
  %v2163 = vsel %vm179, %v2155, -inf
  %v2164 = vsel %vm179, %v2156, -inf
  %v2165 = vsel %vm179, %v2157, -inf
  %v2166 = vsel %vm179, %v2158, -inf
  %v2167 = vsel %vm179, %v2159, -inf
  %v2168 = vmax.f32 %v2163, %v2167
  %v2169 = vsel %vm179, %v2160, -inf
  %v2170 = vmax.f32 %v2164, %v2169
  %v2171 = vsel %vm179, %v2161, -inf
  %v2172 = vmax.f32 %v2165, %v2171
  %v2173 = vsel %vm179, %v2162, -inf
  %v2174 = vmax.f32 %v2166, %v2173
  %v2175 = vmax.f32 %v2168, %v2170
  %v2176 = vmax.f32 %v2172, %v2174
  %v2177 = vmax.f32 %v2175, %v2176
  %vm2178 = vcmp.le.f32.partialorder %v2177, -1e+29
  %v2179 = vsel %vm2178, 0.0, %v2177
  %2180 = vst.msk [vmem:[#allocation4] sm:$0xff] %vm179, %v2179
  %v2181 = vsel %vm636, %v2132, -1e+30
  %v2182 = vsel %vm637, %v2135, -1e+30
  %v2183 = vsel %vm638, %v2138, -1e+30
  %v2184 = vsel %vm639, %v2141, -1e+30
  %v2185 = vsel %vm640, %v2144, -1e+30
  %v2186 = vsel %vm641, %v2147, -1e+30
  %v2187 = vsel %vm642, %v2150, -1e+30
  %v2188 = vsel %vm643, %v2153, -1e+30
  %v2189 = vsel %vm179, %v2181, -inf
  %v2190 = vsel %vm179, %v2182, -inf
  %v2191 = vsel %vm179, %v2183, -inf
  %v2192 = vsel %vm179, %v2184, -inf
  %v2193 = vsel %vm179, %v2185, -inf
  %v2194 = vmax.f32 %v2189, %v2193
  %v2195 = vsel %vm179, %v2186, -inf
  %v2196 = vmax.f32 %v2190, %v2195
  %v2197 = vsel %vm179, %v2187, -inf
  %v2198 = vmax.f32 %v2191, %v2197
  %v2199 = vsel %vm179, %v2188, -inf
  %v2200 = vmax.f32 %v2192, %v2199
  %v2201 = vmax.f32 %v2194, %v2196
  %v2202 = vmax.f32 %v2198, %v2200
  %v2203 = vmax.f32 %v2201, %v2202
  %vm2204 = vcmp.le.f32.partialorder %v2203, -1e+29
  %v2205 = vsel %vm2204, 0.0, %v2203
  %2206 = vst.msk [vmem:[#allocation4 + $0x8] sm:$0xff] %vm179, %v2205
  %v2207 = vsel %vm725, %v2132, -1e+30
  %v2208 = vsel %vm726, %v2135, -1e+30
  %v2209 = vsel %vm727, %v2138, -1e+30
  %v2210 = vsel %vm728, %v2141, -1e+30
  %v2211 = vsel %vm729, %v2144, -1e+30
  %v2212 = vsel %vm730, %v2147, -1e+30
  %v2213 = vsel %vm731, %v2150, -1e+30
  %v2214 = vsel %vm732, %v2153, -1e+30
  %v2215 = vsel %vm179, %v2207, -inf
  %v2216 = vsel %vm179, %v2208, -inf
  %v2217 = vsel %vm179, %v2209, -inf
  %v2218 = vsel %vm179, %v2210, -inf
  %v2219 = vsel %vm179, %v2211, -inf
  %v2220 = vmax.f32 %v2215, %v2219
  %v2221 = vsel %vm179, %v2212, -inf
  %v2222 = vmax.f32 %v2216, %v2221
  %v2223 = vsel %vm179, %v2213, -inf
  %v2224 = vmax.f32 %v2217, %v2223
  %v2225 = vsel %vm179, %v2214, -inf
  %v2226 = vmax.f32 %v2218, %v2225
  %v2227 = vmax.f32 %v2220, %v2222
  %v2228 = vmax.f32 %v2224, %v2226
  %v2229 = vmax.f32 %v2227, %v2228
  %vm2230 = vcmp.le.f32.partialorder %v2229, -1e+29
  %v2231 = vsel %vm2230, 0.0, %v2229
  %2232 = vst.msk [vmem:[#allocation4 + $0x10] sm:$0xff] %vm179, %v2231
  %v2233 = vsel %vm814, %v2132, -1e+30
  %v2234 = vsel %vm815, %v2135, -1e+30
  %v2235 = vsel %vm816, %v2138, -1e+30
  %v2236 = vsel %vm817, %v2141, -1e+30
  %v2237 = vsel %vm818, %v2144, -1e+30
  %v2238 = vsel %vm819, %v2147, -1e+30
  %v2239 = vsel %vm820, %v2150, -1e+30
  %v2240 = vsel %vm821, %v2153, -1e+30
  %v2241 = vsel %vm179, %v2233, -inf
  %v2242 = vsel %vm179, %v2234, -inf
  %v2243 = vsel %vm179, %v2235, -inf
  %v2244 = vsel %vm179, %v2236, -inf
  %v2245 = vsel %vm179, %v2237, -inf
  %v2246 = vmax.f32 %v2241, %v2245
  %v2247 = vsel %vm179, %v2238, -inf
  %v2248 = vmax.f32 %v2242, %v2247
  %v2249 = vsel %vm179, %v2239, -inf
  %v2250 = vmax.f32 %v2243, %v2249
  %v2251 = vsel %vm179, %v2240, -inf
  %v2252 = vmax.f32 %v2244, %v2251
  %v2253 = vmax.f32 %v2246, %v2248
  %v2254 = vmax.f32 %v2250, %v2252
  %v2255 = vmax.f32 %v2253, %v2254
  %vm2256 = vcmp.le.f32.partialorder %v2255, -1e+29
  %v2257 = vsel %vm2256, 0.0, %v2255
  %2258 = vst.msk [vmem:[#allocation4 + $0x18] sm:$0xff] %vm179, %v2257
  %v2259 = vld [vmem:[#allocation2] sm:$0xff]
  %v2260 = vld [vmem:[#allocation2 + $0x8] sm:$0xff]
  %v2261 = vld [vmem:[#allocation2 + $0x10] sm:$0xff]
  %v2262 = vld [vmem:[#allocation2 + $0x18] sm:$0xff]
  %2267 = vrot.lane.b32.xlu0 %v2259, 32
  %v2268 = vpop.permute.xlu0 %2267
  %2269 = vrot.lane.b32.xlu0 %v2260, 32
  %v2270 = vpop.permute.xlu0 %2269
  %2271 = vrot.lane.b32.xlu0 %v2261, 32
  %v2272 = vpop.permute.xlu0 %2271
  %2273 = vrot.lane.b32.xlu0 %v2262, 32
  %v2274 = vpop.permute.xlu0 %2273
  %2279 = vst.msk [vmem:[#allocation4] sm:$0xff] %vm868, %v2268
  %2280 = vst.msk [vmem:[#allocation4 + $0x8] sm:$0xff] %vm868, %v2270
  %2281 = vst.msk [vmem:[#allocation4 + $0x10] sm:$0xff] %vm868, %v2272
  %2282 = vst.msk [vmem:[#allocation4 + $0x18] sm:$0xff] %vm868, %v2274
  %v2283 = vld [vmem:[#allocation4] sm:$0xff]
  %v2284 = vld [vmem:[#allocation4 + $0x8] sm:$0xff]
  %v2285 = vld [vmem:[#allocation4 + $0x10] sm:$0xff]
  %v2286 = vld [vmem:[#allocation4 + $0x18] sm:$0xff]
  %v2287 = vld [vmem:[%s12] sm:$0xff]
  %v2288 = vld [vmem:[%s12 + $0x8] sm:$0xff]
  %v2289 = vld [vmem:[%s12 + $0x10] sm:$0xff]
  %v2290 = vld [vmem:[%s12 + $0x18] sm:$0xff]
  %v2291 = vld [vmem:[%s12 + $0x20] sm:$0xff]
  %v2292 = vld [vmem:[%s12 + $0x28] sm:$0xff]
  %v2293 = vld [vmem:[%s12 + $0x30] sm:$0xff]
  %v2294 = vld [vmem:[%s12 + $0x38] sm:$0xff]
  %v2295 = vld [vmem:[%s13] sm:$0x1]
  %v2297 = vperm.slane %v2295, 0
  %v2300 = vsel %vm137, %v2283, 0
  %v2303 = vsel %vm137, %v2284, 0
  %v2306 = vsel %vm137, %v2285, 0
  %v2309 = vsel %vm137, %v2286, 0
  %2311 = vmatpush.msra.mxu0 0.0
  %2312 = vmatpush.msra.mxu0 0.0
  %2313 = vmatpush.msra.mxu0 0.0
  %2314 = vmatpush.msra.mxu0 0.0
  %2315 = vmatpush.msra.mxu0 0.0
  %2316 = vmatpush.msra.mxu0 0.0
  %2317 = vmatpush.msra.mxu0 0.0
  %2318 = vmatpush.msra.mxu0 0.0
  %2319 = vmatpush.msra.mxu0 %v2294
  %2320 = vmatpush.msra.mxu0 %v2293
  %2321 = vmatpush.msra.mxu0 %v2292
  %2322 = vmatpush.msra.mxu0 %v2291
  %2323 = vmatpush.msra.mxu0 %v2290
  %2324 = vmatpush.msra.mxu0 %v2289
  %2325 = vmatpush.msra.mxu0 %v2288
  %2326 = vmatpush.msra.mxu0 %v2287
  %2327 = vmatmul.f32.gmra.mxu0 %v2300
  %v2328 = vpop.f32.mrf.mxu0
  %v2329 = vadd.f32 %v2297, %v2328
  %2330 = vmatmul.f32.gmra.mxu0 %v2303
  %v2331 = vpop.f32.mrf.mxu0
  %v2332 = vadd.f32 %v2297, %v2331
  %2333 = vmatmul.f32.gmra.mxu0 %v2306
  %v2334 = vpop.f32.mrf.mxu0
  %v2335 = vadd.f32 %v2297, %v2334
  %2336 = vmatmul.f32.gmra.mxu0 %v2309
  %v2337 = vpop.f32.mrf.mxu0
  %v2338 = vadd.f32 %v2297, %v2337
  %2339 = vdwg.mxu0
  %v2340 = vmax.f32 %v2329, 0.0
  %v2341 = vmax.f32 %v2332, 0.0
  %v2342 = vmax.f32 %v2335, 0.0
  %v2343 = vmax.f32 %v2338, 0.0
  %v2344 = vld [vmem:[%s14] sm:$0xff]
  %v2345 = vld [vmem:[%s14 + $0x8] sm:$0xff]
  %v2346 = vld [vmem:[%s14 + $0x10] sm:$0xff]
  %v2347 = vld [vmem:[%s14 + $0x18] sm:$0xff]
  %v2348 = vld [vmem:[%s14 + $0x20] sm:$0xff]
  %v2349 = vld [vmem:[%s14 + $0x28] sm:$0xff]
  %v2350 = vld [vmem:[%s14 + $0x30] sm:$0xff]
  %v2351 = vld [vmem:[%s14 + $0x38] sm:$0xff]
  %v2352 = vld [vmem:[%s15] sm:$0x1]
  %v2354 = vperm.slane %v2352, 0
  %v2357 = vsel %vm137, %v2340, 0
  %v2360 = vsel %vm137, %v2341, 0
  %v2363 = vsel %vm137, %v2342, 0
  %v2366 = vsel %vm137, %v2343, 0
  %2368 = vmatpush.msra.mxu0 0.0
  %2369 = vmatpush.msra.mxu0 0.0
  %2370 = vmatpush.msra.mxu0 0.0
  %2371 = vmatpush.msra.mxu0 0.0
  %2372 = vmatpush.msra.mxu0 0.0
  %2373 = vmatpush.msra.mxu0 0.0
  %2374 = vmatpush.msra.mxu0 0.0
  %2375 = vmatpush.msra.mxu0 0.0
  %2376 = vmatpush.msra.mxu0 %v2351
  %2377 = vmatpush.msra.mxu0 %v2350
  %2378 = vmatpush.msra.mxu0 %v2349
  %2379 = vmatpush.msra.mxu0 %v2348
  %2380 = vmatpush.msra.mxu0 %v2347
  %2381 = vmatpush.msra.mxu0 %v2346
  %2382 = vmatpush.msra.mxu0 %v2345
  %2383 = vmatpush.msra.mxu0 %v2344
  %2384 = vmatmul.f32.gmra.mxu0 %v2357
  %v2385 = vpop.f32.mrf.mxu0
  %v2386 = vadd.f32 %v2354, %v2385
  %2387 = vmatmul.f32.gmra.mxu0 %v2360
  %v2388 = vpop.f32.mrf.mxu0
  %v2389 = vadd.f32 %v2354, %v2388
  %2390 = vmatmul.f32.gmra.mxu0 %v2363
  %v2391 = vpop.f32.mrf.mxu0
  %v2392 = vadd.f32 %v2354, %v2391
  %2393 = vmatmul.f32.gmra.mxu0 %v2366
  %v2394 = vpop.f32.mrf.mxu0
  %v2395 = vadd.f32 %v2354, %v2394
  %2396 = vdwg.mxu0
  %2397 = vst.msk [vmem:[#allocation2] sm:$0xff] %vm179, %v2386
  %2398 = vst.msk [vmem:[#allocation2 + $0x8] sm:$0xff] %vm179, %v2389
  %2399 = vst.msk [vmem:[#allocation2 + $0x10] sm:$0xff] %vm179, %v2392
  %2400 = vst.msk [vmem:[#allocation2 + $0x18] sm:$0xff] %vm179, %v2395
  %v2401 = vld [vmem:[#allocation2] sm:$0xff]
  %v2402 = vld [vmem:[#allocation2 + $0x8] sm:$0xff]
  %v2403 = vld [vmem:[#allocation2 + $0x10] sm:$0xff]
  %v2404 = vld [vmem:[#allocation2 + $0x18] sm:$0xff]
  %v2405 = vld [vmem:[%s16] sm:$0xff]
  %v2406 = vld [vmem:[%s16 + $0x8] sm:$0xff]
  %v2407 = vld [vmem:[%s16 + $0x10] sm:$0xff]
  %v2408 = vld [vmem:[%s16 + $0x18] sm:$0xff]
  %v2409 = vld [vmem:[%s17] sm:$0x1]
  %v2411 = vperm.slane %v2409, 0
  %v2414 = vsel %vm179, %v2401, 0
  %v2417 = vsel %vm179, %v2402, 0
  %v2420 = vsel %vm179, %v2403, 0
  %v2423 = vsel %vm179, %v2404, 0
  %2425 = vmatpush.msra.mxu0 0.0
  %2426 = vmatpush.msra.mxu0 0.0
  %2427 = vmatpush.msra.mxu0 0.0
  %2428 = vmatpush.msra.mxu0 0.0
  %2429 = vmatpush.msra.mxu0 0.0
  %2430 = vmatpush.msra.mxu0 0.0
  %2431 = vmatpush.msra.mxu0 0.0
  %2432 = vmatpush.msra.mxu0 0.0
  %2433 = vmatpush.msra.mxu0 0.0
  %2434 = vmatpush.msra.mxu0 0.0
  %2435 = vmatpush.msra.mxu0 0.0
  %2436 = vmatpush.msra.mxu0 0.0
  %2437 = vmatpush.msra.mxu0 %v2408
  %2438 = vmatpush.msra.mxu0 %v2407
  %2439 = vmatpush.msra.mxu0 %v2406
  %2440 = vmatpush.msra.mxu0 %v2405
  %2441 = vmatmul.f32.gmra.mxu0 %v2414
  %v2442 = vpop.f32.mrf.mxu0
  %v2443 = vadd.f32 %v2411, %v2442
  %2444 = vmatmul.f32.gmra.mxu0 %v2417
  %v2445 = vpop.f32.mrf.mxu0
  %v2446 = vadd.f32 %v2411, %v2445
  %2447 = vmatmul.f32.gmra.mxu0 %v2420
  %v2448 = vpop.f32.mrf.mxu0
  %v2449 = vadd.f32 %v2411, %v2448
  %2450 = vmatmul.f32.gmra.mxu0 %v2423
  %v2451 = vpop.f32.mrf.mxu0
  %v2452 = vadd.f32 %v2411, %v2451
  %2453 = vdwg.mxu0
  %v2454 = vmax.f32 %v2443, 0.0
  %v2455 = vmax.f32 %v2446, 0.0
  %v2456 = vmax.f32 %v2449, 0.0
  %v2457 = vmax.f32 %v2452, 0.0
  %v2458 = vld [vmem:[%s18] sm:$0xff]
  %v2459 = vld [vmem:[%s18 + $0x8] sm:$0xff]
  %v2460 = vld [vmem:[%s18 + $0x10] sm:$0xff]
  %v2461 = vld [vmem:[%s18 + $0x18] sm:$0xff]
  %v2462 = vld [vmem:[%s18 + $0x20] sm:$0xff]
  %v2463 = vld [vmem:[%s18 + $0x28] sm:$0xff]
  %v2464 = vld [vmem:[%s18 + $0x30] sm:$0xff]
  %v2465 = vld [vmem:[%s18 + $0x38] sm:$0xff]
  %v2466 = vld [vmem:[%s19] sm:$0x1]
  %v2468 = vperm.slane %v2466, 0
  %v2471 = vsel %vm137, %v2454, 0
  %v2474 = vsel %vm137, %v2455, 0
  %v2477 = vsel %vm137, %v2456, 0
  %v2480 = vsel %vm137, %v2457, 0
  %2482 = vmatpush.msra.mxu0 0.0
  %2483 = vmatpush.msra.mxu0 0.0
  %2484 = vmatpush.msra.mxu0 0.0
  %2485 = vmatpush.msra.mxu0 0.0
  %2486 = vmatpush.msra.mxu0 0.0
  %2487 = vmatpush.msra.mxu0 0.0
  %2488 = vmatpush.msra.mxu0 0.0
  %2489 = vmatpush.msra.mxu0 0.0
  %2490 = vmatpush.msra.mxu0 %v2465
  %2491 = vmatpush.msra.mxu0 %v2464
  %2492 = vmatpush.msra.mxu0 %v2463
  %2493 = vmatpush.msra.mxu0 %v2462
  %2494 = vmatpush.msra.mxu0 %v2461
  %2495 = vmatpush.msra.mxu0 %v2460
  %2496 = vmatpush.msra.mxu0 %v2459
  %2497 = vmatpush.msra.mxu0 %v2458
  %2498 = vmatmul.f32.gmra.mxu0 %v2471
  %v2499 = vpop.f32.mrf.mxu0
  %v2500 = vadd.f32 %v2468, %v2499
  %2501 = vmatmul.f32.gmra.mxu0 %v2474
  %v2502 = vpop.f32.mrf.mxu0
  %v2503 = vadd.f32 %v2468, %v2502
  %2504 = vmatmul.f32.gmra.mxu0 %v2477
  %v2505 = vpop.f32.mrf.mxu0
  %v2506 = vadd.f32 %v2468, %v2505
  %2507 = vmatmul.f32.gmra.mxu0 %v2480
  %v2508 = vpop.f32.mrf.mxu0
  %v2509 = vadd.f32 %v2468, %v2508
  %2510 = vdwg.mxu0
  %2511 = vst [vmem:[%s20] sm:$0xff] %v2500
  %2512 = vst [vmem:[%s20 + $0x8] sm:$0xff] %v2503
  %2513 = vst [vmem:[%s20 + $0x10] sm:$0xff] %v2506
  %2514 = vst [vmem:[%s20 + $0x18] sm:$0xff] %v2509
  // Predicated region
  $region82: #{gnn_forward.1} parent=0 // pred_check
    _
  $region83: #{gnn_forward.1} parent=0 // pred_check_branch
    %2516 = sbr.rel (0) target = $region85
  $region84: #{gnn_forward.1} parent=0 // pred_region
    _
  $region85: #{gnn_forward.1} parent=0 // pred_fallthru
    _
  // Predicated region
  $region86: #{gnn_forward.1} parent=0 // pred_check
    _
  $region87: #{gnn_forward.1} parent=0 // pred_check_branch
    %2518 = sbr.rel (0) target = $region89
  $region88: #{gnn_forward.1} parent=0 // pred_region
    _
  $region89: #{gnn_forward.1} parent=0 // pred_fallthru
    _

</llo_original>
